<compile_context>
chip_gen: v7x
topology: tpu7x:2x2x1
jax: 0.10.0
libtpu: 0.0.40
codegen_flags: <defaults>
</compile_context>

<pallas_src>
import math

import jax
import jax.numpy as jnp
from jax import lax
from jax.experimental import pallas as pl
from jax.experimental.pallas import tpu as pltpu

# ----------------------------- configuration -------------------------------
BS = 2            # batch
C = 4             # input channels
IMG = 16          # spatial H = W
PATCH = 4         # patch size -> L = (16/4)^2 = 16 tokens
L = (IMG // PATCH) ** 2          # 16 patch tokens
L1 = L + 1                       # +1 cls token
PD = C * PATCH * PATCH           # flattened patch dim = 64
D = 32                           # embedding dim (emb_dim)
NUM_HEADS = 4
HEAD_DIM = D // NUM_HEADS        # 8
K = 64                           # num_ingredients (vocabulary rows)

F32 = jnp.float32
BF16 = jnp.bfloat16


# ============================ fused Pallas kernel ===========================
def fused_kernel(patches_ref, wpatch_ref, posc_ref, wattn_ref, wout_ref,
                 vocab_ref, v2_ref,
                 cls_ref, feat_ref, feat_origin_ref, ids_ref, attn_ref,
                 attn_cls_ref):
    """Backbone (patch embed + MHSA) + VQ + head-mean, fused; outputs final shapes.

    Internal token order: tokens 0..L-1 are the patches, token L is the cls
    token (so all output slices are aligned).

    Blocks:
      patches_ref: (BS, L, PD) f32
      wpatch_ref:  (PD, D)     bf16
      posc_ref:    (L1, D)     f32   rows 0..L-1 = pos[1:], row L = pos[0]+cls
      wattn_ref:   (H, 3, D, HEAD_DIM) bf16   (Q already scaled by 1/sqrt(hd))
      wout_ref:    (H, HEAD_DIM, D)    bf16
      vocab_ref:   (K, D) f32,  v2_ref: (1, K) f32  (= ||vocab||^2 rows)
    Outputs:
      cls (BS,1,D) feat (BS,L,D) feat_origin (BS,L,D) ids (BS,L,1) i32
      attn (BS,L,L) attn_cls (BS,1,L)
    """
    inv_heads = 1.0 / NUM_HEADS

    # ---- invariants hoisted out of the batch loop (loaded once per call) ----
    wpatch = wpatch_ref[...]                                        # bf16 [PD, D]
    pos_rest = posc_ref[0:L, :]                                     # f32  [L, D]
    cls_row = posc_ref[L:L1, :]                                     # f32  [1, D]
    wq_h = [wattn_ref[h, 0] for h in range(NUM_HEADS)]              # bf16 [D, HD]
    wk_h = [wattn_ref[h, 1] for h in range(NUM_HEADS)]
    wv_h = [wattn_ref[h, 2] for h in range(NUM_HEADS)]
    wo_h = [wout_ref[h] for h in range(NUM_HEADS)]                  # bf16 [HD, D]
    vb = vocab_ref[...]                                             # f32  [K, D]
    vb_bf = vb.astype(BF16)
    v2 = v2_ref[...]                                                # f32  [1, K]
    lane_idx = lax.broadcasted_iota(jnp.int32, (L1, K), 1)          # [L1, K]

    for b in range(BS):                               # static unroll (BS == 2)
        # ---- backbone: patch embed + pos/cls + single MHSA block ----
        p = patches_ref[b].astype(BF16)                             # [L, PD]
        emb = jnp.dot(p, wpatch, preferred_element_type=F32) + pos_rest
        seq = jnp.concatenate([emb, cls_row], axis=0)               # [L1, D] f32
        seq_bf = seq.astype(BF16)

        attn_acc = jnp.zeros((L1, L1), F32)
        out_acc = jnp.zeros((L1, D), F32)
        for h in range(NUM_HEADS):                    # static unroll over heads
            qh = jnp.dot(seq_bf, wq_h[h], preferred_element_type=F32)  # [L1,HD]
            kh = jnp.dot(seq_bf, wk_h[h], preferred_element_type=F32)
            vh = jnp.dot(seq_bf, wv_h[h], preferred_element_type=F32)
            s = lax.dot_general(
                qh.astype(BF16), kh.astype(BF16),
                dimension_numbers=(((1,), (1,)), ((), ())),
                preferred_element_type=F32)                          # [L1, L1]
            s = s - jnp.max(s, axis=-1, keepdims=True)
            e = jnp.exp(s)
            probs = e / jnp.sum(e, axis=-1, keepdims=True)           # exact
            attn_acc = attn_acc + probs
            ctx = jnp.dot(probs.astype(BF16), vh.astype(BF16),
                          preferred_element_type=F32)                # [L1, HD]
            out_acc = out_acc + jnp.dot(ctx.astype(BF16), wo_h[h],
                                        preferred_element_type=F32)  # [L1, D]

        mid = seq + out_acc                                          # [L1, D]
        attn_mean = attn_acc * inv_heads                             # [L1, L1]

        # ---- VQ discretization: nearest codebook entry per token ----
        cross = lax.dot_general(
            mid.astype(BF16), vb_bf,
            dimension_numbers=(((1,), (1,)), ((), ())),
            preferred_element_type=F32)                              # [L1, K]
        d = v2 - 2.0 * cross       # ||t||^2 dropped (argmin-invariant)
        dmin = jnp.min(d, axis=-1, keepdims=True)                    # [L1, 1]
        # NaN-safe: fill index K-1 stays inside the valid [0, K) range.
        ids = jnp.min(jnp.where(d <= dmin, lane_idx, K - 1),
                      axis=-1, keepdims=True).astype(jnp.int32)      # [L1, 1]
        onehot = (lane_idx == ids).astype(F32)                       # [L1, K]
        featq = jnp.dot(onehot, vb, preferred_element_type=F32)      # exact rows

        # ---- stores: outputs already in the wrapper's final shapes ----
        feat_origin_ref[b] = mid[0:L, :]                             # [L, D]
        feat_ref[b] = featq[0:L, :]                                  # [L, D]
        cls_ref[b] = featq[L:L1, :]                                  # [1, D]
        ids_ref[b] = ids[0:L, :]                                     # [L, 1]
        attn_ref[b] = attn_mean[0:L, 0:L]                            # [L, L]
        attn_cls_ref[b] = attn_mean[L:L1, 0:L]                       # [1, L]


# ========================== pallas_call wrapper =============================
def fused_call(patches, params):
    bs = patches.shape[0]
    grid_spec = pltpu.PrefetchScalarGridSpec(
        num_scalar_prefetch=0,
        grid=(1,),                                   # single step, batch folded
        in_specs=[
            pl.BlockSpec((bs, L, PD), lambda i: (0, 0, 0)),
            pl.BlockSpec((PD, D), lambda i: (0, 0)),
            pl.BlockSpec((L1, D), lambda i: (0, 0)),
            pl.BlockSpec((NUM_HEADS, 3, D, HEAD_DIM), lambda i: (0, 0, 0, 0)),
            pl.BlockSpec((NUM_HEADS, HEAD_DIM, D), lambda i: (0, 0, 0)),
            pl.BlockSpec((K, D), lambda i: (0, 0)),
            pl.BlockSpec((1, K), lambda i: (0, 0)),
        ],
        out_specs=[
            pl.BlockSpec((bs, 1, D), lambda i: (0, 0, 0)),
            pl.BlockSpec((bs, L, D), lambda i: (0, 0, 0)),
            pl.BlockSpec((bs, L, D), lambda i: (0, 0, 0)),
            pl.BlockSpec((bs, L, 1), lambda i: (0, 0, 0)),
            pl.BlockSpec((bs, L, L), lambda i: (0, 0, 0)),
            pl.BlockSpec((bs, 1, L), lambda i: (0, 0, 0)),
        ],
    )
    return pl.pallas_call(
        fused_kernel,
        out_shape=(jax.ShapeDtypeStruct((bs, 1, D), F32),          # cls_token
                   jax.ShapeDtypeStruct((bs, L, D), F32),          # feat (quantized)
                   jax.ShapeDtypeStruct((bs, L, D), F32),          # feat_origin
                   jax.ShapeDtypeStruct((bs, L, 1), jnp.int32),    # ingredient ids
                   jax.ShapeDtypeStruct((bs, L, L), F32),          # attn (head mean)
                   jax.ShapeDtypeStruct((bs, 1, L), F32)),         # attn_cls
        grid_spec=grid_spec,
        compiler_params=pltpu.CompilerParams(dimension_semantics=("arbitrary",)),
    )(patches, params["w_patch"], params["posc"], params["w_attn"],
      params["w_out"], params["vocab"], params["v2"])


# ======================== parameters / host-side packing ====================
def init_params(seed=0):
    keys = jax.random.split(jax.random.PRNGKey(seed), 8)
    w_patch = jax.random.normal(keys[0], (PD, D), F32) * 0.1
    cls_tok = jax.random.normal(keys[1], (1, D), F32) * 0.1
    pos_emb = jax.random.normal(keys[2], (L1, D), F32) * 0.1
    wq = jax.random.normal(keys[3], (D, D), F32) * 0.1
    wk = jax.random.normal(keys[4], (D, D), F32) * 0.1
    wv = jax.random.normal(keys[5], (D, D), F32) * 0.1
    wo = jax.random.normal(keys[6], (D, D), F32) * 0.1
    vocab = jax.random.normal(keys[7], (K, D), F32)   # discretization_tensor [K, D]

    scale = 1.0 / math.sqrt(HEAD_DIM)
    # Per-head Q/K/V weights (Q pre-scaled by 1/sqrt(head_dim)); head h uses
    # columns h*HD:(h+1)*HD of wq/wk/wv and rows h*HD:(h+1)*HD of wo.
    wq_h = (wq * scale).reshape(D, NUM_HEADS, HEAD_DIM).transpose(1, 0, 2)
    wk_h = wk.reshape(D, NUM_HEADS, HEAD_DIM).transpose(1, 0, 2)
    wv_h = wv.reshape(D, NUM_HEADS, HEAD_DIM).transpose(1, 0, 2)
    w_attn = jnp.stack([wq_h, wk_h, wv_h], axis=1).astype(BF16)   # (H, 3, D, HD)
    w_out = wo.reshape(NUM_HEADS, HEAD_DIM, D).astype(BF16)       # (H, HD, D)

    # Internal token order (patches first, cls last): rows 0..L-1 = pos[1:],
    # row L = pos[0] + cls token.
    posc = jnp.concatenate([pos_emb[1:], pos_emb[0:1] + cls_tok], axis=0)

    v2 = jnp.sum(vocab * vocab, axis=-1).reshape(1, K)            # ||vocab||^2

    return dict(w_patch=w_patch.astype(BF16), posc=posc, w_attn=w_attn,
                w_out=w_out, vocab=vocab, v2=v2)


# ======================== module forward (glue) =============================
def ingredient_model_forward(x, params):
    """Mirrors IngredientModelWrapper.forward. x: NCHW [bs, C, H, W]."""
    bs = x.shape[0]
    # ---- patchify (pure layout glue, NCHW -> [bs, L, C*p*p]); no cls padding ----
    xp = x.reshape(bs, C, IMG // PATCH, PATCH, IMG // PATCH, PATCH)
    xp = xp.transpose(0, 2, 4, 1, 3, 5).reshape(bs, L, PD)

    cls_tok, feat, feat_origin, ids, attn, attn_cls = fused_call(xp, params)

    # Outputs leave the kernel already in their final shapes; only two free
    # contiguous reshapes remain (drop the trailing size-1 axes).
    ret = {}
    ret["cls_token"] = cls_tok                          # [bs, 1, D]
    ret["feat"] = feat                                  # [bs, L, D]
    ret["feat_origin"] = feat_origin                    # [bs, L, D]
    ret["ingredients"] = ids.reshape(bs, L)             # [bs, L] int32
    ret["attn"] = attn                                  # [bs, L, L]
    ret["attn_cls"] = attn_cls.reshape(bs, L)           # [bs, L]
    return ret


# ================================ main ======================================
if __name__ == "__main__":
    params = init_params(seed=0)
    x = jax.random.normal(jax.random.PRNGKey(0), (BS, C, IMG, IMG), F32)

    fwd = jax.jit(lambda xx: ingredient_model_forward(xx, params))
    out = fwd(x)
    jax.block_until_ready(out)

    # light sanity checks
    assert out["cls_token"].shape == (BS, 1, D)
    assert out["feat"].shape == (BS, L, D)
    assert out["feat_origin"].shape == (BS, L, D)
    assert out["ingredients"].shape == (BS, L) and out["ingredients"].dtype == jnp.int32
    assert out["attn"].shape == (BS, L, L)
    assert out["attn_cls"].shape == (BS, L)
    assert bool(jnp.all(out["ingredients"] >= 0)) and bool(jnp.all(out["ingredients"] < K))
    assert bool(jnp.all(jnp.isfinite(out["attn"])))

    print("KERNEL_OK")
</pallas_src>

<mosaic_0001>
module attributes {stable_mosaic.version = 11 : i64} {
  func.func @fused_kernel(%arg0: i32, %arg1: memref<2x16x64xf32, #tpu.memory_space<vmem>>, %arg2: memref<64x32xbf16, #tpu.memory_space<vmem>>, %arg3: memref<17x32xf32, #tpu.memory_space<vmem>>, %arg4: memref<4x3x32x8xbf16, #tpu.memory_space<vmem>>, %arg5: memref<4x8x32xbf16, #tpu.memory_space<vmem>>, %arg6: memref<64x32xf32, #tpu.memory_space<vmem>>, %arg7: memref<1x64xf32, #tpu.memory_space<vmem>>, %arg8: memref<2x1x32xf32, #tpu.memory_space<vmem>>, %arg9: memref<2x16x32xf32, #tpu.memory_space<vmem>>, %arg10: memref<2x16x32xf32, #tpu.memory_space<vmem>>, %arg11: memref<2x16x1xi32, #tpu.memory_space<vmem>>, %arg12: memref<2x16x16xf32, #tpu.memory_space<vmem>>, %arg13: memref<2x1x16xf32, #tpu.memory_space<vmem>>) attributes {dimension_semantics = [#tpu.dimension_semantics<arbitrary>], iteration_bounds = array<i64: 1>, scalar_prefetch = 0 : i64, scratch_operands = 0 : i64, tpu.core_type = #tpu.core_type<tc>, window_params = [{pipeline_mode = #tpu.pipeline_mode<synchronous>, transform_indices = @transform_0, window_bounds = array<i64: 2, 16, 64>}, {pipeline_mode = #tpu.pipeline_mode<synchronous>, transform_indices = @transform_1, window_bounds = array<i64: 64, 32>}, {pipeline_mode = #tpu.pipeline_mode<synchronous>, transform_indices = @transform_2, window_bounds = array<i64: 17, 32>}, {pipeline_mode = #tpu.pipeline_mode<synchronous>, transform_indices = @transform_3, window_bounds = array<i64: 4, 3, 32, 8>}, {pipeline_mode = #tpu.pipeline_mode<synchronous>, transform_indices = @transform_4, window_bounds = array<i64: 4, 8, 32>}, {pipeline_mode = #tpu.pipeline_mode<synchronous>, transform_indices = @transform_5, window_bounds = array<i64: 64, 32>}, {pipeline_mode = #tpu.pipeline_mode<synchronous>, transform_indices = @transform_6, window_bounds = array<i64: 1, 64>}, {pipeline_mode = #tpu.pipeline_mode<synchronous>, transform_indices = @transform_7, window_bounds = array<i64: 2, 1, 32>}, {pipeline_mode = #tpu.pipeline_mode<synchronous>, transform_indices = @transform_8, window_bounds = array<i64: 2, 16, 32>}, {pipeline_mode = #tpu.pipeline_mode<synchronous>, transform_indices = @transform_9, window_bounds = array<i64: 2, 16, 32>}, {pipeline_mode = #tpu.pipeline_mode<synchronous>, transform_indices = @transform_10, window_bounds = array<i64: 2, 16, 1>}, {pipeline_mode = #tpu.pipeline_mode<synchronous>, transform_indices = @transform_11, window_bounds = array<i64: 2, 16, 16>}, {pipeline_mode = #tpu.pipeline_mode<synchronous>, transform_indices = @transform_12, window_bounds = array<i64: 2, 1, 16>}]} {
    %c0 = arith.constant 0 : index
    %c0_0 = arith.constant 0 : index
    %0 = vector.load %arg2[%c0, %c0_0] : memref<64x32xbf16, #tpu.memory_space<vmem>>, vector<64x32xbf16>
    %c0_1 = arith.constant 0 : index
    %c0_2 = arith.constant 0 : index
    %1 = vector.load %arg3[%c0_1, %c0_2] : memref<17x32xf32, #tpu.memory_space<vmem>>, vector<16x32xf32>
    %c16 = arith.constant 16 : index
    %c0_3 = arith.constant 0 : index
    %2 = vector.load %arg3[%c16, %c0_3] : memref<17x32xf32, #tpu.memory_space<vmem>>, vector<1x32xf32>
    %c0_4 = arith.constant 0 : index
    %c0_5 = arith.constant 0 : index
    %c0_6 = arith.constant 0 : index
    %c0_7 = arith.constant 0 : index
    %3 = vector.load %arg4[%c0_4, %c0_5, %c0_6, %c0_7] : memref<4x3x32x8xbf16, #tpu.memory_space<vmem>>, vector<1x1x32x8xbf16>
    %4 = vector.shape_cast %3 : vector<1x1x32x8xbf16> to vector<32x8xbf16>
    %c1 = arith.constant 1 : index
    %c0_8 = arith.constant 0 : index
    %c0_9 = arith.constant 0 : index
    %c0_10 = arith.constant 0 : index
    %5 = vector.load %arg4[%c1, %c0_8, %c0_9, %c0_10] : memref<4x3x32x8xbf16, #tpu.memory_space<vmem>>, vector<1x1x32x8xbf16>
    %6 = vector.shape_cast %5 : vector<1x1x32x8xbf16> to vector<32x8xbf16>
    %c2 = arith.constant 2 : index
    %c0_11 = arith.constant 0 : index
    %c0_12 = arith.constant 0 : index
    %c0_13 = arith.constant 0 : index
    %7 = vector.load %arg4[%c2, %c0_11, %c0_12, %c0_13] : memref<4x3x32x8xbf16, #tpu.memory_space<vmem>>, vector<1x1x32x8xbf16>
    %8 = vector.shape_cast %7 : vector<1x1x32x8xbf16> to vector<32x8xbf16>
    %c3 = arith.constant 3 : index
    %c0_14 = arith.constant 0 : index
    %c0_15 = arith.constant 0 : index
    %c0_16 = arith.constant 0 : index
    %9 = vector.load %arg4[%c3, %c0_14, %c0_15, %c0_16] : memref<4x3x32x8xbf16, #tpu.memory_space<vmem>>, vector<1x1x32x8xbf16>
    %10 = vector.shape_cast %9 : vector<1x1x32x8xbf16> to vector<32x8xbf16>
    %c0_17 = arith.constant 0 : index
    %c1_18 = arith.constant 1 : index
    %c0_19 = arith.constant 0 : index
    %c0_20 = arith.constant 0 : index
    %11 = vector.load %arg4[%c0_17, %c1_18, %c0_19, %c0_20] : memref<4x3x32x8xbf16, #tpu.memory_space<vmem>>, vector<1x1x32x8xbf16>
    %12 = vector.shape_cast %11 : vector<1x1x32x8xbf16> to vector<32x8xbf16>
    %c1_21 = arith.constant 1 : index
    %c1_22 = arith.constant 1 : index
    %c0_23 = arith.constant 0 : index
    %c0_24 = arith.constant 0 : index
    %13 = vector.load %arg4[%c1_21, %c1_22, %c0_23, %c0_24] : memref<4x3x32x8xbf16, #tpu.memory_space<vmem>>, vector<1x1x32x8xbf16>
    %14 = vector.shape_cast %13 : vector<1x1x32x8xbf16> to vector<32x8xbf16>
    %c2_25 = arith.constant 2 : index
    %c1_26 = arith.constant 1 : index
    %c0_27 = arith.constant 0 : index
    %c0_28 = arith.constant 0 : index
    %15 = vector.load %arg4[%c2_25, %c1_26, %c0_27, %c0_28] : memref<4x3x32x8xbf16, #tpu.memory_space<vmem>>, vector<1x1x32x8xbf16>
    %16 = vector.shape_cast %15 : vector<1x1x32x8xbf16> to vector<32x8xbf16>
    %c3_29 = arith.constant 3 : index
    %c1_30 = arith.constant 1 : index
    %c0_31 = arith.constant 0 : index
    %c0_32 = arith.constant 0 : index
    %17 = vector.load %arg4[%c3_29, %c1_30, %c0_31, %c0_32] : memref<4x3x32x8xbf16, #tpu.memory_space<vmem>>, vector<1x1x32x8xbf16>
    %18 = vector.shape_cast %17 : vector<1x1x32x8xbf16> to vector<32x8xbf16>
    %c0_33 = arith.constant 0 : index
    %c2_34 = arith.constant 2 : index
    %c0_35 = arith.constant 0 : index
    %c0_36 = arith.constant 0 : index
    %19 = vector.load %arg4[%c0_33, %c2_34, %c0_35, %c0_36] : memref<4x3x32x8xbf16, #tpu.memory_space<vmem>>, vector<1x1x32x8xbf16>
    %20 = vector.shape_cast %19 : vector<1x1x32x8xbf16> to vector<32x8xbf16>
    %c1_37 = arith.constant 1 : index
    %c2_38 = arith.constant 2 : index
    %c0_39 = arith.constant 0 : index
    %c0_40 = arith.constant 0 : index
    %21 = vector.load %arg4[%c1_37, %c2_38, %c0_39, %c0_40] : memref<4x3x32x8xbf16, #tpu.memory_space<vmem>>, vector<1x1x32x8xbf16>
    %22 = vector.shape_cast %21 : vector<1x1x32x8xbf16> to vector<32x8xbf16>
    %c2_41 = arith.constant 2 : index
    %c2_42 = arith.constant 2 : index
    %c0_43 = arith.constant 0 : index
    %c0_44 = arith.constant 0 : index
    %23 = vector.load %arg4[%c2_41, %c2_42, %c0_43, %c0_44] : memref<4x3x32x8xbf16, #tpu.memory_space<vmem>>, vector<1x1x32x8xbf16>
    %24 = vector.shape_cast %23 : vector<1x1x32x8xbf16> to vector<32x8xbf16>
    %c3_45 = arith.constant 3 : index
    %c2_46 = arith.constant 2 : index
    %c0_47 = arith.constant 0 : index
    %c0_48 = arith.constant 0 : index
    %25 = vector.load %arg4[%c3_45, %c2_46, %c0_47, %c0_48] : memref<4x3x32x8xbf16, #tpu.memory_space<vmem>>, vector<1x1x32x8xbf16>
    %26 = vector.shape_cast %25 : vector<1x1x32x8xbf16> to vector<32x8xbf16>
    %c0_49 = arith.constant 0 : index
    %c0_50 = arith.constant 0 : index
    %c0_51 = arith.constant 0 : index
    %27 = vector.load %arg5[%c0_49, %c0_50, %c0_51] : memref<4x8x32xbf16, #tpu.memory_space<vmem>>, vector<1x8x32xbf16>
    %28 = vector.shape_cast %27 : vector<1x8x32xbf16> to vector<8x32xbf16>
    %c1_52 = arith.constant 1 : index
    %c0_53 = arith.constant 0 : index
    %c0_54 = arith.constant 0 : index
    %29 = vector.load %arg5[%c1_52, %c0_53, %c0_54] : memref<4x8x32xbf16, #tpu.memory_space<vmem>>, vector<1x8x32xbf16>
    %30 = vector.shape_cast %29 : vector<1x8x32xbf16> to vector<8x32xbf16>
    %c2_55 = arith.constant 2 : index
    %c0_56 = arith.constant 0 : index
    %c0_57 = arith.constant 0 : index
    %31 = vector.load %arg5[%c2_55, %c0_56, %c0_57] : memref<4x8x32xbf16, #tpu.memory_space<vmem>>, vector<1x8x32xbf16>
    %32 = vector.shape_cast %31 : vector<1x8x32xbf16> to vector<8x32xbf16>
    %c3_58 = arith.constant 3 : index
    %c0_59 = arith.constant 0 : index
    %c0_60 = arith.constant 0 : index
    %33 = vector.load %arg5[%c3_58, %c0_59, %c0_60] : memref<4x8x32xbf16, #tpu.memory_space<vmem>>, vector<1x8x32xbf16>
    %34 = vector.shape_cast %33 : vector<1x8x32xbf16> to vector<8x32xbf16>
    %c0_61 = arith.constant 0 : index
    %c0_62 = arith.constant 0 : index
    %35 = vector.load %arg6[%c0_61, %c0_62] : memref<64x32xf32, #tpu.memory_space<vmem>>, vector<64x32xf32>
    %36 = arith.truncf %35 : vector<64x32xf32> to vector<64x32xbf16>
    %c0_63 = arith.constant 0 : index
    %c0_64 = arith.constant 0 : index
    %37 = vector.load %arg7[%c0_63, %c0_64] : memref<1x64xf32, #tpu.memory_space<vmem>>, vector<1x64xf32>
    %38 = tpu.iota {dimensions = array<i32: 1>} : vector<17x64xi32>
    %c0_65 = arith.constant 0 : index
    %c0_66 = arith.constant 0 : index
    %c0_67 = arith.constant 0 : index
    %39 = vector.load %arg1[%c0_65, %c0_66, %c0_67] : memref<2x16x64xf32, #tpu.memory_space<vmem>>, vector<1x16x64xf32>
    %40 = vector.shape_cast %39 : vector<1x16x64xf32> to vector<16x64xf32>
    %41 = arith.truncf %40 : vector<16x64xf32> to vector<16x64xbf16>
    %cst = arith.constant dense<0.000000e+00> : vector<16x32xf32>
    %42 = tpu.matmul %41, %0, %cst {dimension_numbers = #tpu.dot_dimension_numbers<[1], [0], [0], [1], [0, 0, 1, 1], [], []>} : vector<16x64xbf16>, vector<64x32xbf16>, vector<16x32xf32> -> vector<16x32xf32>
    %43 = arith.addf %42, %1 : vector<16x32xf32>
    %44 = tpu.concatenate %43, %2 in 0 : vector<16x32xf32>, vector<1x32xf32> -> vector<17x32xf32>
    %45 = arith.truncf %44 : vector<17x32xf32> to vector<17x32xbf16>
    %cst_68 = arith.constant 0.000000e+00 : f32
    %46 = vector.broadcast %cst_68 : f32 to vector<17x17xf32>
    %cst_69 = arith.constant 0.000000e+00 : f32
    %47 = vector.broadcast %cst_69 : f32 to vector<17x32xf32>
    %cst_70 = arith.constant dense<0.000000e+00> : vector<17x8xf32>
    %48 = tpu.matmul %45, %4, %cst_70 {dimension_numbers = #tpu.dot_dimension_numbers<[1], [0], [0], [1], [0, 0, 1, 1], [], []>} : vector<17x32xbf16>, vector<32x8xbf16>, vector<17x8xf32> -> vector<17x8xf32>
    %cst_71 = arith.constant dense<0.000000e+00> : vector<17x8xf32>
    %49 = tpu.matmul %45, %12, %cst_71 {dimension_numbers = #tpu.dot_dimension_numbers<[1], [0], [0], [1], [0, 0, 1, 1], [], []>} : vector<17x32xbf16>, vector<32x8xbf16>, vector<17x8xf32> -> vector<17x8xf32>
    %cst_72 = arith.constant dense<0.000000e+00> : vector<17x8xf32>
    %50 = tpu.matmul %45, %20, %cst_72 {dimension_numbers = #tpu.dot_dimension_numbers<[1], [0], [0], [1], [0, 0, 1, 1], [], []>} : vector<17x32xbf16>, vector<32x8xbf16>, vector<17x8xf32> -> vector<17x8xf32>
    %51 = arith.truncf %48 : vector<17x8xf32> to vector<17x8xbf16>
    %52 = arith.truncf %49 : vector<17x8xf32> to vector<17x8xbf16>
    %cst_73 = arith.constant dense<0.000000e+00> : vector<17x17xf32>
    %53 = tpu.matmul %51, %52, %cst_73 {dimension_numbers = #tpu.dot_dimension_numbers<[1], [1], [0], [0], [0, 0, 1, 0], [], []>} : vector<17x8xbf16>, vector<17x8xbf16>, vector<17x17xf32> -> vector<17x17xf32>
    %cst_74 = arith.constant dense<0xFF800000> : vector<17xf32>
    %54 = vector.multi_reduction <maximumf>, %53, %cst_74 [1] : vector<17x17xf32> to vector<17xf32>
    %55 = vector.shape_cast %54 : vector<17xf32> to vector<17x1xf32>
    %56 = vector.broadcast %55 : vector<17x1xf32> to vector<17x17xf32>
    %57 = arith.subf %53, %56 : vector<17x17xf32>
    %58 = math.exp %57 : vector<17x17xf32>
    %cst_75 = arith.constant dense<0.000000e+00> : vector<17xf32>
    %59 = vector.multi_reduction <add>, %58, %cst_75 [1] : vector<17x17xf32> to vector<17xf32>
    %60 = vector.shape_cast %59 : vector<17xf32> to vector<17x1xf32>
    %61 = vector.broadcast %60 : vector<17x1xf32> to vector<17x17xf32>
    %62 = arith.divf %58, %61 : vector<17x17xf32>
    %63 = arith.addf %46, %62 : vector<17x17xf32>
    %64 = arith.truncf %62 : vector<17x17xf32> to vector<17x17xbf16>
    %65 = arith.truncf %50 : vector<17x8xf32> to vector<17x8xbf16>
    %cst_76 = arith.constant dense<0.000000e+00> : vector<17x8xf32>
    %66 = tpu.matmul %64, %65, %cst_76 {dimension_numbers = #tpu.dot_dimension_numbers<[1], [0], [0], [1], [0, 0, 1, 1], [], []>} : vector<17x17xbf16>, vector<17x8xbf16>, vector<17x8xf32> -> vector<17x8xf32>
    %67 = arith.truncf %66 : vector<17x8xf32> to vector<17x8xbf16>
    %cst_77 = arith.constant dense<0.000000e+00> : vector<17x32xf32>
    %68 = tpu.matmul %67, %28, %cst_77 {dimension_numbers = #tpu.dot_dimension_numbers<[1], [0], [0], [1], [0, 0, 1, 1], [], []>} : vector<17x8xbf16>, vector<8x32xbf16>, vector<17x32xf32> -> vector<17x32xf32>
    %69 = arith.addf %47, %68 : vector<17x32xf32>
    %cst_78 = arith.constant dense<0.000000e+00> : vector<17x8xf32>
    %70 = tpu.matmul %45, %6, %cst_78 {dimension_numbers = #tpu.dot_dimension_numbers<[1], [0], [0], [1], [0, 0, 1, 1], [], []>} : vector<17x32xbf16>, vector<32x8xbf16>, vector<17x8xf32> -> vector<17x8xf32>
    %cst_79 = arith.constant dense<0.000000e+00> : vector<17x8xf32>
    %71 = tpu.matmul %45, %14, %cst_79 {dimension_numbers = #tpu.dot_dimension_numbers<[1], [0], [0], [1], [0, 0, 1, 1], [], []>} : vector<17x32xbf16>, vector<32x8xbf16>, vector<17x8xf32> -> vector<17x8xf32>
    %cst_80 = arith.constant dense<0.000000e+00> : vector<17x8xf32>
    %72 = tpu.matmul %45, %22, %cst_80 {dimension_numbers = #tpu.dot_dimension_numbers<[1], [0], [0], [1], [0, 0, 1, 1], [], []>} : vector<17x32xbf16>, vector<32x8xbf16>, vector<17x8xf32> -> vector<17x8xf32>
    %73 = arith.truncf %70 : vector<17x8xf32> to vector<17x8xbf16>
    %74 = arith.truncf %71 : vector<17x8xf32> to vector<17x8xbf16>
    %cst_81 = arith.constant dense<0.000000e+00> : vector<17x17xf32>
    %75 = tpu.matmul %73, %74, %cst_81 {dimension_numbers = #tpu.dot_dimension_numbers<[1], [1], [0], [0], [0, 0, 1, 0], [], []>} : vector<17x8xbf16>, vector<17x8xbf16>, vector<17x17xf32> -> vector<17x17xf32>
    %cst_82 = arith.constant dense<0xFF800000> : vector<17xf32>
    %76 = vector.multi_reduction <maximumf>, %75, %cst_82 [1] : vector<17x17xf32> to vector<17xf32>
    %77 = vector.shape_cast %76 : vector<17xf32> to vector<17x1xf32>
    %78 = vector.broadcast %77 : vector<17x1xf32> to vector<17x17xf32>
    %79 = arith.subf %75, %78 : vector<17x17xf32>
    %80 = math.exp %79 : vector<17x17xf32>
    %cst_83 = arith.constant dense<0.000000e+00> : vector<17xf32>
    %81 = vector.multi_reduction <add>, %80, %cst_83 [1] : vector<17x17xf32> to vector<17xf32>
    %82 = vector.shape_cast %81 : vector<17xf32> to vector<17x1xf32>
    %83 = vector.broadcast %82 : vector<17x1xf32> to vector<17x17xf32>
    %84 = arith.divf %80, %83 : vector<17x17xf32>
    %85 = arith.addf %63, %84 : vector<17x17xf32>
    %86 = arith.truncf %84 : vector<17x17xf32> to vector<17x17xbf16>
    %87 = arith.truncf %72 : vector<17x8xf32> to vector<17x8xbf16>
    %cst_84 = arith.constant dense<0.000000e+00> : vector<17x8xf32>
    %88 = tpu.matmul %86, %87, %cst_84 {dimension_numbers = #tpu.dot_dimension_numbers<[1], [0], [0], [1], [0, 0, 1, 1], [], []>} : vector<17x17xbf16>, vector<17x8xbf16>, vector<17x8xf32> -> vector<17x8xf32>
    %89 = arith.truncf %88 : vector<17x8xf32> to vector<17x8xbf16>
    %cst_85 = arith.constant dense<0.000000e+00> : vector<17x32xf32>
    %90 = tpu.matmul %89, %30, %cst_85 {dimension_numbers = #tpu.dot_dimension_numbers<[1], [0], [0], [1], [0, 0, 1, 1], [], []>} : vector<17x8xbf16>, vector<8x32xbf16>, vector<17x32xf32> -> vector<17x32xf32>
    %91 = arith.addf %69, %90 : vector<17x32xf32>
    %cst_86 = arith.constant dense<0.000000e+00> : vector<17x8xf32>
    %92 = tpu.matmul %45, %8, %cst_86 {dimension_numbers = #tpu.dot_dimension_numbers<[1], [0], [0], [1], [0, 0, 1, 1], [], []>} : vector<17x32xbf16>, vector<32x8xbf16>, vector<17x8xf32> -> vector<17x8xf32>
    %cst_87 = arith.constant dense<0.000000e+00> : vector<17x8xf32>
    %93 = tpu.matmul %45, %16, %cst_87 {dimension_numbers = #tpu.dot_dimension_numbers<[1], [0], [0], [1], [0, 0, 1, 1], [], []>} : vector<17x32xbf16>, vector<32x8xbf16>, vector<17x8xf32> -> vector<17x8xf32>
    %cst_88 = arith.constant dense<0.000000e+00> : vector<17x8xf32>
    %94 = tpu.matmul %45, %24, %cst_88 {dimension_numbers = #tpu.dot_dimension_numbers<[1], [0], [0], [1], [0, 0, 1, 1], [], []>} : vector<17x32xbf16>, vector<32x8xbf16>, vector<17x8xf32> -> vector<17x8xf32>
    %95 = arith.truncf %92 : vector<17x8xf32> to vector<17x8xbf16>
    %96 = arith.truncf %93 : vector<17x8xf32> to vector<17x8xbf16>
    %cst_89 = arith.constant dense<0.000000e+00> : vector<17x17xf32>
    %97 = tpu.matmul %95, %96, %cst_89 {dimension_numbers = #tpu.dot_dimension_numbers<[1], [1], [0], [0], [0, 0, 1, 0], [], []>} : vector<17x8xbf16>, vector<17x8xbf16>, vector<17x17xf32> -> vector<17x17xf32>
    %cst_90 = arith.constant dense<0xFF800000> : vector<17xf32>
    %98 = vector.multi_reduction <maximumf>, %97, %cst_90 [1] : vector<17x17xf32> to vector<17xf32>
    %99 = vector.shape_cast %98 : vector<17xf32> to vector<17x1xf32>
    %100 = vector.broadcast %99 : vector<17x1xf32> to vector<17x17xf32>
    %101 = arith.subf %97, %100 : vector<17x17xf32>
    %102 = math.exp %101 : vector<17x17xf32>
    %cst_91 = arith.constant dense<0.000000e+00> : vector<17xf32>
    %103 = vector.multi_reduction <add>, %102, %cst_91 [1] : vector<17x17xf32> to vector<17xf32>
    %104 = vector.shape_cast %103 : vector<17xf32> to vector<17x1xf32>
    %105 = vector.broadcast %104 : vector<17x1xf32> to vector<17x17xf32>
    %106 = arith.divf %102, %105 : vector<17x17xf32>
    %107 = arith.addf %85, %106 : vector<17x17xf32>
    %108 = arith.truncf %106 : vector<17x17xf32> to vector<17x17xbf16>
    %109 = arith.truncf %94 : vector<17x8xf32> to vector<17x8xbf16>
    %cst_92 = arith.constant dense<0.000000e+00> : vector<17x8xf32>
    %110 = tpu.matmul %108, %109, %cst_92 {dimension_numbers = #tpu.dot_dimension_numbers<[1], [0], [0], [1], [0, 0, 1, 1], [], []>} : vector<17x17xbf16>, vector<17x8xbf16>, vector<17x8xf32> -> vector<17x8xf32>
    %111 = arith.truncf %110 : vector<17x8xf32> to vector<17x8xbf16>
    %cst_93 = arith.constant dense<0.000000e+00> : vector<17x32xf32>
    %112 = tpu.matmul %111, %32, %cst_93 {dimension_numbers = #tpu.dot_dimension_numbers<[1], [0], [0], [1], [0, 0, 1, 1], [], []>} : vector<17x8xbf16>, vector<8x32xbf16>, vector<17x32xf32> -> vector<17x32xf32>
    %113 = arith.addf %91, %112 : vector<17x32xf32>
    %cst_94 = arith.constant dense<0.000000e+00> : vector<17x8xf32>
    %114 = tpu.matmul %45, %10, %cst_94 {dimension_numbers = #tpu.dot_dimension_numbers<[1], [0], [0], [1], [0, 0, 1, 1], [], []>} : vector<17x32xbf16>, vector<32x8xbf16>, vector<17x8xf32> -> vector<17x8xf32>
    %cst_95 = arith.constant dense<0.000000e+00> : vector<17x8xf32>
    %115 = tpu.matmul %45, %18, %cst_95 {dimension_numbers = #tpu.dot_dimension_numbers<[1], [0], [0], [1], [0, 0, 1, 1], [], []>} : vector<17x32xbf16>, vector<32x8xbf16>, vector<17x8xf32> -> vector<17x8xf32>
    %cst_96 = arith.constant dense<0.000000e+00> : vector<17x8xf32>
    %116 = tpu.matmul %45, %26, %cst_96 {dimension_numbers = #tpu.dot_dimension_numbers<[1], [0], [0], [1], [0, 0, 1, 1], [], []>} : vector<17x32xbf16>, vector<32x8xbf16>, vector<17x8xf32> -> vector<17x8xf32>
    %117 = arith.truncf %114 : vector<17x8xf32> to vector<17x8xbf16>
    %118 = arith.truncf %115 : vector<17x8xf32> to vector<17x8xbf16>
    %cst_97 = arith.constant dense<0.000000e+00> : vector<17x17xf32>
    %119 = tpu.matmul %117, %118, %cst_97 {dimension_numbers = #tpu.dot_dimension_numbers<[1], [1], [0], [0], [0, 0, 1, 0], [], []>} : vector<17x8xbf16>, vector<17x8xbf16>, vector<17x17xf32> -> vector<17x17xf32>
    %cst_98 = arith.constant dense<0xFF800000> : vector<17xf32>
    %120 = vector.multi_reduction <maximumf>, %119, %cst_98 [1] : vector<17x17xf32> to vector<17xf32>
    %121 = vector.shape_cast %120 : vector<17xf32> to vector<17x1xf32>
    %122 = vector.broadcast %121 : vector<17x1xf32> to vector<17x17xf32>
    %123 = arith.subf %119, %122 : vector<17x17xf32>
    %124 = math.exp %123 : vector<17x17xf32>
    %cst_99 = arith.constant dense<0.000000e+00> : vector<17xf32>
    %125 = vector.multi_reduction <add>, %124, %cst_99 [1] : vector<17x17xf32> to vector<17xf32>
    %126 = vector.shape_cast %125 : vector<17xf32> to vector<17x1xf32>
    %127 = vector.broadcast %126 : vector<17x1xf32> to vector<17x17xf32>
    %128 = arith.divf %124, %127 : vector<17x17xf32>
    %129 = arith.addf %107, %128 : vector<17x17xf32>
    %130 = arith.truncf %128 : vector<17x17xf32> to vector<17x17xbf16>
    %131 = arith.truncf %116 : vector<17x8xf32> to vector<17x8xbf16>
    %cst_100 = arith.constant dense<0.000000e+00> : vector<17x8xf32>
    %132 = tpu.matmul %130, %131, %cst_100 {dimension_numbers = #tpu.dot_dimension_numbers<[1], [0], [0], [1], [0, 0, 1, 1], [], []>} : vector<17x17xbf16>, vector<17x8xbf16>, vector<17x8xf32> -> vector<17x8xf32>
    %133 = arith.truncf %132 : vector<17x8xf32> to vector<17x8xbf16>
    %cst_101 = arith.constant dense<0.000000e+00> : vector<17x32xf32>
    %134 = tpu.matmul %133, %34, %cst_101 {dimension_numbers = #tpu.dot_dimension_numbers<[1], [0], [0], [1], [0, 0, 1, 1], [], []>} : vector<17x8xbf16>, vector<8x32xbf16>, vector<17x32xf32> -> vector<17x32xf32>
    %135 = arith.addf %113, %134 : vector<17x32xf32>
    %136 = arith.addf %44, %135 : vector<17x32xf32>
    %cst_102 = arith.constant 2.500000e-01 : f32
    %137 = vector.broadcast %cst_102 : f32 to vector<17x17xf32>
    %138 = arith.mulf %129, %137 : vector<17x17xf32>
    %139 = arith.truncf %136 : vector<17x32xf32> to vector<17x32xbf16>
    %cst_103 = arith.constant dense<0.000000e+00> : vector<17x64xf32>
    %140 = tpu.matmul %139, %36, %cst_103 {dimension_numbers = #tpu.dot_dimension_numbers<[1], [1], [0], [0], [0, 0, 1, 0], [], []>} : vector<17x32xbf16>, vector<64x32xbf16>, vector<17x64xf32> -> vector<17x64xf32>
    %cst_104 = arith.constant 2.000000e+00 : f32
    %141 = vector.broadcast %cst_104 : f32 to vector<17x64xf32>
    %142 = arith.mulf %141, %140 : vector<17x64xf32>
    %143 = vector.broadcast %37 : vector<1x64xf32> to vector<17x64xf32>
    %144 = arith.subf %143, %142 : vector<17x64xf32>
    %cst_105 = arith.constant dense<0x7F800000> : vector<17xf32>
    %145 = vector.multi_reduction <minimumf>, %144, %cst_105 [1] : vector<17x64xf32> to vector<17xf32>
    %146 = vector.shape_cast %145 : vector<17xf32> to vector<17x1xf32>
    %147 = vector.broadcast %146 : vector<17x1xf32> to vector<17x64xf32>
    %148 = arith.cmpf ole, %144, %147 : vector<17x64xf32>
    %c63_i32 = arith.constant 63 : i32
    %149 = vector.broadcast %c63_i32 : i32 to vector<17x64xi32>
    %150 = arith.select %148, %38, %149 : vector<17x64xi1>, vector<17x64xi32>
    %cst_106 = arith.constant dense<2147483647> : vector<17xi32>
    %151 = vector.multi_reduction <minsi>, %150, %cst_106 [1] : vector<17x64xi32> to vector<17xi32>
    %152 = vector.shape_cast %151 : vector<17xi32> to vector<17x1xi32>
    %153 = vector.broadcast %152 : vector<17x1xi32> to vector<17x64xi32>
    %154 = arith.cmpi eq, %38, %153 : vector<17x64xi32>
    %155 = arith.extui %154 : vector<17x64xi1> to vector<17x64xi32>
    %156 = arith.sitofp %155 : vector<17x64xi32> to vector<17x64xf32>
    %cst_107 = arith.constant dense<0.000000e+00> : vector<17x32xf32>
    %157 = tpu.matmul %156, %35, %cst_107 {dimension_numbers = #tpu.dot_dimension_numbers<[1], [0], [0], [1], [0, 0, 1, 1], [], []>} : vector<17x64xf32>, vector<64x32xf32>, vector<17x32xf32> -> vector<17x32xf32>
    %158 = vector.extract_strided_slice %136 {offsets = [0, 0], sizes = [16, 32], strides = [1, 1]} : vector<17x32xf32> to vector<16x32xf32>
    %c0_108 = arith.constant 0 : index
    %c0_109 = arith.constant 0 : index
    %c0_110 = arith.constant 0 : index
    %159 = vector.load %arg10[%c0_108, %c0_109, %c0_110] : memref<2x16x32xf32, #tpu.memory_space<vmem>>, vector<1x16x32xf32>
    %160 = vector.shape_cast %159 : vector<1x16x32xf32> to vector<16x32xf32>
    %161 = vector.shape_cast %158 : vector<16x32xf32> to vector<1x16x32xf32>
    tpu.vector_store %arg10[%c0_108, %c0_109, %c0_110], %161 {strides = array<i32>} : memref<2x16x32xf32, #tpu.memory_space<vmem>>, vector<1x16x32xf32>,
    %162 = vector.extract_strided_slice %157 {offsets = [0, 0], sizes = [16, 32], strides = [1, 1]} : vector<17x32xf32> to vector<16x32xf32>
    %c0_111 = arith.constant 0 : index
    %c0_112 = arith.constant 0 : index
    %c0_113 = arith.constant 0 : index
    %163 = vector.load %arg9[%c0_111, %c0_112, %c0_113] : memref<2x16x32xf32, #tpu.memory_space<vmem>>, vector<1x16x32xf32>
    %164 = vector.shape_cast %163 : vector<1x16x32xf32> to vector<16x32xf32>
    %165 = vector.shape_cast %162 : vector<16x32xf32> to vector<1x16x32xf32>
    tpu.vector_store %arg9[%c0_111, %c0_112, %c0_113], %165 {strides = array<i32>} : memref<2x16x32xf32, #tpu.memory_space<vmem>>, vector<1x16x32xf32>,
    %166 = vector.extract_strided_slice %157 {offsets = [16, 0], sizes = [1, 32], strides = [1, 1]} : vector<17x32xf32> to vector<1x32xf32>
    %c0_114 = arith.constant 0 : index
    %c0_115 = arith.constant 0 : index
    %c0_116 = arith.constant 0 : index
    %167 = vector.load %arg8[%c0_114, %c0_115, %c0_116] : memref<2x1x32xf32, #tpu.memory_space<vmem>>, vector<1x1x32xf32>
    %168 = vector.shape_cast %167 : vector<1x1x32xf32> to vector<1x32xf32>
    %169 = vector.shape_cast %166 : vector<1x32xf32> to vector<1x1x32xf32>
    tpu.vector_store %arg8[%c0_114, %c0_115, %c0_116], %169 {strides = array<i32>} : memref<2x1x32xf32, #tpu.memory_space<vmem>>, vector<1x1x32xf32>,
    %170 = vector.extract_strided_slice %152 {offsets = [0, 0], sizes = [16, 1], strides = [1, 1]} : vector<17x1xi32> to vector<16x1xi32>
    %c0_117 = arith.constant 0 : index
    %c0_118 = arith.constant 0 : index
    %c0_119 = arith.constant 0 : index
    %171 = vector.load %arg11[%c0_117, %c0_118, %c0_119] : memref<2x16x1xi32, #tpu.memory_space<vmem>>, vector<1x16x1xi32>
    %172 = vector.shape_cast %171 : vector<1x16x1xi32> to vector<16x1xi32>
    %173 = vector.shape_cast %170 : vector<16x1xi32> to vector<1x16x1xi32>
    tpu.vector_store %arg11[%c0_117, %c0_118, %c0_119], %173 {strides = array<i32>} : memref<2x16x1xi32, #tpu.memory_space<vmem>>, vector<1x16x1xi32>,
    %174 = vector.extract_strided_slice %138 {offsets = [0, 0], sizes = [16, 16], strides = [1, 1]} : vector<17x17xf32> to vector<16x16xf32>
    %c0_120 = arith.constant 0 : index
    %c0_121 = arith.constant 0 : index
    %c0_122 = arith.constant 0 : index
    %175 = vector.load %arg12[%c0_120, %c0_121, %c0_122] : memref<2x16x16xf32, #tpu.memory_space<vmem>>, vector<1x16x16xf32>
    %176 = vector.shape_cast %175 : vector<1x16x16xf32> to vector<16x16xf32>
    %177 = vector.shape_cast %174 : vector<16x16xf32> to vector<1x16x16xf32>
    tpu.vector_store %arg12[%c0_120, %c0_121, %c0_122], %177 {strides = array<i32>} : memref<2x16x16xf32, #tpu.memory_space<vmem>>, vector<1x16x16xf32>,
    %178 = vector.extract_strided_slice %138 {offsets = [16, 0], sizes = [1, 16], strides = [1, 1]} : vector<17x17xf32> to vector<1x16xf32>
    %c0_123 = arith.constant 0 : index
    %c0_124 = arith.constant 0 : index
    %c0_125 = arith.constant 0 : index
    %179 = vector.load %arg13[%c0_123, %c0_124, %c0_125] : memref<2x1x16xf32, #tpu.memory_space<vmem>>, vector<1x1x16xf32>
    %180 = vector.shape_cast %179 : vector<1x1x16xf32> to vector<1x16xf32>
    %181 = vector.shape_cast %178 : vector<1x16xf32> to vector<1x1x16xf32>
    tpu.vector_store %arg13[%c0_123, %c0_124, %c0_125], %181 {strides = array<i32>} : memref<2x1x16xf32, #tpu.memory_space<vmem>>, vector<1x1x16xf32>,
    %c1_126 = arith.constant 1 : index
    %c0_127 = arith.constant 0 : index
    %c0_128 = arith.constant 0 : index
    %182 = vector.load %arg1[%c1_126, %c0_127, %c0_128] : memref<2x16x64xf32, #tpu.memory_space<vmem>>, vector<1x16x64xf32>
    %183 = vector.shape_cast %182 : vector<1x16x64xf32> to vector<16x64xf32>
    %184 = arith.truncf %183 : vector<16x64xf32> to vector<16x64xbf16>
    %cst_129 = arith.constant dense<0.000000e+00> : vector<16x32xf32>
    %185 = tpu.matmul %184, %0, %cst_129 {dimension_numbers = #tpu.dot_dimension_numbers<[1], [0], [0], [1], [0, 0, 1, 1], [], []>} : vector<16x64xbf16>, vector<64x32xbf16>, vector<16x32xf32> -> vector<16x32xf32>
    %186 = arith.addf %185, %1 : vector<16x32xf32>
    %187 = tpu.concatenate %186, %2 in 0 : vector<16x32xf32>, vector<1x32xf32> -> vector<17x32xf32>
    %188 = arith.truncf %187 : vector<17x32xf32> to vector<17x32xbf16>
    %cst_130 = arith.constant 0.000000e+00 : f32
    %189 = vector.broadcast %cst_130 : f32 to vector<17x17xf32>
    %cst_131 = arith.constant 0.000000e+00 : f32
    %190 = vector.broadcast %cst_131 : f32 to vector<17x32xf32>
    %cst_132 = arith.constant dense<0.000000e+00> : vector<17x8xf32>
    %191 = tpu.matmul %188, %4, %cst_132 {dimension_numbers = #tpu.dot_dimension_numbers<[1], [0], [0], [1], [0, 0, 1, 1], [], []>} : vector<17x32xbf16>, vector<32x8xbf16>, vector<17x8xf32> -> vector<17x8xf32>
    %cst_133 = arith.constant dense<0.000000e+00> : vector<17x8xf32>
    %192 = tpu.matmul %188, %12, %cst_133 {dimension_numbers = #tpu.dot_dimension_numbers<[1], [0], [0], [1], [0, 0, 1, 1], [], []>} : vector<17x32xbf16>, vector<32x8xbf16>, vector<17x8xf32> -> vector<17x8xf32>
    %cst_134 = arith.constant dense<0.000000e+00> : vector<17x8xf32>
    %193 = tpu.matmul %188, %20, %cst_134 {dimension_numbers = #tpu.dot_dimension_numbers<[1], [0], [0], [1], [0, 0, 1, 1], [], []>} : vector<17x32xbf16>, vector<32x8xbf16>, vector<17x8xf32> -> vector<17x8xf32>
    %194 = arith.truncf %191 : vector<17x8xf32> to vector<17x8xbf16>
    %195 = arith.truncf %192 : vector<17x8xf32> to vector<17x8xbf16>
    %cst_135 = arith.constant dense<0.000000e+00> : vector<17x17xf32>
    %196 = tpu.matmul %194, %195, %cst_135 {dimension_numbers = #tpu.dot_dimension_numbers<[1], [1], [0], [0], [0, 0, 1, 0], [], []>} : vector<17x8xbf16>, vector<17x8xbf16>, vector<17x17xf32> -> vector<17x17xf32>
    %cst_136 = arith.constant dense<0xFF800000> : vector<17xf32>
    %197 = vector.multi_reduction <maximumf>, %196, %cst_136 [1] : vector<17x17xf32> to vector<17xf32>
    %198 = vector.shape_cast %197 : vector<17xf32> to vector<17x1xf32>
    %199 = vector.broadcast %198 : vector<17x1xf32> to vector<17x17xf32>
    %200 = arith.subf %196, %199 : vector<17x17xf32>
    %201 = math.exp %200 : vector<17x17xf32>
    %cst_137 = arith.constant dense<0.000000e+00> : vector<17xf32>
    %202 = vector.multi_reduction <add>, %201, %cst_137 [1] : vector<17x17xf32> to vector<17xf32>
    %203 = vector.shape_cast %202 : vector<17xf32> to vector<17x1xf32>
    %204 = vector.broadcast %203 : vector<17x1xf32> to vector<17x17xf32>
    %205 = arith.divf %201, %204 : vector<17x17xf32>
    %206 = arith.addf %189, %205 : vector<17x17xf32>
    %207 = arith.truncf %205 : vector<17x17xf32> to vector<17x17xbf16>
    %208 = arith.truncf %193 : vector<17x8xf32> to vector<17x8xbf16>
    %cst_138 = arith.constant dense<0.000000e+00> : vector<17x8xf32>
    %209 = tpu.matmul %207, %208, %cst_138 {dimension_numbers = #tpu.dot_dimension_numbers<[1], [0], [0], [1], [0, 0, 1, 1], [], []>} : vector<17x17xbf16>, vector<17x8xbf16>, vector<17x8xf32> -> vector<17x8xf32>
    %210 = arith.truncf %209 : vector<17x8xf32> to vector<17x8xbf16>
    %cst_139 = arith.constant dense<0.000000e+00> : vector<17x32xf32>
    %211 = tpu.matmul %210, %28, %cst_139 {dimension_numbers = #tpu.dot_dimension_numbers<[1], [0], [0], [1], [0, 0, 1, 1], [], []>} : vector<17x8xbf16>, vector<8x32xbf16>, vector<17x32xf32> -> vector<17x32xf32>
    %212 = arith.addf %190, %211 : vector<17x32xf32>
    %cst_140 = arith.constant dense<0.000000e+00> : vector<17x8xf32>
    %213 = tpu.matmul %188, %6, %cst_140 {dimension_numbers = #tpu.dot_dimension_numbers<[1], [0], [0], [1], [0, 0, 1, 1], [], []>} : vector<17x32xbf16>, vector<32x8xbf16>, vector<17x8xf32> -> vector<17x8xf32>
    %cst_141 = arith.constant dense<0.000000e+00> : vector<17x8xf32>
    %214 = tpu.matmul %188, %14, %cst_141 {dimension_numbers = #tpu.dot_dimension_numbers<[1], [0], [0], [1], [0, 0, 1, 1], [], []>} : vector<17x32xbf16>, vector<32x8xbf16>, vector<17x8xf32> -> vector<17x8xf32>
    %cst_142 = arith.constant dense<0.000000e+00> : vector<17x8xf32>
    %215 = tpu.matmul %188, %22, %cst_142 {dimension_numbers = #tpu.dot_dimension_numbers<[1], [0], [0], [1], [0, 0, 1, 1], [], []>} : vector<17x32xbf16>, vector<32x8xbf16>, vector<17x8xf32> -> vector<17x8xf32>
    %216 = arith.truncf %213 : vector<17x8xf32> to vector<17x8xbf16>
    %217 = arith.truncf %214 : vector<17x8xf32> to vector<17x8xbf16>
    %cst_143 = arith.constant dense<0.000000e+00> : vector<17x17xf32>
    %218 = tpu.matmul %216, %217, %cst_143 {dimension_numbers = #tpu.dot_dimension_numbers<[1], [1], [0], [0], [0, 0, 1, 0], [], []>} : vector<17x8xbf16>, vector<17x8xbf16>, vector<17x17xf32> -> vector<17x17xf32>
    %cst_144 = arith.constant dense<0xFF800000> : vector<17xf32>
    %219 = vector.multi_reduction <maximumf>, %218, %cst_144 [1] : vector<17x17xf32> to vector<17xf32>
    %220 = vector.shape_cast %219 : vector<17xf32> to vector<17x1xf32>
    %221 = vector.broadcast %220 : vector<17x1xf32> to vector<17x17xf32>
    %222 = arith.subf %218, %221 : vector<17x17xf32>
    %223 = math.exp %222 : vector<17x17xf32>
    %cst_145 = arith.constant dense<0.000000e+00> : vector<17xf32>
    %224 = vector.multi_reduction <add>, %223, %cst_145 [1] : vector<17x17xf32> to vector<17xf32>
    %225 = vector.shape_cast %224 : vector<17xf32> to vector<17x1xf32>
    %226 = vector.broadcast %225 : vector<17x1xf32> to vector<17x17xf32>
    %227 = arith.divf %223, %226 : vector<17x17xf32>
    %228 = arith.addf %206, %227 : vector<17x17xf32>
    %229 = arith.truncf %227 : vector<17x17xf32> to vector<17x17xbf16>
    %230 = arith.truncf %215 : vector<17x8xf32> to vector<17x8xbf16>
    %cst_146 = arith.constant dense<0.000000e+00> : vector<17x8xf32>
    %231 = tpu.matmul %229, %230, %cst_146 {dimension_numbers = #tpu.dot_dimension_numbers<[1], [0], [0], [1], [0, 0, 1, 1], [], []>} : vector<17x17xbf16>, vector<17x8xbf16>, vector<17x8xf32> -> vector<17x8xf32>
    %232 = arith.truncf %231 : vector<17x8xf32> to vector<17x8xbf16>
    %cst_147 = arith.constant dense<0.000000e+00> : vector<17x32xf32>
    %233 = tpu.matmul %232, %30, %cst_147 {dimension_numbers = #tpu.dot_dimension_numbers<[1], [0], [0], [1], [0, 0, 1, 1], [], []>} : vector<17x8xbf16>, vector<8x32xbf16>, vector<17x32xf32> -> vector<17x32xf32>
    %234 = arith.addf %212, %233 : vector<17x32xf32>
    %cst_148 = arith.constant dense<0.000000e+00> : vector<17x8xf32>
    %235 = tpu.matmul %188, %8, %cst_148 {dimension_numbers = #tpu.dot_dimension_numbers<[1], [0], [0], [1], [0, 0, 1, 1], [], []>} : vector<17x32xbf16>, vector<32x8xbf16>, vector<17x8xf32> -> vector<17x8xf32>
    %cst_149 = arith.constant dense<0.000000e+00> : vector<17x8xf32>
    %236 = tpu.matmul %188, %16, %cst_149 {dimension_numbers = #tpu.dot_dimension_numbers<[1], [0], [0], [1], [0, 0, 1, 1], [], []>} : vector<17x32xbf16>, vector<32x8xbf16>, vector<17x8xf32> -> vector<17x8xf32>
    %cst_150 = arith.constant dense<0.000000e+00> : vector<17x8xf32>
    %237 = tpu.matmul %188, %24, %cst_150 {dimension_numbers = #tpu.dot_dimension_numbers<[1], [0], [0], [1], [0, 0, 1, 1], [], []>} : vector<17x32xbf16>, vector<32x8xbf16>, vector<17x8xf32> -> vector<17x8xf32>
    %238 = arith.truncf %235 : vector<17x8xf32> to vector<17x8xbf16>
    %239 = arith.truncf %236 : vector<17x8xf32> to vector<17x8xbf16>
    %cst_151 = arith.constant dense<0.000000e+00> : vector<17x17xf32>
    %240 = tpu.matmul %238, %239, %cst_151 {dimension_numbers = #tpu.dot_dimension_numbers<[1], [1], [0], [0], [0, 0, 1, 0], [], []>} : vector<17x8xbf16>, vector<17x8xbf16>, vector<17x17xf32> -> vector<17x17xf32>
    %cst_152 = arith.constant dense<0xFF800000> : vector<17xf32>
    %241 = vector.multi_reduction <maximumf>, %240, %cst_152 [1] : vector<17x17xf32> to vector<17xf32>
    %242 = vector.shape_cast %241 : vector<17xf32> to vector<17x1xf32>
    %243 = vector.broadcast %242 : vector<17x1xf32> to vector<17x17xf32>
    %244 = arith.subf %240, %243 : vector<17x17xf32>
    %245 = math.exp %244 : vector<17x17xf32>
    %cst_153 = arith.constant dense<0.000000e+00> : vector<17xf32>
    %246 = vector.multi_reduction <add>, %245, %cst_153 [1] : vector<17x17xf32> to vector<17xf32>
    %247 = vector.shape_cast %246 : vector<17xf32> to vector<17x1xf32>
    %248 = vector.broadcast %247 : vector<17x1xf32> to vector<17x17xf32>
    %249 = arith.divf %245, %248 : vector<17x17xf32>
    %250 = arith.addf %228, %249 : vector<17x17xf32>
    %251 = arith.truncf %249 : vector<17x17xf32> to vector<17x17xbf16>
    %252 = arith.truncf %237 : vector<17x8xf32> to vector<17x8xbf16>
    %cst_154 = arith.constant dense<0.000000e+00> : vector<17x8xf32>
    %253 = tpu.matmul %251, %252, %cst_154 {dimension_numbers = #tpu.dot_dimension_numbers<[1], [0], [0], [1], [0, 0, 1, 1], [], []>} : vector<17x17xbf16>, vector<17x8xbf16>, vector<17x8xf32> -> vector<17x8xf32>
    %254 = arith.truncf %253 : vector<17x8xf32> to vector<17x8xbf16>
    %cst_155 = arith.constant dense<0.000000e+00> : vector<17x32xf32>
    %255 = tpu.matmul %254, %32, %cst_155 {dimension_numbers = #tpu.dot_dimension_numbers<[1], [0], [0], [1], [0, 0, 1, 1], [], []>} : vector<17x8xbf16>, vector<8x32xbf16>, vector<17x32xf32> -> vector<17x32xf32>
    %256 = arith.addf %234, %255 : vector<17x32xf32>
    %cst_156 = arith.constant dense<0.000000e+00> : vector<17x8xf32>
    %257 = tpu.matmul %188, %10, %cst_156 {dimension_numbers = #tpu.dot_dimension_numbers<[1], [0], [0], [1], [0, 0, 1, 1], [], []>} : vector<17x32xbf16>, vector<32x8xbf16>, vector<17x8xf32> -> vector<17x8xf32>
    %cst_157 = arith.constant dense<0.000000e+00> : vector<17x8xf32>
    %258 = tpu.matmul %188, %18, %cst_157 {dimension_numbers = #tpu.dot_dimension_numbers<[1], [0], [0], [1], [0, 0, 1, 1], [], []>} : vector<17x32xbf16>, vector<32x8xbf16>, vector<17x8xf32> -> vector<17x8xf32>
    %cst_158 = arith.constant dense<0.000000e+00> : vector<17x8xf32>
    %259 = tpu.matmul %188, %26, %cst_158 {dimension_numbers = #tpu.dot_dimension_numbers<[1], [0], [0], [1], [0, 0, 1, 1], [], []>} : vector<17x32xbf16>, vector<32x8xbf16>, vector<17x8xf32> -> vector<17x8xf32>
    %260 = arith.truncf %257 : vector<17x8xf32> to vector<17x8xbf16>
    %261 = arith.truncf %258 : vector<17x8xf32> to vector<17x8xbf16>
    %cst_159 = arith.constant dense<0.000000e+00> : vector<17x17xf32>
    %262 = tpu.matmul %260, %261, %cst_159 {dimension_numbers = #tpu.dot_dimension_numbers<[1], [1], [0], [0], [0, 0, 1, 0], [], []>} : vector<17x8xbf16>, vector<17x8xbf16>, vector<17x17xf32> -> vector<17x17xf32>
    %cst_160 = arith.constant dense<0xFF800000> : vector<17xf32>
    %263 = vector.multi_reduction <maximumf>, %262, %cst_160 [1] : vector<17x17xf32> to vector<17xf32>
    %264 = vector.shape_cast %263 : vector<17xf32> to vector<17x1xf32>
    %265 = vector.broadcast %264 : vector<17x1xf32> to vector<17x17xf32>
    %266 = arith.subf %262, %265 : vector<17x17xf32>
    %267 = math.exp %266 : vector<17x17xf32>
    %cst_161 = arith.constant dense<0.000000e+00> : vector<17xf32>
    %268 = vector.multi_reduction <add>, %267, %cst_161 [1] : vector<17x17xf32> to vector<17xf32>
    %269 = vector.shape_cast %268 : vector<17xf32> to vector<17x1xf32>
    %270 = vector.broadcast %269 : vector<17x1xf32> to vector<17x17xf32>
    %271 = arith.divf %267, %270 : vector<17x17xf32>
    %272 = arith.addf %250, %271 : vector<17x17xf32>
    %273 = arith.truncf %271 : vector<17x17xf32> to vector<17x17xbf16>
    %274 = arith.truncf %259 : vector<17x8xf32> to vector<17x8xbf16>
    %cst_162 = arith.constant dense<0.000000e+00> : vector<17x8xf32>
    %275 = tpu.matmul %273, %274, %cst_162 {dimension_numbers = #tpu.dot_dimension_numbers<[1], [0], [0], [1], [0, 0, 1, 1], [], []>} : vector<17x17xbf16>, vector<17x8xbf16>, vector<17x8xf32> -> vector<17x8xf32>
    %276 = arith.truncf %275 : vector<17x8xf32> to vector<17x8xbf16>
    %cst_163 = arith.constant dense<0.000000e+00> : vector<17x32xf32>
    %277 = tpu.matmul %276, %34, %cst_163 {dimension_numbers = #tpu.dot_dimension_numbers<[1], [0], [0], [1], [0, 0, 1, 1], [], []>} : vector<17x8xbf16>, vector<8x32xbf16>, vector<17x32xf32> -> vector<17x32xf32>
    %278 = arith.addf %256, %277 : vector<17x32xf32>
    %279 = arith.addf %187, %278 : vector<17x32xf32>
    %cst_164 = arith.constant 2.500000e-01 : f32
    %280 = vector.broadcast %cst_164 : f32 to vector<17x17xf32>
    %281 = arith.mulf %272, %280 : vector<17x17xf32>
    %282 = arith.truncf %279 : vector<17x32xf32> to vector<17x32xbf16>
    %cst_165 = arith.constant dense<0.000000e+00> : vector<17x64xf32>
    %283 = tpu.matmul %282, %36, %cst_165 {dimension_numbers = #tpu.dot_dimension_numbers<[1], [1], [0], [0], [0, 0, 1, 0], [], []>} : vector<17x32xbf16>, vector<64x32xbf16>, vector<17x64xf32> -> vector<17x64xf32>
    %cst_166 = arith.constant 2.000000e+00 : f32
    %284 = vector.broadcast %cst_166 : f32 to vector<17x64xf32>
    %285 = arith.mulf %284, %283 : vector<17x64xf32>
    %286 = vector.broadcast %37 : vector<1x64xf32> to vector<17x64xf32>
    %287 = arith.subf %286, %285 : vector<17x64xf32>
    %cst_167 = arith.constant dense<0x7F800000> : vector<17xf32>
    %288 = vector.multi_reduction <minimumf>, %287, %cst_167 [1] : vector<17x64xf32> to vector<17xf32>
    %289 = vector.shape_cast %288 : vector<17xf32> to vector<17x1xf32>
    %290 = vector.broadcast %289 : vector<17x1xf32> to vector<17x64xf32>
    %291 = arith.cmpf ole, %287, %290 : vector<17x64xf32>
    %c63_i32_168 = arith.constant 63 : i32
    %292 = vector.broadcast %c63_i32_168 : i32 to vector<17x64xi32>
    %293 = arith.select %291, %38, %292 : vector<17x64xi1>, vector<17x64xi32>
    %cst_169 = arith.constant dense<2147483647> : vector<17xi32>
    %294 = vector.multi_reduction <minsi>, %293, %cst_169 [1] : vector<17x64xi32> to vector<17xi32>
    %295 = vector.shape_cast %294 : vector<17xi32> to vector<17x1xi32>
    %296 = vector.broadcast %295 : vector<17x1xi32> to vector<17x64xi32>
    %297 = arith.cmpi eq, %38, %296 : vector<17x64xi32>
    %298 = arith.extui %297 : vector<17x64xi1> to vector<17x64xi32>
    %299 = arith.sitofp %298 : vector<17x64xi32> to vector<17x64xf32>
    %cst_170 = arith.constant dense<0.000000e+00> : vector<17x32xf32>
    %300 = tpu.matmul %299, %35, %cst_170 {dimension_numbers = #tpu.dot_dimension_numbers<[1], [0], [0], [1], [0, 0, 1, 1], [], []>} : vector<17x64xf32>, vector<64x32xf32>, vector<17x32xf32> -> vector<17x32xf32>
    %301 = vector.extract_strided_slice %279 {offsets = [0, 0], sizes = [16, 32], strides = [1, 1]} : vector<17x32xf32> to vector<16x32xf32>
    %c1_171 = arith.constant 1 : index
    %c0_172 = arith.constant 0 : index
    %c0_173 = arith.constant 0 : index
    %302 = vector.load %arg10[%c1_171, %c0_172, %c0_173] : memref<2x16x32xf32, #tpu.memory_space<vmem>>, vector<1x16x32xf32>
    %303 = vector.shape_cast %302 : vector<1x16x32xf32> to vector<16x32xf32>
    %304 = vector.shape_cast %301 : vector<16x32xf32> to vector<1x16x32xf32>
    tpu.vector_store %arg10[%c1_171, %c0_172, %c0_173], %304 {strides = array<i32>} : memref<2x16x32xf32, #tpu.memory_space<vmem>>, vector<1x16x32xf32>,
    %305 = vector.extract_strided_slice %300 {offsets = [0, 0], sizes = [16, 32], strides = [1, 1]} : vector<17x32xf32> to vector<16x32xf32>
    %c1_174 = arith.constant 1 : index
    %c0_175 = arith.constant 0 : index
    %c0_176 = arith.constant 0 : index
    %306 = vector.load %arg9[%c1_174, %c0_175, %c0_176] : memref<2x16x32xf32, #tpu.memory_space<vmem>>, vector<1x16x32xf32>
    %307 = vector.shape_cast %306 : vector<1x16x32xf32> to vector<16x32xf32>
    %308 = vector.shape_cast %305 : vector<16x32xf32> to vector<1x16x32xf32>
    tpu.vector_store %arg9[%c1_174, %c0_175, %c0_176], %308 {strides = array<i32>} : memref<2x16x32xf32, #tpu.memory_space<vmem>>, vector<1x16x32xf32>,
    %309 = vector.extract_strided_slice %300 {offsets = [16, 0], sizes = [1, 32], strides = [1, 1]} : vector<17x32xf32> to vector<1x32xf32>
    %c1_177 = arith.constant 1 : index
    %c0_178 = arith.constant 0 : index
    %c0_179 = arith.constant 0 : index
    %310 = vector.load %arg8[%c1_177, %c0_178, %c0_179] : memref<2x1x32xf32, #tpu.memory_space<vmem>>, vector<1x1x32xf32>
    %311 = vector.shape_cast %310 : vector<1x1x32xf32> to vector<1x32xf32>
    %312 = vector.shape_cast %309 : vector<1x32xf32> to vector<1x1x32xf32>
    tpu.vector_store %arg8[%c1_177, %c0_178, %c0_179], %312 {strides = array<i32>} : memref<2x1x32xf32, #tpu.memory_space<vmem>>, vector<1x1x32xf32>,
    %313 = vector.extract_strided_slice %295 {offsets = [0, 0], sizes = [16, 1], strides = [1, 1]} : vector<17x1xi32> to vector<16x1xi32>
    %c1_180 = arith.constant 1 : index
    %c0_181 = arith.constant 0 : index
    %c0_182 = arith.constant 0 : index
    %314 = vector.load %arg11[%c1_180, %c0_181, %c0_182] : memref<2x16x1xi32, #tpu.memory_space<vmem>>, vector<1x16x1xi32>
    %315 = vector.shape_cast %314 : vector<1x16x1xi32> to vector<16x1xi32>
    %316 = vector.shape_cast %313 : vector<16x1xi32> to vector<1x16x1xi32>
    tpu.vector_store %arg11[%c1_180, %c0_181, %c0_182], %316 {strides = array<i32>} : memref<2x16x1xi32, #tpu.memory_space<vmem>>, vector<1x16x1xi32>,
    %317 = vector.extract_strided_slice %281 {offsets = [0, 0], sizes = [16, 16], strides = [1, 1]} : vector<17x17xf32> to vector<16x16xf32>
    %c1_183 = arith.constant 1 : index
    %c0_184 = arith.constant 0 : index
    %c0_185 = arith.constant 0 : index
    %318 = vector.load %arg12[%c1_183, %c0_184, %c0_185] : memref<2x16x16xf32, #tpu.memory_space<vmem>>, vector<1x16x16xf32>
    %319 = vector.shape_cast %318 : vector<1x16x16xf32> to vector<16x16xf32>
    %320 = vector.shape_cast %317 : vector<16x16xf32> to vector<1x16x16xf32>
    tpu.vector_store %arg12[%c1_183, %c0_184, %c0_185], %320 {strides = array<i32>} : memref<2x16x16xf32, #tpu.memory_space<vmem>>, vector<1x16x16xf32>,
    %321 = vector.extract_strided_slice %281 {offsets = [16, 0], sizes = [1, 16], strides = [1, 1]} : vector<17x17xf32> to vector<1x16xf32>
    %c1_186 = arith.constant 1 : index
    %c0_187 = arith.constant 0 : index
    %c0_188 = arith.constant 0 : index
    %322 = vector.load %arg13[%c1_186, %c0_187, %c0_188] : memref<2x1x16xf32, #tpu.memory_space<vmem>>, vector<1x1x16xf32>
    %323 = vector.shape_cast %322 : vector<1x1x16xf32> to vector<1x16xf32>
    %324 = vector.shape_cast %321 : vector<1x16xf32> to vector<1x1x16xf32>
    tpu.vector_store %arg13[%c1_186, %c0_187, %c0_188], %324 {strides = array<i32>} : memref<2x1x16xf32, #tpu.memory_space<vmem>>, vector<1x1x16xf32>,
    return
  }
  func.func @transform_0(%arg0: i32) -> (i32, i32, i32) {
    %c0_i32 = arith.constant 0 : i32
    %c0_i32_0 = arith.constant 0 : i32
    %c0_i32_1 = arith.constant 0 : i32
    %c0_i32_2 = arith.constant 0 : i32
    return %c0_i32, %c0_i32_0, %c0_i32_1 : i32, i32, i32
  }
  func.func @transform_1(%arg0: i32) -> (i32, i32) {
    %c0_i32 = arith.constant 0 : i32
    %c0_i32_0 = arith.constant 0 : i32
    %c0_i32_1 = arith.constant 0 : i32
    return %c0_i32, %c0_i32_0 : i32, i32
  }
  func.func @transform_2(%arg0: i32) -> (i32, i32) {
    %c0_i32 = arith.constant 0 : i32
    %c0_i32_0 = arith.constant 0 : i32
    %c0_i32_1 = arith.constant 0 : i32
    return %c0_i32, %c0_i32_0 : i32, i32
  }
  func.func @transform_3(%arg0: i32) -> (i32, i32, i32, i32) {
    %c0_i32 = arith.constant 0 : i32
    %c0_i32_0 = arith.constant 0 : i32
    %c0_i32_1 = arith.constant 0 : i32
    %c0_i32_2 = arith.constant 0 : i32
    %c0_i32_3 = arith.constant 0 : i32
    return %c0_i32, %c0_i32_0, %c0_i32_1, %c0_i32_2 : i32, i32, i32, i32
  }
  func.func @transform_4(%arg0: i32) -> (i32, i32, i32) {
    %c0_i32 = arith.constant 0 : i32
    %c0_i32_0 = arith.constant 0 : i32
    %c0_i32_1 = arith.constant 0 : i32
    %c0_i32_2 = arith.constant 0 : i32
    return %c0_i32, %c0_i32_0, %c0_i32_1 : i32, i32, i32
  }
  func.func @transform_5(%arg0: i32) -> (i32, i32) {
    %c0_i32 = arith.constant 0 : i32
    %c0_i32_0 = arith.constant 0 : i32
    %c0_i32_1 = arith.constant 0 : i32
    return %c0_i32, %c0_i32_0 : i32, i32
  }
  func.func @transform_6(%arg0: i32) -> (i32, i32) {
    %c0_i32 = arith.constant 0 : i32
    %c0_i32_0 = arith.constant 0 : i32
    %c0_i32_1 = arith.constant 0 : i32
    return %c0_i32, %c0_i32_0 : i32, i32
  }
  func.func @transform_7(%arg0: i32) -> (i32, i32, i32) {
    %c0_i32 = arith.constant 0 : i32
    %c0_i32_0 = arith.constant 0 : i32
    %c0_i32_1 = arith.constant 0 : i32
    %c0_i32_2 = arith.constant 0 : i32
    return %c0_i32, %c0_i32_0, %c0_i32_1 : i32, i32, i32
  }
  func.func @transform_8(%arg0: i32) -> (i32, i32, i32) {
    %c0_i32 = arith.constant 0 : i32
    %c0_i32_0 = arith.constant 0 : i32
    %c0_i32_1 = arith.constant 0 : i32
    %c0_i32_2 = arith.constant 0 : i32
    return %c0_i32, %c0_i32_0, %c0_i32_1 : i32, i32, i32
  }
  func.func @transform_9(%arg0: i32) -> (i32, i32, i32) {
    %c0_i32 = arith.constant 0 : i32
    %c0_i32_0 = arith.constant 0 : i32
    %c0_i32_1 = arith.constant 0 : i32
    %c0_i32_2 = arith.constant 0 : i32
    return %c0_i32, %c0_i32_0, %c0_i32_1 : i32, i32, i32
  }
  func.func @transform_10(%arg0: i32) -> (i32, i32, i32) {
    %c0_i32 = arith.constant 0 : i32
    %c0_i32_0 = arith.constant 0 : i32
    %c0_i32_1 = arith.constant 0 : i32
    %c0_i32_2 = arith.constant 0 : i32
    return %c0_i32, %c0_i32_0, %c0_i32_1 : i32, i32, i32
  }
  func.func @transform_11(%arg0: i32) -> (i32, i32, i32) {
    %c0_i32 = arith.constant 0 : i32
    %c0_i32_0 = arith.constant 0 : i32
    %c0_i32_1 = arith.constant 0 : i32
    %c0_i32_2 = arith.constant 0 : i32
    return %c0_i32, %c0_i32_0, %c0_i32_1 : i32, i32, i32
  }
  func.func @transform_12(%arg0: i32) -> (i32, i32, i32) {
    %c0_i32 = arith.constant 0 : i32
    %c0_i32_0 = arith.constant 0 : i32
    %c0_i32_1 = arith.constant 0 : i32
    %c0_i32_2 = arith.constant 0 : i32
    return %c0_i32, %c0_i32_0, %c0_i32_1 : i32, i32, i32
  }
}

</mosaic_0001>

<llo_original>
// kernel: _lambda_.1
$region0: #{_lambda_.1}
  #allocation0 [shape = 'u32[]', space=smem, size = 0x4, offset = 0x4, fixed_abs, tag = 'smem constant byte address 0x4 - core index']
  #allocation1 [shape = 'u32[144,128]{1,0:T(1,128)}', space=vmem, size = 0x12000, scoped, tag = 'internal scratch']
  %s0 = inlined_call_operand.vmem [shape: f32[2,16,64], index: 0, kind: input, shape index: {}]
  %s1 = inlined_call_operand.vmem [shape: bf16[64,32], index: 1, kind: input, shape index: {}]
  %s2 = inlined_call_operand.vmem [shape: f32[17,32], index: 2, kind: input, shape index: {}]
  %s3 = inlined_call_operand.vmem [shape: bf16[4,3,32,8], index: 3, kind: input, shape index: {}]
  %s4 = inlined_call_operand.vmem [shape: bf16[4,8,32], index: 4, kind: input, shape index: {}]
  %s5 = inlined_call_operand.vmem [shape: f32[64,32], index: 5, kind: input, shape index: {}]
  %s6 = inlined_call_operand.vmem [shape: f32[1,64], index: 6, kind: input, shape index: {}]
  %s7 = inlined_call_operand.hbm [shape: f32[2,1,32], index: 7, kind: output, shape index: {0}]
  %s8 = inlined_call_operand.hbm [shape: f32[2,16,32], index: 8, kind: output, shape index: {1}]
  %s9 = inlined_call_operand.hbm [shape: f32[2,16,32], index: 9, kind: output, shape index: {2}]
  %s10 = inlined_call_operand.vmem [shape: s32[2,16,1], index: 10, kind: output, shape index: {3}]
  %s11 = inlined_call_operand.hbm [shape: f32[2,16,16], index: 11, kind: output, shape index: {4}]
  %s12 = inlined_call_operand.hbm [shape: f32[2,1,16], index: 12, kind: output, shape index: {5}]
  %13 = xla_tuple %s7, %s8, %s9, %s10, %s11, %s12
  %s14 = sld [smem:[#allocation0]]
  $region78: #{_lambda_.1} parent=0
    _
  %s16 = ssub.s32 1, %s14
  %s17 = scalar_select 0, %s16, %s14
  $region1: #{_lambda_.1} parent=0
    #allocation2 [shape = 'u8[1024]{0}', space=vmem, size = 0x400, scoped, tag = 'output window, operand 0, single buffered']
    #allocation3 [shape = 's32[1]{0}', space=sflag, size = 0x4, scoped, tag = 'scoped memory for _lambda_.1']
    #allocation4 [shape = 'u8[16384]{0}', space=vmem, size = 0x4000, scoped, tag = 'output window, operand 1, single buffered']
    #allocation5 [shape = 's32[1]{0}', space=sflag, size = 0x4, scoped, tag = 'scoped memory for _lambda_.1']
    #allocation6 [shape = 'u8[16384]{0}', space=vmem, size = 0x4000, scoped, tag = 'output window, operand 2, single buffered']
    #allocation7 [shape = 'u8[16384]{0}', space=vmem, size = 0x4000, scoped, tag = 'output window, operand 4, single buffered']
    #allocation8 [shape = 's32[1]{0}', space=sflag, size = 0x4, scoped, tag = 'scoped memory for _lambda_.1']
    #allocation9 [shape = 'u8[1024]{0}', space=vmem, size = 0x400, scoped, tag = 'output window, operand 5, single buffered']
    %18 = vsyncpa [#allocation3], 0
    %19 = vsyncpa [#allocation5], 0
    %20 = vsyncpa [#allocation8], 0
    // Predicated region
    $region2: #{_lambda_.1} parent=1 // pred_check
      _
    $region3: #{_lambda_.1} parent=1 // pred_check_branch
      %22 = sbr.rel (0) target = $region5
    $region4: #{_lambda_.1} parent=1 // pred_region
      _
    $region5: #{_lambda_.1} parent=1 // pred_fallthru
      _
    // Predicated region
    $region6: #{_lambda_.1} parent=1 // pred_check
      _
    $region7: #{_lambda_.1} parent=1 // pred_check_branch
      %24 = sbr.rel (0) target = $region9
    $region8: #{_lambda_.1} parent=1 // pred_region
      _
    $region9: #{_lambda_.1} parent=1 // pred_fallthru
      _
    // Predicated region
    $region10: #{_lambda_.1} parent=1 // pred_check
      _
    $region11: #{_lambda_.1} parent=1 // pred_check_branch
      %26 = sbr.rel (0) target = $region13
    $region12: #{_lambda_.1} parent=1 // pred_region
      _
    $region13: #{_lambda_.1} parent=1 // pred_fallthru
      _
    // Predicated region
    $region14: #{_lambda_.1} parent=1 // pred_check
      _
    $region15: #{_lambda_.1} parent=1 // pred_check_branch
      %28 = sbr.rel (0) target = $region17
    $region16: #{_lambda_.1} parent=1 // pred_region
      _
    $region17: #{_lambda_.1} parent=1 // pred_fallthru
      _
    // Predicated region
    $region18: #{_lambda_.1} parent=1 // pred_check
      _
    $region19: #{_lambda_.1} parent=1 // pred_check_branch
      %30 = sbr.rel (0) target = $region21
    $region20: #{_lambda_.1} parent=1 // pred_region
      _
    $region21: #{_lambda_.1} parent=1 // pred_fallthru
      _
    // Predicated region
    $region22: #{_lambda_.1} parent=1 // pred_check
      _
    $region23: #{_lambda_.1} parent=1 // pred_check_branch
      %32 = sbr.rel (0) target = $region25
    $region24: #{_lambda_.1} parent=1 // pred_region
      _
    $region25: #{_lambda_.1} parent=1 // pred_fallthru
      _
    // Predicated region
    $region26: #{_lambda_.1} parent=1 // pred_check
      _
    $region27: #{_lambda_.1} parent=1 // pred_check_branch
      %34 = sbr.rel (0) target = $region29
    $region28: #{_lambda_.1} parent=1 // pred_region
      _
    $region29: #{_lambda_.1} parent=1 // pred_fallthru
      _
    %v36 = vld [vmem:[%s1] sm:$0xf]
    %v37 = vld [vmem:[%s1 + $0x4] sm:$0xf]
    %v38 = vld [vmem:[%s1 + $0x8] sm:$0xf]
    %v39 = vld [vmem:[%s1 + $0xc] sm:$0xf]
    %v40 = vld [vmem:[%s1 + $0x10] sm:$0xf]
    %v41 = vld [vmem:[%s1 + $0x14] sm:$0xf]
    %v42 = vld [vmem:[%s1 + $0x18] sm:$0xf]
    %v43 = vld [vmem:[%s1 + $0x1c] sm:$0xf]
    %v44 = vld [vmem:[%s2] sm:$0xff]
    %v45 = vld [vmem:[%s2 + $0x8] sm:$0xff]
    %v46 = vld [vmem:[%s2 + $0x10] sm:$0x1]
    %v47 = vld [vmem:[%s3] sm:$0xf]
    %v48 = vld [vmem:[%s3 + $0x4] sm:$0xf]
    %v49 = vld [vmem:[%s3 + $0x8] sm:$0xf]
    %v50 = vld [vmem:[%s3 + $0xc] sm:$0xf]
    %s51 = scalar_lea.vmem %s3, 48
    %v52 = vld [vmem:[%s51] sm:$0xf]
    %v53 = vld [vmem:[%s51 + $0x4] sm:$0xf]
    %v54 = vld [vmem:[%s51 + $0x8] sm:$0xf]
    %v55 = vld [vmem:[%s51 + $0xc] sm:$0xf]
    %s56 = scalar_lea.vmem %s3, 96
    %v57 = vld [vmem:[%s56] sm:$0xf]
    %v58 = vld [vmem:[%s56 + $0x4] sm:$0xf]
    %v59 = vld [vmem:[%s56 + $0x8] sm:$0xf]
    %v60 = vld [vmem:[%s56 + $0xc] sm:$0xf]
    %s61 = scalar_lea.vmem %s3, 144
    %v62 = vld [vmem:[%s61] sm:$0xf]
    %v63 = vld [vmem:[%s61 + $0x4] sm:$0xf]
    %v64 = vld [vmem:[%s61 + $0x8] sm:$0xf]
    %v65 = vld [vmem:[%s61 + $0xc] sm:$0xf]
    %s66 = scalar_lea.vmem %s3, 16
    %v67 = vld [vmem:[%s66] sm:$0xf]
    %v68 = vld [vmem:[%s66 + $0x4] sm:$0xf]
    %v69 = vld [vmem:[%s66 + $0x8] sm:$0xf]
    %v70 = vld [vmem:[%s66 + $0xc] sm:$0xf]
    %s71 = scalar_lea.vmem %s3, 64
    %v72 = vld [vmem:[%s71] sm:$0xf]
    %v73 = vld [vmem:[%s71 + $0x4] sm:$0xf]
    %v74 = vld [vmem:[%s71 + $0x8] sm:$0xf]
    %v75 = vld [vmem:[%s71 + $0xc] sm:$0xf]
    %s76 = scalar_lea.vmem %s3, 112
    %v77 = vld [vmem:[%s76] sm:$0xf]
    %v78 = vld [vmem:[%s76 + $0x4] sm:$0xf]
    %v79 = vld [vmem:[%s76 + $0x8] sm:$0xf]
    %v80 = vld [vmem:[%s76 + $0xc] sm:$0xf]
    %s81 = scalar_lea.vmem %s3, 160
    %v82 = vld [vmem:[%s81] sm:$0xf]
    %v83 = vld [vmem:[%s81 + $0x4] sm:$0xf]
    %v84 = vld [vmem:[%s81 + $0x8] sm:$0xf]
    %v85 = vld [vmem:[%s81 + $0xc] sm:$0xf]
    %s86 = scalar_lea.vmem %s3, 32
    %v87 = vld [vmem:[%s86] sm:$0xf]
    %v88 = vld [vmem:[%s86 + $0x4] sm:$0xf]
    %v89 = vld [vmem:[%s86 + $0x8] sm:$0xf]
    %v90 = vld [vmem:[%s86 + $0xc] sm:$0xf]
    %s91 = scalar_lea.vmem %s3, 80
    %v92 = vld [vmem:[%s91] sm:$0xf]
    %v93 = vld [vmem:[%s91 + $0x4] sm:$0xf]
    %v94 = vld [vmem:[%s91 + $0x8] sm:$0xf]
    %v95 = vld [vmem:[%s91 + $0xc] sm:$0xf]
    %s96 = scalar_lea.vmem %s3, 128
    %v97 = vld [vmem:[%s96] sm:$0xf]
    %v98 = vld [vmem:[%s96 + $0x4] sm:$0xf]
    %v99 = vld [vmem:[%s96 + $0x8] sm:$0xf]
    %v100 = vld [vmem:[%s96 + $0xc] sm:$0xf]
    %s101 = scalar_lea.vmem %s3, 176
    %v102 = vld [vmem:[%s101] sm:$0xf]
    %v103 = vld [vmem:[%s101 + $0x4] sm:$0xf]
    %v104 = vld [vmem:[%s101 + $0x8] sm:$0xf]
    %v105 = vld [vmem:[%s101 + $0xc] sm:$0xf]
    %v106 = vld [vmem:[%s4] sm:$0xf]
    %s107 = scalar_lea.vmem %s4, 4
    %v108 = vld [vmem:[%s107] sm:$0xf]
    %s109 = scalar_lea.vmem %s4, 8
    %v110 = vld [vmem:[%s109] sm:$0xf]
    %s111 = scalar_lea.vmem %s4, 12
    %v112 = vld [vmem:[%s111] sm:$0xf]
    %v113 = vld [vmem:[%s5] sm:$0xff]
    %v114 = vld [vmem:[%s5 + $0x8] sm:$0xff]
    %v115 = vld [vmem:[%s5 + $0x10] sm:$0xff]
    %v116 = vld [vmem:[%s5 + $0x18] sm:$0xff]
    %v117 = vld [vmem:[%s5 + $0x20] sm:$0xff]
    %v118 = vld [vmem:[%s5 + $0x28] sm:$0xff]
    %v119 = vld [vmem:[%s5 + $0x30] sm:$0xff]
    %v120 = vld [vmem:[%s5 + $0x38] sm:$0xff]
    %v121 = vpack.c.bf16 %v114, %v113
    %v122 = vpack.c.bf16 %v116, %v115
    %v123 = vpack.c.bf16 %v118, %v117
    %v124 = vpack.c.bf16 %v120, %v119
    %v125 = vld [vmem:[%s6] sm:$0x1]
    %v126 = vlaneseq
    %v127 = vand.u32 %v126, 127
    %v128 = vld [vmem:[%s0] sm:$0xff]
    %v129 = vld [vmem:[%s0 + $0x8] sm:$0xff]
    %v130 = vpack.c.bf16 %v129, %v128
    %v139 = vunpack.c.l.b16 %v36
    %v140 = vunpack.c.l.b16 %v37
    %v141 = vunpack.c.l.b16 %v38
    %v142 = vunpack.c.l.b16 %v39
    %v143 = vunpack.c.l.b16 %v40
    %v144 = vunpack.c.l.b16 %v41
    %v145 = vunpack.c.l.b16 %v42
    %v146 = vunpack.c.l.b16 %v43
    %v147 = vpack.c.b16 %v140, %v139
    %v148 = vpack.c.b16 %v142, %v141
    %v149 = vpack.c.b16 %v144, %v143
    %v150 = vpack.c.b16 %v146, %v145
    %vm155 = vcmask 523264
    %v157 = vsel %vm155, %v130, 0
    %159 = vmatprep.subr.bf16.mxu0 0
    %160 = vmatpush1.bf16.msra.mxu0 %v147
    %161 = vmatprep.subr.bf16.mxu0 0
    %162 = vmatpush1.bf16.msra.mxu0 %v148
    %163 = vmatprep.subr.bf16.mxu0 0
    %164 = vmatpush1.bf16.msra.mxu0 %v149
    %165 = vmatprep.subr.bf16.mxu0 0
    %166 = vmatpush1.bf16.msra.mxu0 %v150
    %167 = vmatprep.subr.bf16.mxu0 0
    %168 = vmatpush1.bf16.msra.mxu0 0
    %169 = vmatprep.subr.bf16.mxu0 0
    %170 = vmatpush1.bf16.msra.mxu0 0
    %171 = vmatprep.subr.bf16.mxu0 0
    %172 = vmatpush1.bf16.msra.mxu0 0
    %173 = vmatprep.subr.bf16.mxu0 0
    %174 = vmatpush1.bf16.msra.mxu0 0
    %175 = vmatprep.subr.bf16.mxu0 0
    %176 = vmatpush1.bf16.msra.mxu0 0
    %177 = vmatprep.subr.bf16.mxu0 0
    %178 = vmatpush1.bf16.msra.mxu0 0
    %179 = vmatprep.subr.bf16.mxu0 0
    %180 = vmatpush1.bf16.msra.mxu0 0
    %181 = vmatprep.subr.bf16.mxu0 0
    %182 = vmatpush1.bf16.msra.mxu0 0
    %183 = vmatprep.subr.bf16.mxu0 0
    %184 = vmatpush1.bf16.msra.mxu0 0
    %185 = vmatprep.subr.bf16.mxu0 0
    %186 = vmatpush1.bf16.msra.mxu0 0
    %187 = vmatprep.subr.bf16.mxu0 0
    %188 = vmatpush1.bf16.msra.mxu0 0
    %189 = vmatprep.subr.bf16.mxu0 0
    %190 = vmatpush1.bf16.msra.mxu0 0
    %191 = vmatprep.mubr.bf16.mxu0 0
    %192 = vmatmul.mubr.bf16.gmra.mrb[0].mxu0 %v157
    %v193 = vpop.f32.mrb[0].mxu0
    %v194 = vadd.f32 %v44, %v193
    %v195 = vpop.f32.mrb[0].mxu0
    %v196 = vpop.f32.mrb[0].mxu0
    %v197 = vadd.f32 %v45, %v196
    %v198 = vpop.f32.mrb[0].mxu0
    %199 = vdwg.mxu0
    %v200 = vpack.c.bf16 %v197, %v194
    %v201 = vpack.c.bf16 %v46, %v46
    %v206 = vunpack.c.l.b16 %v47
    %v207 = vunpack.c.l.b16 %v48
    %v208 = vunpack.c.l.b16 %v49
    %v209 = vunpack.c.l.b16 %v50
    %v210 = vpack.c.b16 %v207, %v206
    %v211 = vpack.c.b16 %v209, %v208
    %vm214 = vcmask 261120
    %v216 = vsel %vm214, %v200, 0
    %v219 = vsel %vm214, %v201, 0
    %221 = vmatprep.subr.bf16.mxu0 0
    %222 = vmatpush1.bf16.msra.mxu0 %v210
    %223 = vmatprep.subr.bf16.mxu0 0
    %224 = vmatpush1.bf16.msra.mxu0 %v211
    %225 = vmatprep.subr.bf16.mxu0 0
    %226 = vmatpush1.bf16.msra.mxu0 0
    %227 = vmatprep.subr.bf16.mxu0 0
    %228 = vmatpush1.bf16.msra.mxu0 0
    %229 = vmatprep.subr.bf16.mxu0 0
    %230 = vmatpush1.bf16.msra.mxu0 0
    %231 = vmatprep.subr.bf16.mxu0 0
    %232 = vmatpush1.bf16.msra.mxu0 0
    %233 = vmatprep.subr.bf16.mxu0 0
    %234 = vmatpush1.bf16.msra.mxu0 0
    %235 = vmatprep.subr.bf16.mxu0 0
    %236 = vmatpush1.bf16.msra.mxu0 0
    %237 = vmatprep.subr.bf16.mxu0 0
    %238 = vmatpush1.bf16.msra.mxu0 0
    %239 = vmatprep.subr.bf16.mxu0 0
    %240 = vmatpush1.bf16.msra.mxu0 0
    %241 = vmatprep.subr.bf16.mxu0 0
    %242 = vmatpush1.bf16.msra.mxu0 0
    %243 = vmatprep.subr.bf16.mxu0 0
    %244 = vmatpush1.bf16.msra.mxu0 0
    %245 = vmatprep.subr.bf16.mxu0 0
    %246 = vmatpush1.bf16.msra.mxu0 0
    %247 = vmatprep.subr.bf16.mxu0 0
    %248 = vmatpush1.bf16.msra.mxu0 0
    %249 = vmatprep.subr.bf16.mxu0 0
    %250 = vmatpush1.bf16.msra.mxu0 0
    %251 = vmatprep.subr.bf16.mxu0 0
    %252 = vmatpush1.bf16.msra.mxu0 0
    %253 = vmatprep.mubr.bf16.mxu0 0
    %254 = vmatmul.mubr.bf16.gmra.mrb[0].mxu0 %v216
    %v255 = vpop.f32.mrb[0].mxu0
    %v256 = vadd.f32 0.0, %v255
    %v257 = vpop.f32.mrb[0].mxu0
    %v258 = vpop.f32.mrb[0].mxu0
    %v259 = vadd.f32 0.0, %v258
    %v260 = vpop.f32.mrb[0].mxu0
    %261 = vmatprep.mubr.bf16.mxu0 0
    %262 = vmatmul.mubr.bf16.gmra.mrb[0].mxu0 %v219
    %v263 = vpop.f32.mrb[0].mxu0
    %v264 = vadd.f32 0.0, %v263
    %v265 = vpop.f32.mrb[0].mxu0
    %v266 = vpop.f32.mrb[0].mxu0
    %v267 = vpop.f32.mrb[0].mxu0
    %268 = vdwg.mxu0
    %v273 = vunpack.c.l.b16 %v67
    %v274 = vunpack.c.l.b16 %v68
    %v275 = vunpack.c.l.b16 %v69
    %v276 = vunpack.c.l.b16 %v70
    %v277 = vpack.c.b16 %v274, %v273
    %v278 = vpack.c.b16 %v276, %v275
    %281 = vmatprep.subr.bf16.mxu0 0
    %282 = vmatpush1.bf16.msra.mxu0 %v277
    %283 = vmatprep.subr.bf16.mxu0 0
    %284 = vmatpush1.bf16.msra.mxu0 %v278
    %285 = vmatprep.subr.bf16.mxu0 0
    %286 = vmatpush1.bf16.msra.mxu0 0
    %287 = vmatprep.subr.bf16.mxu0 0
    %288 = vmatpush1.bf16.msra.mxu0 0
    %289 = vmatprep.subr.bf16.mxu0 0
    %290 = vmatpush1.bf16.msra.mxu0 0
    %291 = vmatprep.subr.bf16.mxu0 0
    %292 = vmatpush1.bf16.msra.mxu0 0
    %293 = vmatprep.subr.bf16.mxu0 0
    %294 = vmatpush1.bf16.msra.mxu0 0
    %295 = vmatprep.subr.bf16.mxu0 0
    %296 = vmatpush1.bf16.msra.mxu0 0
    %297 = vmatprep.subr.bf16.mxu0 0
    %298 = vmatpush1.bf16.msra.mxu0 0
    %299 = vmatprep.subr.bf16.mxu0 0
    %300 = vmatpush1.bf16.msra.mxu0 0
    %301 = vmatprep.subr.bf16.mxu0 0
    %302 = vmatpush1.bf16.msra.mxu0 0
    %303 = vmatprep.subr.bf16.mxu0 0
    %304 = vmatpush1.bf16.msra.mxu0 0
    %305 = vmatprep.subr.bf16.mxu0 0
    %306 = vmatpush1.bf16.msra.mxu0 0
    %307 = vmatprep.subr.bf16.mxu0 0
    %308 = vmatpush1.bf16.msra.mxu0 0
    %309 = vmatprep.subr.bf16.mxu0 0
    %310 = vmatpush1.bf16.msra.mxu0 0
    %311 = vmatprep.subr.bf16.mxu0 0
    %312 = vmatpush1.bf16.msra.mxu0 0
    %313 = vmatprep.mubr.bf16.mxu0 0
    %314 = vmatmul.mubr.bf16.gmra.mrb[0].mxu0 %v216
    %v315 = vpop.f32.mrb[0].mxu0
    %v316 = vadd.f32 0.0, %v315
    %v317 = vpop.f32.mrb[0].mxu0
    %v318 = vpop.f32.mrb[0].mxu0
    %v319 = vadd.f32 0.0, %v318
    %v320 = vpop.f32.mrb[0].mxu0
    %321 = vmatprep.mubr.bf16.mxu0 0
    %322 = vmatmul.mubr.bf16.gmra.mrb[0].mxu0 %v219
    %v323 = vpop.f32.mrb[0].mxu0
    %v324 = vadd.f32 0.0, %v323
    %v325 = vpop.f32.mrb[0].mxu0
    %v326 = vpop.f32.mrb[0].mxu0
    %v327 = vpop.f32.mrb[0].mxu0
    %328 = vdwg.mxu0
    %v333 = vunpack.c.l.b16 %v87
    %v334 = vunpack.c.l.b16 %v88
    %v335 = vunpack.c.l.b16 %v89
    %v336 = vunpack.c.l.b16 %v90
    %v337 = vpack.c.b16 %v334, %v333
    %v338 = vpack.c.b16 %v336, %v335
    %341 = vmatprep.subr.bf16.mxu0 0
    %342 = vmatpush1.bf16.msra.mxu0 %v337
    %343 = vmatprep.subr.bf16.mxu0 0
    %344 = vmatpush1.bf16.msra.mxu0 %v338
    %345 = vmatprep.subr.bf16.mxu0 0
    %346 = vmatpush1.bf16.msra.mxu0 0
    %347 = vmatprep.subr.bf16.mxu0 0
    %348 = vmatpush1.bf16.msra.mxu0 0
    %349 = vmatprep.subr.bf16.mxu0 0
    %350 = vmatpush1.bf16.msra.mxu0 0
    %351 = vmatprep.subr.bf16.mxu0 0
    %352 = vmatpush1.bf16.msra.mxu0 0
    %353 = vmatprep.subr.bf16.mxu0 0
    %354 = vmatpush1.bf16.msra.mxu0 0
    %355 = vmatprep.subr.bf16.mxu0 0
    %356 = vmatpush1.bf16.msra.mxu0 0
    %357 = vmatprep.subr.bf16.mxu0 0
    %358 = vmatpush1.bf16.msra.mxu0 0
    %359 = vmatprep.subr.bf16.mxu0 0
    %360 = vmatpush1.bf16.msra.mxu0 0
    %361 = vmatprep.subr.bf16.mxu0 0
    %362 = vmatpush1.bf16.msra.mxu0 0
    %363 = vmatprep.subr.bf16.mxu0 0
    %364 = vmatpush1.bf16.msra.mxu0 0
    %365 = vmatprep.subr.bf16.mxu0 0
    %366 = vmatpush1.bf16.msra.mxu0 0
    %367 = vmatprep.subr.bf16.mxu0 0
    %368 = vmatpush1.bf16.msra.mxu0 0
    %369 = vmatprep.subr.bf16.mxu0 0
    %370 = vmatpush1.bf16.msra.mxu0 0
    %371 = vmatprep.subr.bf16.mxu0 0
    %372 = vmatpush1.bf16.msra.mxu0 0
    %373 = vmatprep.mubr.bf16.mxu0 0
    %374 = vmatmul.mubr.bf16.gmra.mrb[0].mxu0 %v216
    %v375 = vpop.f32.mrb[0].mxu0
    %v376 = vadd.f32 0.0, %v375
    %v377 = vpop.f32.mrb[0].mxu0
    %v378 = vpop.f32.mrb[0].mxu0
    %v379 = vadd.f32 0.0, %v378
    %v380 = vpop.f32.mrb[0].mxu0
    %381 = vmatprep.mubr.bf16.mxu0 0
    %382 = vmatmul.mubr.bf16.gmra.mrb[0].mxu0 %v219
    %v383 = vpop.f32.mrb[0].mxu0
    %v384 = vadd.f32 0.0, %v383
    %v385 = vpop.f32.mrb[0].mxu0
    %v386 = vpop.f32.mrb[0].mxu0
    %v387 = vpop.f32.mrb[0].mxu0
    %388 = vdwg.mxu0
    %v389 = vpack.c.bf16 %v259, %v256
    %v390 = vpack.c.bf16 %v264, %v264
    %v391 = vpack.c.bf16 %v319, %v316
    %v392 = vpack.c.bf16 %v324, %v324
    %vm393 = vcmask 64512
    %v395 = vsel %vm393, %v389, 0
    %v398 = vsel %vm393, %v390, 0
    %v401 = vsel %vm393, %v391, 0
    %v404 = vsel %vm393, %v392, 0
    %406 = vmatprep.subr.bf16.mxu0 0
    %407 = vmatpush1.bf16.xpose.msra.mxu0 %v401
    %408 = vmatprep.subr.bf16.mxu0 0
    %409 = vmatpush1.bf16.xpose.msra.mxu0 %v404
    %410 = vmatprep.subr.bf16.mxu0 0
    %411 = vmatpush1.bf16.xpose.msra.mxu0 0
    %412 = vmatprep.subr.bf16.mxu0 0
    %413 = vmatpush1.bf16.xpose.msra.mxu0 0
    %414 = vmatprep.subr.bf16.mxu0 0
    %415 = vmatpush1.bf16.xpose.msra.mxu0 0
    %416 = vmatprep.subr.bf16.mxu0 0
    %417 = vmatpush1.bf16.xpose.msra.mxu0 0
    %418 = vmatprep.subr.bf16.mxu0 0
    %419 = vmatpush1.bf16.xpose.msra.mxu0 0
    %420 = vmatprep.subr.bf16.mxu0 0
    %421 = vmatpush1.bf16.xpose.msra.mxu0 0
    %422 = vmatprep.subr.bf16.mxu0 0
    %423 = vmatpush1.bf16.xpose.msra.mxu0 0
    %424 = vmatprep.subr.bf16.mxu0 0
    %425 = vmatpush1.bf16.xpose.msra.mxu0 0
    %426 = vmatprep.subr.bf16.mxu0 0
    %427 = vmatpush1.bf16.xpose.msra.mxu0 0
    %428 = vmatprep.subr.bf16.mxu0 0
    %429 = vmatpush1.bf16.xpose.msra.mxu0 0
    %430 = vmatprep.subr.bf16.mxu0 0
    %431 = vmatpush1.bf16.xpose.msra.mxu0 0
    %432 = vmatprep.subr.bf16.mxu0 0
    %433 = vmatpush1.bf16.xpose.msra.mxu0 0
    %434 = vmatprep.subr.bf16.mxu0 0
    %435 = vmatpush1.bf16.xpose.msra.mxu0 0
    %436 = vmatprep.subr.bf16.mxu0 0
    %437 = vmatpush1.bf16.xpose.msra.mxu0 0
    %438 = vmatprep.mubr.bf16.mxu0 0
    %439 = vmatmul.mubr.bf16.gmra.mrb[0].mxu0 %v395
    %v440 = vpop.f32.mrb[0].mxu0
    %v441 = vadd.f32 0.0, %v440
    %v442 = vpop.f32.mrb[0].mxu0
    %v443 = vpop.f32.mrb[0].mxu0
    %v444 = vadd.f32 0.0, %v443
    %v445 = vpop.f32.mrb[0].mxu0
    %446 = vmatprep.mubr.bf16.mxu0 0
    %447 = vmatmul.mubr.bf16.gmra.mrb[0].mxu0 %v398
    %v448 = vpop.f32.mrb[0].mxu0
    %v449 = vadd.f32 0.0, %v448
    %v450 = vpop.f32.mrb[0].mxu0
    %v451 = vpop.f32.mrb[0].mxu0
    %v452 = vpop.f32.mrb[0].mxu0
    %453 = vdwg.mxu0
    %vm454 = vcmask 138240
    %v455 = vsel %vm454, %v441, -inf
    %456 = vmax.xlane.f32.xlu0 %v455
    %v457 = vpop.xlane.xlu0 %456
    %v458 = vsel %vm454, %v444, -inf
    %459 = vmax.xlane.f32.xlu0 %v458
    %v460 = vpop.xlane.xlu0 %459
    %vm461 = vcmask 131072
    %v462 = vsel %vm461, %v449, -inf
    %463 = vmax.xlane.f32.xlu0 %v462
    %v464 = vpop.xlane.xlu0 %463
    %v465 = vsub.f32 %v441, %v457
    %v466 = vsub.f32 %v444, %v460
    %v467 = vsub.f32 %v449, %v464
    %v468 = vmul.f32 %v465, 1.442695
    %v469 = vpow.pop %v468
    %v470 = vmul.f32 %v466, 1.442695
    %v471 = vpow.pop %v470
    %v472 = vmul.f32 %v467, 1.442695
    %v473 = vpow.pop %v472
    %v474 = vsel %vm454, %v469, 0.0
    %475 = vadd.xlane.f32.xlu0 %v474
    %v476 = vpop.xlane.xlu0 %475
    %v477 = vsel %vm454, %v471, 0.0
    %478 = vadd.xlane.f32.xlu0 %v477
    %v479 = vpop.xlane.xlu0 %478
    %v480 = vsel %vm461, %v473, 0.0
    %481 = vadd.xlane.f32.xlu0 %v480
    %v482 = vpop.xlane.xlu0 %481
    %v483 = vrcp.pop %v476
    %v484 = vmul.f32 %v469, %v483
    %v485 = vrcp.pop %v479
    %v486 = vmul.f32 %v471, %v485
    %v487 = vrcp.pop %v482
    %v488 = vmul.f32 %v473, %v487
    %v489 = vadd.f32 %v484, 0.0
    %v490 = vadd.f32 %v486, 0.0
    %v491 = vadd.f32 %v488, 0.0
    %v492 = vpack.c.bf16 %v486, %v484
    %v493 = vpack.c.bf16 %v488, %v488
    %v494 = vpack.c.bf16 %v379, %v376
    %v495 = vpack.c.bf16 %v384, %v384
    %v497 = vsel %vm454, %v492, 0
    %v500 = vsel %vm454, %v493, 0
    %vm502 = vcmask 1040384
    %v503 = vsel 0, 4294967295, 65535
    %v504 = vsel %vm502, %v503, 0
    %v506 = vand.u32 %v495, %v504
    %508 = vmatprep.subr.bf16.mxu0 0
    %509 = vmatpush1.bf16.msra.mxu0 %v494
    %510 = vmatprep.subr.bf16.mxu0 0
    %511 = vmatpush1.bf16.msra.mxu0 %v506
    %512 = vmatprep.subr.bf16.mxu0 0
    %513 = vmatpush1.bf16.msra.mxu0 0
    %514 = vmatprep.subr.bf16.mxu0 0
    %515 = vmatpush1.bf16.msra.mxu0 0
    %516 = vmatprep.subr.bf16.mxu0 0
    %517 = vmatpush1.bf16.msra.mxu0 0
    %518 = vmatprep.subr.bf16.mxu0 0
    %519 = vmatpush1.bf16.msra.mxu0 0
    %520 = vmatprep.subr.bf16.mxu0 0
    %521 = vmatpush1.bf16.msra.mxu0 0
    %522 = vmatprep.subr.bf16.mxu0 0
    %523 = vmatpush1.bf16.msra.mxu0 0
    %524 = vmatprep.subr.bf16.mxu0 0
    %525 = vmatpush1.bf16.msra.mxu0 0
    %526 = vmatprep.subr.bf16.mxu0 0
    %527 = vmatpush1.bf16.msra.mxu0 0
    %528 = vmatprep.subr.bf16.mxu0 0
    %529 = vmatpush1.bf16.msra.mxu0 0
    %530 = vmatprep.subr.bf16.mxu0 0
    %531 = vmatpush1.bf16.msra.mxu0 0
    %532 = vmatprep.subr.bf16.mxu0 0
    %533 = vmatpush1.bf16.msra.mxu0 0
    %534 = vmatprep.subr.bf16.mxu0 0
    %535 = vmatpush1.bf16.msra.mxu0 0
    %536 = vmatprep.subr.bf16.mxu0 0
    %537 = vmatpush1.bf16.msra.mxu0 0
    %538 = vmatprep.subr.bf16.mxu0 0
    %539 = vmatpush1.bf16.msra.mxu0 0
    %540 = vmatprep.mubr.bf16.mxu0 0
    %541 = vmatmul.mubr.bf16.gmra.mrb[0].mxu0 %v497
    %v542 = vpop.f32.mrb[0].mxu0
    %v543 = vadd.f32 0.0, %v542
    %v544 = vpop.f32.mrb[0].mxu0
    %v545 = vpop.f32.mrb[0].mxu0
    %v546 = vadd.f32 0.0, %v545
    %v547 = vpop.f32.mrb[0].mxu0
    %548 = vmatprep.mubr.bf16.mxu0 0
    %549 = vmatmul.mubr.bf16.gmra.mrb[0].mxu0 %v500
    %v550 = vpop.f32.mrb[0].mxu0
    %v551 = vadd.f32 0.0, %v550
    %v552 = vpop.f32.mrb[0].mxu0
    %v553 = vpop.f32.mrb[0].mxu0
    %v554 = vpop.f32.mrb[0].mxu0
    %555 = vdwg.mxu0
    %v556 = vpack.c.bf16 %v546, %v543
    %v557 = vpack.c.bf16 %v551, %v551
    %v562 = vunpack.c.l.b16 %v52
    %v563 = vunpack.c.l.b16 %v53
    %v564 = vunpack.c.l.b16 %v54
    %v565 = vunpack.c.l.b16 %v55
    %v566 = vpack.c.b16 %v563, %v562
    %v567 = vpack.c.b16 %v565, %v564
    %570 = vmatprep.subr.bf16.mxu0 0
    %571 = vmatpush1.bf16.msra.mxu0 %v566
    %572 = vmatprep.subr.bf16.mxu0 0
    %573 = vmatpush1.bf16.msra.mxu0 %v567
    %574 = vmatprep.subr.bf16.mxu0 0
    %575 = vmatpush1.bf16.msra.mxu0 0
    %576 = vmatprep.subr.bf16.mxu0 0
    %577 = vmatpush1.bf16.msra.mxu0 0
    %578 = vmatprep.subr.bf16.mxu0 0
    %579 = vmatpush1.bf16.msra.mxu0 0
    %580 = vmatprep.subr.bf16.mxu0 0
    %581 = vmatpush1.bf16.msra.mxu0 0
    %582 = vmatprep.subr.bf16.mxu0 0
    %583 = vmatpush1.bf16.msra.mxu0 0
    %584 = vmatprep.subr.bf16.mxu0 0
    %585 = vmatpush1.bf16.msra.mxu0 0
    %586 = vmatprep.subr.bf16.mxu0 0
    %587 = vmatpush1.bf16.msra.mxu0 0
    %588 = vmatprep.subr.bf16.mxu0 0
    %589 = vmatpush1.bf16.msra.mxu0 0
    %590 = vmatprep.subr.bf16.mxu0 0
    %591 = vmatpush1.bf16.msra.mxu0 0
    %592 = vmatprep.subr.bf16.mxu0 0
    %593 = vmatpush1.bf16.msra.mxu0 0
    %594 = vmatprep.subr.bf16.mxu0 0
    %595 = vmatpush1.bf16.msra.mxu0 0
    %596 = vmatprep.subr.bf16.mxu0 0
    %597 = vmatpush1.bf16.msra.mxu0 0
    %598 = vmatprep.subr.bf16.mxu0 0
    %599 = vmatpush1.bf16.msra.mxu0 0
    %600 = vmatprep.subr.bf16.mxu0 0
    %601 = vmatpush1.bf16.msra.mxu0 0
    %602 = vmatprep.mubr.bf16.mxu0 0
    %603 = vmatmul.mubr.bf16.gmra.mrb[0].mxu0 %v216
    %v604 = vpop.f32.mrb[0].mxu0
    %v605 = vadd.f32 0.0, %v604
    %v606 = vpop.f32.mrb[0].mxu0
    %v607 = vpop.f32.mrb[0].mxu0
    %v608 = vadd.f32 0.0, %v607
    %v609 = vpop.f32.mrb[0].mxu0
    %610 = vmatprep.mubr.bf16.mxu0 0
    %611 = vmatmul.mubr.bf16.gmra.mrb[0].mxu0 %v219
    %v612 = vpop.f32.mrb[0].mxu0
    %v613 = vadd.f32 0.0, %v612
    %v614 = vpop.f32.mrb[0].mxu0
    %v615 = vpop.f32.mrb[0].mxu0
    %v616 = vpop.f32.mrb[0].mxu0
    %617 = vdwg.mxu0
    %v622 = vunpack.c.l.b16 %v72
    %v623 = vunpack.c.l.b16 %v73
    %v624 = vunpack.c.l.b16 %v74
    %v625 = vunpack.c.l.b16 %v75
    %v626 = vpack.c.b16 %v623, %v622
    %v627 = vpack.c.b16 %v625, %v624
    %630 = vmatprep.subr.bf16.mxu0 0
    %631 = vmatpush1.bf16.msra.mxu0 %v626
    %632 = vmatprep.subr.bf16.mxu0 0
    %633 = vmatpush1.bf16.msra.mxu0 %v627
    %634 = vmatprep.subr.bf16.mxu0 0
    %635 = vmatpush1.bf16.msra.mxu0 0
    %636 = vmatprep.subr.bf16.mxu0 0
    %637 = vmatpush1.bf16.msra.mxu0 0
    %638 = vmatprep.subr.bf16.mxu0 0
    %639 = vmatpush1.bf16.msra.mxu0 0
    %640 = vmatprep.subr.bf16.mxu0 0
    %641 = vmatpush1.bf16.msra.mxu0 0
    %642 = vmatprep.subr.bf16.mxu0 0
    %643 = vmatpush1.bf16.msra.mxu0 0
    %644 = vmatprep.subr.bf16.mxu0 0
    %645 = vmatpush1.bf16.msra.mxu0 0
    %646 = vmatprep.subr.bf16.mxu0 0
    %647 = vmatpush1.bf16.msra.mxu0 0
    %648 = vmatprep.subr.bf16.mxu0 0
    %649 = vmatpush1.bf16.msra.mxu0 0
    %650 = vmatprep.subr.bf16.mxu0 0
    %651 = vmatpush1.bf16.msra.mxu0 0
    %652 = vmatprep.subr.bf16.mxu0 0
    %653 = vmatpush1.bf16.msra.mxu0 0
    %654 = vmatprep.subr.bf16.mxu0 0
    %655 = vmatpush1.bf16.msra.mxu0 0
    %656 = vmatprep.subr.bf16.mxu0 0
    %657 = vmatpush1.bf16.msra.mxu0 0
    %658 = vmatprep.subr.bf16.mxu0 0
    %659 = vmatpush1.bf16.msra.mxu0 0
    %660 = vmatprep.subr.bf16.mxu0 0
    %661 = vmatpush1.bf16.msra.mxu0 0
    %662 = vmatprep.mubr.bf16.mxu0 0
    %663 = vmatmul.mubr.bf16.gmra.mrb[0].mxu0 %v216
    %v664 = vpop.f32.mrb[0].mxu0
    %v665 = vadd.f32 0.0, %v664
    %v666 = vpop.f32.mrb[0].mxu0
    %v667 = vpop.f32.mrb[0].mxu0
    %v668 = vadd.f32 0.0, %v667
    %v669 = vpop.f32.mrb[0].mxu0
    %670 = vmatprep.mubr.bf16.mxu0 0
    %671 = vmatmul.mubr.bf16.gmra.mrb[0].mxu0 %v219
    %v672 = vpop.f32.mrb[0].mxu0
    %v673 = vadd.f32 0.0, %v672
    %v674 = vpop.f32.mrb[0].mxu0
    %v675 = vpop.f32.mrb[0].mxu0
    %v676 = vpop.f32.mrb[0].mxu0
    %677 = vdwg.mxu0
    %v682 = vunpack.c.l.b16 %v92
    %v683 = vunpack.c.l.b16 %v93
    %v684 = vunpack.c.l.b16 %v94
    %v685 = vunpack.c.l.b16 %v95
    %v686 = vpack.c.b16 %v683, %v682
    %v687 = vpack.c.b16 %v685, %v684
    %690 = vmatprep.subr.bf16.mxu0 0
    %691 = vmatpush1.bf16.msra.mxu0 %v686
    %692 = vmatprep.subr.bf16.mxu0 0
    %693 = vmatpush1.bf16.msra.mxu0 %v687
    %694 = vmatprep.subr.bf16.mxu0 0
    %695 = vmatpush1.bf16.msra.mxu0 0
    %696 = vmatprep.subr.bf16.mxu0 0
    %697 = vmatpush1.bf16.msra.mxu0 0
    %698 = vmatprep.subr.bf16.mxu0 0
    %699 = vmatpush1.bf16.msra.mxu0 0
    %700 = vmatprep.subr.bf16.mxu0 0
    %701 = vmatpush1.bf16.msra.mxu0 0
    %702 = vmatprep.subr.bf16.mxu0 0
    %703 = vmatpush1.bf16.msra.mxu0 0
    %704 = vmatprep.subr.bf16.mxu0 0
    %705 = vmatpush1.bf16.msra.mxu0 0
    %706 = vmatprep.subr.bf16.mxu0 0
    %707 = vmatpush1.bf16.msra.mxu0 0
    %708 = vmatprep.subr.bf16.mxu0 0
    %709 = vmatpush1.bf16.msra.mxu0 0
    %710 = vmatprep.subr.bf16.mxu0 0
    %711 = vmatpush1.bf16.msra.mxu0 0
    %712 = vmatprep.subr.bf16.mxu0 0
    %713 = vmatpush1.bf16.msra.mxu0 0
    %714 = vmatprep.subr.bf16.mxu0 0
    %715 = vmatpush1.bf16.msra.mxu0 0
    %716 = vmatprep.subr.bf16.mxu0 0
    %717 = vmatpush1.bf16.msra.mxu0 0
    %718 = vmatprep.subr.bf16.mxu0 0
    %719 = vmatpush1.bf16.msra.mxu0 0
    %720 = vmatprep.subr.bf16.mxu0 0
    %721 = vmatpush1.bf16.msra.mxu0 0
    %722 = vmatprep.mubr.bf16.mxu0 0
    %723 = vmatmul.mubr.bf16.gmra.mrb[0].mxu0 %v216
    %v724 = vpop.f32.mrb[0].mxu0
    %v725 = vadd.f32 0.0, %v724
    %v726 = vpop.f32.mrb[0].mxu0
    %v727 = vpop.f32.mrb[0].mxu0
    %v728 = vadd.f32 0.0, %v727
    %v729 = vpop.f32.mrb[0].mxu0
    %730 = vmatprep.mubr.bf16.mxu0 0
    %731 = vmatmul.mubr.bf16.gmra.mrb[0].mxu0 %v219
    %v732 = vpop.f32.mrb[0].mxu0
    %v733 = vadd.f32 0.0, %v732
    %v734 = vpop.f32.mrb[0].mxu0
    %v735 = vpop.f32.mrb[0].mxu0
    %v736 = vpop.f32.mrb[0].mxu0
    %737 = vdwg.mxu0
    %v738 = vpack.c.bf16 %v608, %v605
    %v739 = vpack.c.bf16 %v613, %v613
    %v740 = vpack.c.bf16 %v668, %v665
    %v741 = vpack.c.bf16 %v673, %v673
    %v743 = vsel %vm393, %v738, 0
    %v746 = vsel %vm393, %v739, 0
    %v749 = vsel %vm393, %v740, 0
    %v752 = vsel %vm393, %v741, 0
    %754 = vmatprep.subr.bf16.mxu0 0
    %755 = vmatpush1.bf16.xpose.msra.mxu0 %v749
    %756 = vmatprep.subr.bf16.mxu0 0
    %757 = vmatpush1.bf16.xpose.msra.mxu0 %v752
    %758 = vmatprep.subr.bf16.mxu0 0
    %759 = vmatpush1.bf16.xpose.msra.mxu0 0
    %760 = vmatprep.subr.bf16.mxu0 0
    %761 = vmatpush1.bf16.xpose.msra.mxu0 0
    %762 = vmatprep.subr.bf16.mxu0 0
    %763 = vmatpush1.bf16.xpose.msra.mxu0 0
    %764 = vmatprep.subr.bf16.mxu0 0
    %765 = vmatpush1.bf16.xpose.msra.mxu0 0
    %766 = vmatprep.subr.bf16.mxu0 0
    %767 = vmatpush1.bf16.xpose.msra.mxu0 0
    %768 = vmatprep.subr.bf16.mxu0 0
    %769 = vmatpush1.bf16.xpose.msra.mxu0 0
    %770 = vmatprep.subr.bf16.mxu0 0
    %771 = vmatpush1.bf16.xpose.msra.mxu0 0
    %772 = vmatprep.subr.bf16.mxu0 0
    %773 = vmatpush1.bf16.xpose.msra.mxu0 0
    %774 = vmatprep.subr.bf16.mxu0 0
    %775 = vmatpush1.bf16.xpose.msra.mxu0 0
    %776 = vmatprep.subr.bf16.mxu0 0
    %777 = vmatpush1.bf16.xpose.msra.mxu0 0
    %778 = vmatprep.subr.bf16.mxu0 0
    %779 = vmatpush1.bf16.xpose.msra.mxu0 0
    %780 = vmatprep.subr.bf16.mxu0 0
    %781 = vmatpush1.bf16.xpose.msra.mxu0 0
    %782 = vmatprep.subr.bf16.mxu0 0
    %783 = vmatpush1.bf16.xpose.msra.mxu0 0
    %784 = vmatprep.subr.bf16.mxu0 0
    %785 = vmatpush1.bf16.xpose.msra.mxu0 0
    %786 = vmatprep.mubr.bf16.mxu0 0
    %787 = vmatmul.mubr.bf16.gmra.mrb[0].mxu0 %v743
    %v788 = vpop.f32.mrb[0].mxu0
    %v789 = vadd.f32 0.0, %v788
    %v790 = vpop.f32.mrb[0].mxu0
    %v791 = vpop.f32.mrb[0].mxu0
    %v792 = vadd.f32 0.0, %v791
    %v793 = vpop.f32.mrb[0].mxu0
    %794 = vmatprep.mubr.bf16.mxu0 0
    %795 = vmatmul.mubr.bf16.gmra.mrb[0].mxu0 %v746
    %v796 = vpop.f32.mrb[0].mxu0
    %v797 = vadd.f32 0.0, %v796
    %v798 = vpop.f32.mrb[0].mxu0
    %v799 = vpop.f32.mrb[0].mxu0
    %v800 = vpop.f32.mrb[0].mxu0
    %801 = vdwg.mxu0
    %v802 = vsel %vm454, %v789, -inf
    %803 = vmax.xlane.f32.xlu0 %v802
    %v804 = vpop.xlane.xlu0 %803
    %v805 = vsel %vm454, %v792, -inf
    %806 = vmax.xlane.f32.xlu0 %v805
    %v807 = vpop.xlane.xlu0 %806
    %v808 = vsel %vm461, %v797, -inf
    %809 = vmax.xlane.f32.xlu0 %v808
    %v810 = vpop.xlane.xlu0 %809
    %v811 = vsub.f32 %v789, %v804
    %v812 = vsub.f32 %v792, %v807
    %v813 = vsub.f32 %v797, %v810
    %v814 = vmul.f32 %v811, 1.442695
    %v815 = vpow.pop %v814
    %v816 = vmul.f32 %v812, 1.442695
    %v817 = vpow.pop %v816
    %v818 = vmul.f32 %v813, 1.442695
    %v819 = vpow.pop %v818
    %v820 = vsel %vm454, %v815, 0.0
    %821 = vadd.xlane.f32.xlu0 %v820
    %v822 = vpop.xlane.xlu0 %821
    %v823 = vsel %vm454, %v817, 0.0
    %824 = vadd.xlane.f32.xlu0 %v823
    %v825 = vpop.xlane.xlu0 %824
    %v826 = vsel %vm461, %v819, 0.0
    %827 = vadd.xlane.f32.xlu0 %v826
    %v828 = vpop.xlane.xlu0 %827
    %v829 = vrcp.pop %v822
    %v830 = vmul.f32 %v815, %v829
    %v831 = vrcp.pop %v825
    %v832 = vmul.f32 %v817, %v831
    %v833 = vrcp.pop %v828
    %v834 = vmul.f32 %v819, %v833
    %v835 = vadd.f32 %v489, %v830
    %v836 = vadd.f32 %v490, %v832
    %v837 = vadd.f32 %v491, %v834
    %v838 = vpack.c.bf16 %v832, %v830
    %v839 = vpack.c.bf16 %v834, %v834
    %v840 = vpack.c.bf16 %v728, %v725
    %v841 = vpack.c.bf16 %v733, %v733
    %v843 = vsel %vm454, %v838, 0
    %v846 = vsel %vm454, %v839, 0
    %v849 = vand.u32 %v841, %v504
    %851 = vmatprep.subr.bf16.mxu0 0
    %852 = vmatpush1.bf16.msra.mxu0 %v840
    %853 = vmatprep.subr.bf16.mxu0 0
    %854 = vmatpush1.bf16.msra.mxu0 %v849
    %855 = vmatprep.subr.bf16.mxu0 0
    %856 = vmatpush1.bf16.msra.mxu0 0
    %857 = vmatprep.subr.bf16.mxu0 0
    %858 = vmatpush1.bf16.msra.mxu0 0
    %859 = vmatprep.subr.bf16.mxu0 0
    %860 = vmatpush1.bf16.msra.mxu0 0
    %861 = vmatprep.subr.bf16.mxu0 0
    %862 = vmatpush1.bf16.msra.mxu0 0
    %863 = vmatprep.subr.bf16.mxu0 0
    %864 = vmatpush1.bf16.msra.mxu0 0
    %865 = vmatprep.subr.bf16.mxu0 0
    %866 = vmatpush1.bf16.msra.mxu0 0
    %867 = vmatprep.subr.bf16.mxu0 0
    %868 = vmatpush1.bf16.msra.mxu0 0
    %869 = vmatprep.subr.bf16.mxu0 0
    %870 = vmatpush1.bf16.msra.mxu0 0
    %871 = vmatprep.subr.bf16.mxu0 0
    %872 = vmatpush1.bf16.msra.mxu0 0
    %873 = vmatprep.subr.bf16.mxu0 0
    %874 = vmatpush1.bf16.msra.mxu0 0
    %875 = vmatprep.subr.bf16.mxu0 0
    %876 = vmatpush1.bf16.msra.mxu0 0
    %877 = vmatprep.subr.bf16.mxu0 0
    %878 = vmatpush1.bf16.msra.mxu0 0
    %879 = vmatprep.subr.bf16.mxu0 0
    %880 = vmatpush1.bf16.msra.mxu0 0
    %881 = vmatprep.subr.bf16.mxu0 0
    %882 = vmatpush1.bf16.msra.mxu0 0
    %883 = vmatprep.mubr.bf16.mxu0 0
    %884 = vmatmul.mubr.bf16.gmra.mrb[0].mxu0 %v843
    %v885 = vpop.f32.mrb[0].mxu0
    %v886 = vadd.f32 0.0, %v885
    %v887 = vpop.f32.mrb[0].mxu0
    %v888 = vpop.f32.mrb[0].mxu0
    %v889 = vadd.f32 0.0, %v888
    %v890 = vpop.f32.mrb[0].mxu0
    %891 = vmatprep.mubr.bf16.mxu0 0
    %892 = vmatmul.mubr.bf16.gmra.mrb[0].mxu0 %v846
    %v893 = vpop.f32.mrb[0].mxu0
    %v894 = vadd.f32 0.0, %v893
    %v895 = vpop.f32.mrb[0].mxu0
    %v896 = vpop.f32.mrb[0].mxu0
    %v897 = vpop.f32.mrb[0].mxu0
    %898 = vdwg.mxu0
    %v899 = vpack.c.bf16 %v889, %v886
    %v900 = vpack.c.bf16 %v894, %v894
    %v902 = vsel %vm393, %v899, 0
    %v905 = vsel %vm393, %v900, 0
    %vm907 = vcmask 1043456
    %v909 = vsel %vm907, %v108, 0
    %911 = vmatprep.subr.bf16.mxu0 0
    %912 = vmatpush1.bf16.msra.mxu0 %v909
    %913 = vmatprep.subr.bf16.mxu0 0
    %914 = vmatpush1.bf16.msra.mxu0 0
    %915 = vmatprep.subr.bf16.mxu0 0
    %916 = vmatpush1.bf16.msra.mxu0 0
    %917 = vmatprep.subr.bf16.mxu0 0
    %918 = vmatpush1.bf16.msra.mxu0 0
    %919 = vmatprep.subr.bf16.mxu0 0
    %920 = vmatpush1.bf16.msra.mxu0 0
    %921 = vmatprep.subr.bf16.mxu0 0
    %922 = vmatpush1.bf16.msra.mxu0 0
    %923 = vmatprep.subr.bf16.mxu0 0
    %924 = vmatpush1.bf16.msra.mxu0 0
    %925 = vmatprep.subr.bf16.mxu0 0
    %926 = vmatpush1.bf16.msra.mxu0 0
    %927 = vmatprep.subr.bf16.mxu0 0
    %928 = vmatpush1.bf16.msra.mxu0 0
    %929 = vmatprep.subr.bf16.mxu0 0
    %930 = vmatpush1.bf16.msra.mxu0 0
    %931 = vmatprep.subr.bf16.mxu0 0
    %932 = vmatpush1.bf16.msra.mxu0 0
    %933 = vmatprep.subr.bf16.mxu0 0
    %934 = vmatpush1.bf16.msra.mxu0 0
    %935 = vmatprep.subr.bf16.mxu0 0
    %936 = vmatpush1.bf16.msra.mxu0 0
    %937 = vmatprep.subr.bf16.mxu0 0
    %938 = vmatpush1.bf16.msra.mxu0 0
    %939 = vmatprep.subr.bf16.mxu0 0
    %940 = vmatpush1.bf16.msra.mxu0 0
    %941 = vmatprep.subr.bf16.mxu0 0
    %942 = vmatpush1.bf16.msra.mxu0 0
    %943 = vmatprep.mubr.bf16.mxu0 0
    %944 = vmatmul.mubr.bf16.gmra.mrb[0].mxu0 %v902
    %v945 = vpop.f32.mrb[0].mxu0
    %v946 = vadd.f32 0.0, %v945
    %v947 = vpop.f32.mrb[0].mxu0
    %v948 = vpop.f32.mrb[0].mxu0
    %v949 = vadd.f32 0.0, %v948
    %v950 = vpop.f32.mrb[0].mxu0
    %951 = vmatprep.mubr.bf16.mxu0 0
    %952 = vmatmul.mubr.bf16.gmra.mrb[0].mxu0 %v905
    %v953 = vpop.f32.mrb[0].mxu0
    %v954 = vadd.f32 0.0, %v953
    %v955 = vpop.f32.mrb[0].mxu0
    %v956 = vpop.f32.mrb[0].mxu0
    %v957 = vpop.f32.mrb[0].mxu0
    %958 = vdwg.mxu0
    %v960 = vsel %vm393, %v556, 0
    %v963 = vsel %vm393, %v557, 0
    %v966 = vsel %vm907, %v106, 0
    %968 = vmatprep.subr.bf16.mxu0 0
    %969 = vmatpush1.bf16.msra.mxu0 %v966
    %970 = vmatprep.subr.bf16.mxu0 0
    %971 = vmatpush1.bf16.msra.mxu0 0
    %972 = vmatprep.subr.bf16.mxu0 0
    %973 = vmatpush1.bf16.msra.mxu0 0
    %974 = vmatprep.subr.bf16.mxu0 0
    %975 = vmatpush1.bf16.msra.mxu0 0
    %976 = vmatprep.subr.bf16.mxu0 0
    %977 = vmatpush1.bf16.msra.mxu0 0
    %978 = vmatprep.subr.bf16.mxu0 0
    %979 = vmatpush1.bf16.msra.mxu0 0
    %980 = vmatprep.subr.bf16.mxu0 0
    %981 = vmatpush1.bf16.msra.mxu0 0
    %982 = vmatprep.subr.bf16.mxu0 0
    %983 = vmatpush1.bf16.msra.mxu0 0
    %984 = vmatprep.subr.bf16.mxu0 0
    %985 = vmatpush1.bf16.msra.mxu0 0
    %986 = vmatprep.subr.bf16.mxu0 0
    %987 = vmatpush1.bf16.msra.mxu0 0
    %988 = vmatprep.subr.bf16.mxu0 0
    %989 = vmatpush1.bf16.msra.mxu0 0
    %990 = vmatprep.subr.bf16.mxu0 0
    %991 = vmatpush1.bf16.msra.mxu0 0
    %992 = vmatprep.subr.bf16.mxu0 0
    %993 = vmatpush1.bf16.msra.mxu0 0
    %994 = vmatprep.subr.bf16.mxu0 0
    %995 = vmatpush1.bf16.msra.mxu0 0
    %996 = vmatprep.subr.bf16.mxu0 0
    %997 = vmatpush1.bf16.msra.mxu0 0
    %998 = vmatprep.subr.bf16.mxu0 0
    %999 = vmatpush1.bf16.msra.mxu0 0
    %1000 = vmatprep.mubr.bf16.mxu0 0
    %1001 = vmatmul.mubr.bf16.gmra.mrb[0].mxu0 %v960
    %v1002 = vpop.f32.mrb[0].mxu0
    %v1003 = vadd.f32 %v946, %v1002
    %v1004 = vpop.f32.mrb[0].mxu0
    %v1005 = vpop.f32.mrb[0].mxu0
    %v1006 = vadd.f32 %v949, %v1005
    %v1007 = vpop.f32.mrb[0].mxu0
    %1008 = vmatprep.mubr.bf16.mxu0 0
    %1009 = vmatmul.mubr.bf16.gmra.mrb[0].mxu0 %v963
    %v1010 = vpop.f32.mrb[0].mxu0
    %v1011 = vadd.f32 %v954, %v1010
    %v1012 = vpop.f32.mrb[0].mxu0
    %v1013 = vpop.f32.mrb[0].mxu0
    %v1014 = vpop.f32.mrb[0].mxu0
    %1015 = vdwg.mxu0
    %v1020 = vunpack.c.l.b16 %v57
    %v1021 = vunpack.c.l.b16 %v58
    %v1022 = vunpack.c.l.b16 %v59
    %v1023 = vunpack.c.l.b16 %v60
    %v1024 = vpack.c.b16 %v1021, %v1020
    %v1025 = vpack.c.b16 %v1023, %v1022
    %1028 = vmatprep.subr.bf16.mxu0 0
    %1029 = vmatpush1.bf16.msra.mxu0 %v1024
    %1030 = vmatprep.subr.bf16.mxu0 0
    %1031 = vmatpush1.bf16.msra.mxu0 %v1025
    %1032 = vmatprep.subr.bf16.mxu0 0
    %1033 = vmatpush1.bf16.msra.mxu0 0
    %1034 = vmatprep.subr.bf16.mxu0 0
    %1035 = vmatpush1.bf16.msra.mxu0 0
    %1036 = vmatprep.subr.bf16.mxu0 0
    %1037 = vmatpush1.bf16.msra.mxu0 0
    %1038 = vmatprep.subr.bf16.mxu0 0
    %1039 = vmatpush1.bf16.msra.mxu0 0
    %1040 = vmatprep.subr.bf16.mxu0 0
    %1041 = vmatpush1.bf16.msra.mxu0 0
    %1042 = vmatprep.subr.bf16.mxu0 0
    %1043 = vmatpush1.bf16.msra.mxu0 0
    %1044 = vmatprep.subr.bf16.mxu0 0
    %1045 = vmatpush1.bf16.msra.mxu0 0
    %1046 = vmatprep.subr.bf16.mxu0 0
    %1047 = vmatpush1.bf16.msra.mxu0 0
    %1048 = vmatprep.subr.bf16.mxu0 0
    %1049 = vmatpush1.bf16.msra.mxu0 0
    %1050 = vmatprep.subr.bf16.mxu0 0
    %1051 = vmatpush1.bf16.msra.mxu0 0
    %1052 = vmatprep.subr.bf16.mxu0 0
    %1053 = vmatpush1.bf16.msra.mxu0 0
    %1054 = vmatprep.subr.bf16.mxu0 0
    %1055 = vmatpush1.bf16.msra.mxu0 0
    %1056 = vmatprep.subr.bf16.mxu0 0
    %1057 = vmatpush1.bf16.msra.mxu0 0
    %1058 = vmatprep.subr.bf16.mxu0 0
    %1059 = vmatpush1.bf16.msra.mxu0 0
    %1060 = vmatprep.mubr.bf16.mxu0 0
    %1061 = vmatmul.mubr.bf16.gmra.mrb[0].mxu0 %v216
    %v1062 = vpop.f32.mrb[0].mxu0
    %v1063 = vadd.f32 0.0, %v1062
    %v1064 = vpop.f32.mrb[0].mxu0
    %v1065 = vpop.f32.mrb[0].mxu0
    %v1066 = vadd.f32 0.0, %v1065
    %v1067 = vpop.f32.mrb[0].mxu0
    %1068 = vmatprep.mubr.bf16.mxu0 0
    %1069 = vmatmul.mubr.bf16.gmra.mrb[0].mxu0 %v219
    %v1070 = vpop.f32.mrb[0].mxu0
    %v1071 = vadd.f32 0.0, %v1070
    %v1072 = vpop.f32.mrb[0].mxu0
    %v1073 = vpop.f32.mrb[0].mxu0
    %v1074 = vpop.f32.mrb[0].mxu0
    %1075 = vdwg.mxu0
    %v1080 = vunpack.c.l.b16 %v77
    %v1081 = vunpack.c.l.b16 %v78
    %v1082 = vunpack.c.l.b16 %v79
    %v1083 = vunpack.c.l.b16 %v80
    %v1084 = vpack.c.b16 %v1081, %v1080
    %v1085 = vpack.c.b16 %v1083, %v1082
    %1088 = vmatprep.subr.bf16.mxu0 0
    %1089 = vmatpush1.bf16.msra.mxu0 %v1084
    %1090 = vmatprep.subr.bf16.mxu0 0
    %1091 = vmatpush1.bf16.msra.mxu0 %v1085
    %1092 = vmatprep.subr.bf16.mxu0 0
    %1093 = vmatpush1.bf16.msra.mxu0 0
    %1094 = vmatprep.subr.bf16.mxu0 0
    %1095 = vmatpush1.bf16.msra.mxu0 0
    %1096 = vmatprep.subr.bf16.mxu0 0
    %1097 = vmatpush1.bf16.msra.mxu0 0
    %1098 = vmatprep.subr.bf16.mxu0 0
    %1099 = vmatpush1.bf16.msra.mxu0 0
    %1100 = vmatprep.subr.bf16.mxu0 0
    %1101 = vmatpush1.bf16.msra.mxu0 0
    %1102 = vmatprep.subr.bf16.mxu0 0
    %1103 = vmatpush1.bf16.msra.mxu0 0
    %1104 = vmatprep.subr.bf16.mxu0 0
    %1105 = vmatpush1.bf16.msra.mxu0 0
    %1106 = vmatprep.subr.bf16.mxu0 0
    %1107 = vmatpush1.bf16.msra.mxu0 0
    %1108 = vmatprep.subr.bf16.mxu0 0
    %1109 = vmatpush1.bf16.msra.mxu0 0
    %1110 = vmatprep.subr.bf16.mxu0 0
    %1111 = vmatpush1.bf16.msra.mxu0 0
    %1112 = vmatprep.subr.bf16.mxu0 0
    %1113 = vmatpush1.bf16.msra.mxu0 0
    %1114 = vmatprep.subr.bf16.mxu0 0
    %1115 = vmatpush1.bf16.msra.mxu0 0
    %1116 = vmatprep.subr.bf16.mxu0 0
    %1117 = vmatpush1.bf16.msra.mxu0 0
    %1118 = vmatprep.subr.bf16.mxu0 0
    %1119 = vmatpush1.bf16.msra.mxu0 0
    %1120 = vmatprep.mubr.bf16.mxu0 0
    %1121 = vmatmul.mubr.bf16.gmra.mrb[0].mxu0 %v216
    %v1122 = vpop.f32.mrb[0].mxu0
    %v1123 = vadd.f32 0.0, %v1122
    %v1124 = vpop.f32.mrb[0].mxu0
    %v1125 = vpop.f32.mrb[0].mxu0
    %v1126 = vadd.f32 0.0, %v1125
    %v1127 = vpop.f32.mrb[0].mxu0
    %1128 = vmatprep.mubr.bf16.mxu0 0
    %1129 = vmatmul.mubr.bf16.gmra.mrb[0].mxu0 %v219
    %v1130 = vpop.f32.mrb[0].mxu0
    %v1131 = vadd.f32 0.0, %v1130
    %v1132 = vpop.f32.mrb[0].mxu0
    %v1133 = vpop.f32.mrb[0].mxu0
    %v1134 = vpop.f32.mrb[0].mxu0
    %1135 = vdwg.mxu0
    %v1140 = vunpack.c.l.b16 %v97
    %v1141 = vunpack.c.l.b16 %v98
    %v1142 = vunpack.c.l.b16 %v99
    %v1143 = vunpack.c.l.b16 %v100
    %v1144 = vpack.c.b16 %v1141, %v1140
    %v1145 = vpack.c.b16 %v1143, %v1142
    %1148 = vmatprep.subr.bf16.mxu0 0
    %1149 = vmatpush1.bf16.msra.mxu0 %v1144
    %1150 = vmatprep.subr.bf16.mxu0 0
    %1151 = vmatpush1.bf16.msra.mxu0 %v1145
    %1152 = vmatprep.subr.bf16.mxu0 0
    %1153 = vmatpush1.bf16.msra.mxu0 0
    %1154 = vmatprep.subr.bf16.mxu0 0
    %1155 = vmatpush1.bf16.msra.mxu0 0
    %1156 = vmatprep.subr.bf16.mxu0 0
    %1157 = vmatpush1.bf16.msra.mxu0 0
    %1158 = vmatprep.subr.bf16.mxu0 0
    %1159 = vmatpush1.bf16.msra.mxu0 0
    %1160 = vmatprep.subr.bf16.mxu0 0
    %1161 = vmatpush1.bf16.msra.mxu0 0
    %1162 = vmatprep.subr.bf16.mxu0 0
    %1163 = vmatpush1.bf16.msra.mxu0 0
    %1164 = vmatprep.subr.bf16.mxu0 0
    %1165 = vmatpush1.bf16.msra.mxu0 0
    %1166 = vmatprep.subr.bf16.mxu0 0
    %1167 = vmatpush1.bf16.msra.mxu0 0
    %1168 = vmatprep.subr.bf16.mxu0 0
    %1169 = vmatpush1.bf16.msra.mxu0 0
    %1170 = vmatprep.subr.bf16.mxu0 0
    %1171 = vmatpush1.bf16.msra.mxu0 0
    %1172 = vmatprep.subr.bf16.mxu0 0
    %1173 = vmatpush1.bf16.msra.mxu0 0
    %1174 = vmatprep.subr.bf16.mxu0 0
    %1175 = vmatpush1.bf16.msra.mxu0 0
    %1176 = vmatprep.subr.bf16.mxu0 0
    %1177 = vmatpush1.bf16.msra.mxu0 0
    %1178 = vmatprep.subr.bf16.mxu0 0
    %1179 = vmatpush1.bf16.msra.mxu0 0
    %1180 = vmatprep.mubr.bf16.mxu0 0
    %1181 = vmatmul.mubr.bf16.gmra.mrb[0].mxu0 %v216
    %v1182 = vpop.f32.mrb[0].mxu0
    %v1183 = vadd.f32 0.0, %v1182
    %v1184 = vpop.f32.mrb[0].mxu0
    %v1185 = vpop.f32.mrb[0].mxu0
    %v1186 = vadd.f32 0.0, %v1185
    %v1187 = vpop.f32.mrb[0].mxu0
    %1188 = vmatprep.mubr.bf16.mxu0 0
    %1189 = vmatmul.mubr.bf16.gmra.mrb[0].mxu0 %v219
    %v1190 = vpop.f32.mrb[0].mxu0
    %v1191 = vadd.f32 0.0, %v1190
    %v1192 = vpop.f32.mrb[0].mxu0
    %v1193 = vpop.f32.mrb[0].mxu0
    %v1194 = vpop.f32.mrb[0].mxu0
    %1195 = vdwg.mxu0
    %v1196 = vpack.c.bf16 %v1066, %v1063
    %v1197 = vpack.c.bf16 %v1071, %v1071
    %v1198 = vpack.c.bf16 %v1126, %v1123
    %v1199 = vpack.c.bf16 %v1131, %v1131
    %v1201 = vsel %vm393, %v1196, 0
    %v1204 = vsel %vm393, %v1197, 0
    %v1207 = vsel %vm393, %v1198, 0
    %v1210 = vsel %vm393, %v1199, 0
    %1212 = vmatprep.subr.bf16.mxu0 0
    %1213 = vmatpush1.bf16.xpose.msra.mxu0 %v1207
    %1214 = vmatprep.subr.bf16.mxu0 0
    %1215 = vmatpush1.bf16.xpose.msra.mxu0 %v1210
    %1216 = vmatprep.subr.bf16.mxu0 0
    %1217 = vmatpush1.bf16.xpose.msra.mxu0 0
    %1218 = vmatprep.subr.bf16.mxu0 0
    %1219 = vmatpush1.bf16.xpose.msra.mxu0 0
    %1220 = vmatprep.subr.bf16.mxu0 0
    %1221 = vmatpush1.bf16.xpose.msra.mxu0 0
    %1222 = vmatprep.subr.bf16.mxu0 0
    %1223 = vmatpush1.bf16.xpose.msra.mxu0 0
    %1224 = vmatprep.subr.bf16.mxu0 0
    %1225 = vmatpush1.bf16.xpose.msra.mxu0 0
    %1226 = vmatprep.subr.bf16.mxu0 0
    %1227 = vmatpush1.bf16.xpose.msra.mxu0 0
    %1228 = vmatprep.subr.bf16.mxu0 0
    %1229 = vmatpush1.bf16.xpose.msra.mxu0 0
    %1230 = vmatprep.subr.bf16.mxu0 0
    %1231 = vmatpush1.bf16.xpose.msra.mxu0 0
    %1232 = vmatprep.subr.bf16.mxu0 0
    %1233 = vmatpush1.bf16.xpose.msra.mxu0 0
    %1234 = vmatprep.subr.bf16.mxu0 0
    %1235 = vmatpush1.bf16.xpose.msra.mxu0 0
    %1236 = vmatprep.subr.bf16.mxu0 0
    %1237 = vmatpush1.bf16.xpose.msra.mxu0 0
    %1238 = vmatprep.subr.bf16.mxu0 0
    %1239 = vmatpush1.bf16.xpose.msra.mxu0 0
    %1240 = vmatprep.subr.bf16.mxu0 0
    %1241 = vmatpush1.bf16.xpose.msra.mxu0 0
    %1242 = vmatprep.subr.bf16.mxu0 0
    %1243 = vmatpush1.bf16.xpose.msra.mxu0 0
    %1244 = vmatprep.mubr.bf16.mxu0 0
    %1245 = vmatmul.mubr.bf16.gmra.mrb[0].mxu0 %v1201
    %v1246 = vpop.f32.mrb[0].mxu0
    %v1247 = vadd.f32 0.0, %v1246
    %v1248 = vpop.f32.mrb[0].mxu0
    %v1249 = vpop.f32.mrb[0].mxu0
    %v1250 = vadd.f32 0.0, %v1249
    %v1251 = vpop.f32.mrb[0].mxu0
    %1252 = vmatprep.mubr.bf16.mxu0 0
    %1253 = vmatmul.mubr.bf16.gmra.mrb[0].mxu0 %v1204
    %v1254 = vpop.f32.mrb[0].mxu0
    %v1255 = vadd.f32 0.0, %v1254
    %v1256 = vpop.f32.mrb[0].mxu0
    %v1257 = vpop.f32.mrb[0].mxu0
    %v1258 = vpop.f32.mrb[0].mxu0
    %1259 = vdwg.mxu0
    %v1260 = vsel %vm454, %v1247, -inf
    %1261 = vmax.xlane.f32.xlu0 %v1260
    %v1262 = vpop.xlane.xlu0 %1261
    %v1263 = vsel %vm454, %v1250, -inf
    %1264 = vmax.xlane.f32.xlu0 %v1263
    %v1265 = vpop.xlane.xlu0 %1264
    %v1266 = vsel %vm461, %v1255, -inf
    %1267 = vmax.xlane.f32.xlu0 %v1266
    %v1268 = vpop.xlane.xlu0 %1267
    %v1269 = vsub.f32 %v1247, %v1262
    %v1270 = vsub.f32 %v1250, %v1265
    %v1271 = vsub.f32 %v1255, %v1268
    %v1272 = vmul.f32 %v1269, 1.442695
    %v1273 = vpow.pop %v1272
    %v1274 = vmul.f32 %v1270, 1.442695
    %v1275 = vpow.pop %v1274
    %v1276 = vmul.f32 %v1271, 1.442695
    %v1277 = vpow.pop %v1276
    %v1278 = vsel %vm454, %v1273, 0.0
    %1279 = vadd.xlane.f32.xlu0 %v1278
    %v1280 = vpop.xlane.xlu0 %1279
    %v1281 = vsel %vm454, %v1275, 0.0
    %1282 = vadd.xlane.f32.xlu0 %v1281
    %v1283 = vpop.xlane.xlu0 %1282
    %v1284 = vsel %vm461, %v1277, 0.0
    %1285 = vadd.xlane.f32.xlu0 %v1284
    %v1286 = vpop.xlane.xlu0 %1285
    %v1287 = vrcp.pop %v1280
    %v1288 = vmul.f32 %v1273, %v1287
    %v1289 = vrcp.pop %v1283
    %v1290 = vmul.f32 %v1275, %v1289
    %v1291 = vrcp.pop %v1286
    %v1292 = vmul.f32 %v1277, %v1291
    %v1293 = vadd.f32 %v835, %v1288
    %v1294 = vadd.f32 %v836, %v1290
    %v1295 = vadd.f32 %v837, %v1292
    %v1296 = vpack.c.bf16 %v1290, %v1288
    %v1297 = vpack.c.bf16 %v1292, %v1292
    %v1298 = vpack.c.bf16 %v1186, %v1183
    %v1299 = vpack.c.bf16 %v1191, %v1191
    %v1301 = vsel %vm454, %v1296, 0
    %v1304 = vsel %vm454, %v1297, 0
    %v1307 = vand.u32 %v1299, %v504
    %1309 = vmatprep.subr.bf16.mxu0 0
    %1310 = vmatpush1.bf16.msra.mxu0 %v1298
    %1311 = vmatprep.subr.bf16.mxu0 0
    %1312 = vmatpush1.bf16.msra.mxu0 %v1307
    %1313 = vmatprep.subr.bf16.mxu0 0
    %1314 = vmatpush1.bf16.msra.mxu0 0
    %1315 = vmatprep.subr.bf16.mxu0 0
    %1316 = vmatpush1.bf16.msra.mxu0 0
    %1317 = vmatprep.subr.bf16.mxu0 0
    %1318 = vmatpush1.bf16.msra.mxu0 0
    %1319 = vmatprep.subr.bf16.mxu0 0
    %1320 = vmatpush1.bf16.msra.mxu0 0
    %1321 = vmatprep.subr.bf16.mxu0 0
    %1322 = vmatpush1.bf16.msra.mxu0 0
    %1323 = vmatprep.subr.bf16.mxu0 0
    %1324 = vmatpush1.bf16.msra.mxu0 0
    %1325 = vmatprep.subr.bf16.mxu0 0
    %1326 = vmatpush1.bf16.msra.mxu0 0
    %1327 = vmatprep.subr.bf16.mxu0 0
    %1328 = vmatpush1.bf16.msra.mxu0 0
    %1329 = vmatprep.subr.bf16.mxu0 0
    %1330 = vmatpush1.bf16.msra.mxu0 0
    %1331 = vmatprep.subr.bf16.mxu0 0
    %1332 = vmatpush1.bf16.msra.mxu0 0
    %1333 = vmatprep.subr.bf16.mxu0 0
    %1334 = vmatpush1.bf16.msra.mxu0 0
    %1335 = vmatprep.subr.bf16.mxu0 0
    %1336 = vmatpush1.bf16.msra.mxu0 0
    %1337 = vmatprep.subr.bf16.mxu0 0
    %1338 = vmatpush1.bf16.msra.mxu0 0
    %1339 = vmatprep.subr.bf16.mxu0 0
    %1340 = vmatpush1.bf16.msra.mxu0 0
    %1341 = vmatprep.mubr.bf16.mxu0 0
    %1342 = vmatmul.mubr.bf16.gmra.mrb[0].mxu0 %v1301
    %v1343 = vpop.f32.mrb[0].mxu0
    %v1344 = vadd.f32 0.0, %v1343
    %v1345 = vpop.f32.mrb[0].mxu0
    %v1346 = vpop.f32.mrb[0].mxu0
    %v1347 = vadd.f32 0.0, %v1346
    %v1348 = vpop.f32.mrb[0].mxu0
    %1349 = vmatprep.mubr.bf16.mxu0 0
    %1350 = vmatmul.mubr.bf16.gmra.mrb[0].mxu0 %v1304
    %v1351 = vpop.f32.mrb[0].mxu0
    %v1352 = vadd.f32 0.0, %v1351
    %v1353 = vpop.f32.mrb[0].mxu0
    %v1354 = vpop.f32.mrb[0].mxu0
    %v1355 = vpop.f32.mrb[0].mxu0
    %1356 = vdwg.mxu0
    %v1357 = vpack.c.bf16 %v1347, %v1344
    %v1358 = vpack.c.bf16 %v1352, %v1352
    %v1360 = vsel %vm393, %v1357, 0
    %v1363 = vsel %vm393, %v1358, 0
    %v1366 = vsel %vm907, %v110, 0
    %1368 = vmatprep.subr.bf16.mxu0 0
    %1369 = vmatpush1.bf16.msra.mxu0 %v1366
    %1370 = vmatprep.subr.bf16.mxu0 0
    %1371 = vmatpush1.bf16.msra.mxu0 0
    %1372 = vmatprep.subr.bf16.mxu0 0
    %1373 = vmatpush1.bf16.msra.mxu0 0
    %1374 = vmatprep.subr.bf16.mxu0 0
    %1375 = vmatpush1.bf16.msra.mxu0 0
    %1376 = vmatprep.subr.bf16.mxu0 0
    %1377 = vmatpush1.bf16.msra.mxu0 0
    %1378 = vmatprep.subr.bf16.mxu0 0
    %1379 = vmatpush1.bf16.msra.mxu0 0
    %1380 = vmatprep.subr.bf16.mxu0 0
    %1381 = vmatpush1.bf16.msra.mxu0 0
    %1382 = vmatprep.subr.bf16.mxu0 0
    %1383 = vmatpush1.bf16.msra.mxu0 0
    %1384 = vmatprep.subr.bf16.mxu0 0
    %1385 = vmatpush1.bf16.msra.mxu0 0
    %1386 = vmatprep.subr.bf16.mxu0 0
    %1387 = vmatpush1.bf16.msra.mxu0 0
    %1388 = vmatprep.subr.bf16.mxu0 0
    %1389 = vmatpush1.bf16.msra.mxu0 0
    %1390 = vmatprep.subr.bf16.mxu0 0
    %1391 = vmatpush1.bf16.msra.mxu0 0
    %1392 = vmatprep.subr.bf16.mxu0 0
    %1393 = vmatpush1.bf16.msra.mxu0 0
    %1394 = vmatprep.subr.bf16.mxu0 0
    %1395 = vmatpush1.bf16.msra.mxu0 0
    %1396 = vmatprep.subr.bf16.mxu0 0
    %1397 = vmatpush1.bf16.msra.mxu0 0
    %1398 = vmatprep.subr.bf16.mxu0 0
    %1399 = vmatpush1.bf16.msra.mxu0 0
    %1400 = vmatprep.mubr.bf16.mxu0 0
    %1401 = vmatmul.mubr.bf16.gmra.mrb[0].mxu0 %v1360
    %v1402 = vpop.f32.mrb[0].mxu0
    %v1403 = vadd.f32 0.0, %v1402
    %v1404 = vpop.f32.mrb[0].mxu0
    %v1405 = vpop.f32.mrb[0].mxu0
    %v1406 = vadd.f32 0.0, %v1405
    %v1407 = vpop.f32.mrb[0].mxu0
    %1408 = vmatprep.mubr.bf16.mxu0 0
    %1409 = vmatmul.mubr.bf16.gmra.mrb[0].mxu0 %v1363
    %v1410 = vpop.f32.mrb[0].mxu0
    %v1411 = vadd.f32 0.0, %v1410
    %v1412 = vpop.f32.mrb[0].mxu0
    %v1413 = vpop.f32.mrb[0].mxu0
    %v1414 = vpop.f32.mrb[0].mxu0
    %1415 = vdwg.mxu0
    %v1416 = vadd.f32 %v1003, %v1403
    %v1417 = vadd.f32 %v1006, %v1406
    %v1418 = vadd.f32 %v1011, %v1411
    %v1423 = vunpack.c.l.b16 %v62
    %v1424 = vunpack.c.l.b16 %v63
    %v1425 = vunpack.c.l.b16 %v64
    %v1426 = vunpack.c.l.b16 %v65
    %v1427 = vpack.c.b16 %v1424, %v1423
    %v1428 = vpack.c.b16 %v1426, %v1425
    %1431 = vmatprep.subr.bf16.mxu0 0
    %1432 = vmatpush1.bf16.msra.mxu0 %v1427
    %1433 = vmatprep.subr.bf16.mxu0 0
    %1434 = vmatpush1.bf16.msra.mxu0 %v1428
    %1435 = vmatprep.subr.bf16.mxu0 0
    %1436 = vmatpush1.bf16.msra.mxu0 0
    %1437 = vmatprep.subr.bf16.mxu0 0
    %1438 = vmatpush1.bf16.msra.mxu0 0
    %1439 = vmatprep.subr.bf16.mxu0 0
    %1440 = vmatpush1.bf16.msra.mxu0 0
    %1441 = vmatprep.subr.bf16.mxu0 0
    %1442 = vmatpush1.bf16.msra.mxu0 0
    %1443 = vmatprep.subr.bf16.mxu0 0
    %1444 = vmatpush1.bf16.msra.mxu0 0
    %1445 = vmatprep.subr.bf16.mxu0 0
    %1446 = vmatpush1.bf16.msra.mxu0 0
    %1447 = vmatprep.subr.bf16.mxu0 0
    %1448 = vmatpush1.bf16.msra.mxu0 0
    %1449 = vmatprep.subr.bf16.mxu0 0
    %1450 = vmatpush1.bf16.msra.mxu0 0
    %1451 = vmatprep.subr.bf16.mxu0 0
    %1452 = vmatpush1.bf16.msra.mxu0 0
    %1453 = vmatprep.subr.bf16.mxu0 0
    %1454 = vmatpush1.bf16.msra.mxu0 0
    %1455 = vmatprep.subr.bf16.mxu0 0
    %1456 = vmatpush1.bf16.msra.mxu0 0
    %1457 = vmatprep.subr.bf16.mxu0 0
    %1458 = vmatpush1.bf16.msra.mxu0 0
    %1459 = vmatprep.subr.bf16.mxu0 0
    %1460 = vmatpush1.bf16.msra.mxu0 0
    %1461 = vmatprep.subr.bf16.mxu0 0
    %1462 = vmatpush1.bf16.msra.mxu0 0
    %1463 = vmatprep.mubr.bf16.mxu0 0
    %1464 = vmatmul.mubr.bf16.gmra.mrb[0].mxu0 %v216
    %v1465 = vpop.f32.mrb[0].mxu0
    %v1466 = vadd.f32 0.0, %v1465
    %v1467 = vpop.f32.mrb[0].mxu0
    %v1468 = vpop.f32.mrb[0].mxu0
    %v1469 = vadd.f32 0.0, %v1468
    %v1470 = vpop.f32.mrb[0].mxu0
    %1471 = vmatprep.mubr.bf16.mxu0 0
    %1472 = vmatmul.mubr.bf16.gmra.mrb[0].mxu0 %v219
    %v1473 = vpop.f32.mrb[0].mxu0
    %v1474 = vadd.f32 0.0, %v1473
    %v1475 = vpop.f32.mrb[0].mxu0
    %v1476 = vpop.f32.mrb[0].mxu0
    %v1477 = vpop.f32.mrb[0].mxu0
    %1478 = vdwg.mxu0
    %v1483 = vunpack.c.l.b16 %v82
    %v1484 = vunpack.c.l.b16 %v83
    %v1485 = vunpack.c.l.b16 %v84
    %v1486 = vunpack.c.l.b16 %v85
    %v1487 = vpack.c.b16 %v1484, %v1483
    %v1488 = vpack.c.b16 %v1486, %v1485
    %1491 = vmatprep.subr.bf16.mxu0 0
    %1492 = vmatpush1.bf16.msra.mxu0 %v1487
    %1493 = vmatprep.subr.bf16.mxu0 0
    %1494 = vmatpush1.bf16.msra.mxu0 %v1488
    %1495 = vmatprep.subr.bf16.mxu0 0
    %1496 = vmatpush1.bf16.msra.mxu0 0
    %1497 = vmatprep.subr.bf16.mxu0 0
    %1498 = vmatpush1.bf16.msra.mxu0 0
    %1499 = vmatprep.subr.bf16.mxu0 0
    %1500 = vmatpush1.bf16.msra.mxu0 0
    %1501 = vmatprep.subr.bf16.mxu0 0
    %1502 = vmatpush1.bf16.msra.mxu0 0
    %1503 = vmatprep.subr.bf16.mxu0 0
    %1504 = vmatpush1.bf16.msra.mxu0 0
    %1505 = vmatprep.subr.bf16.mxu0 0
    %1506 = vmatpush1.bf16.msra.mxu0 0
    %1507 = vmatprep.subr.bf16.mxu0 0
    %1508 = vmatpush1.bf16.msra.mxu0 0
    %1509 = vmatprep.subr.bf16.mxu0 0
    %1510 = vmatpush1.bf16.msra.mxu0 0
    %1511 = vmatprep.subr.bf16.mxu0 0
    %1512 = vmatpush1.bf16.msra.mxu0 0
    %1513 = vmatprep.subr.bf16.mxu0 0
    %1514 = vmatpush1.bf16.msra.mxu0 0
    %1515 = vmatprep.subr.bf16.mxu0 0
    %1516 = vmatpush1.bf16.msra.mxu0 0
    %1517 = vmatprep.subr.bf16.mxu0 0
    %1518 = vmatpush1.bf16.msra.mxu0 0
    %1519 = vmatprep.subr.bf16.mxu0 0
    %1520 = vmatpush1.bf16.msra.mxu0 0
    %1521 = vmatprep.subr.bf16.mxu0 0
    %1522 = vmatpush1.bf16.msra.mxu0 0
    %1523 = vmatprep.mubr.bf16.mxu0 0
    %1524 = vmatmul.mubr.bf16.gmra.mrb[0].mxu0 %v216
    %v1525 = vpop.f32.mrb[0].mxu0
    %v1526 = vadd.f32 0.0, %v1525
    %v1527 = vpop.f32.mrb[0].mxu0
    %v1528 = vpop.f32.mrb[0].mxu0
    %v1529 = vadd.f32 0.0, %v1528
    %v1530 = vpop.f32.mrb[0].mxu0
    %1531 = vmatprep.mubr.bf16.mxu0 0
    %1532 = vmatmul.mubr.bf16.gmra.mrb[0].mxu0 %v219
    %v1533 = vpop.f32.mrb[0].mxu0
    %v1534 = vadd.f32 0.0, %v1533
    %v1535 = vpop.f32.mrb[0].mxu0
    %v1536 = vpop.f32.mrb[0].mxu0
    %v1537 = vpop.f32.mrb[0].mxu0
    %1538 = vdwg.mxu0
    %v1543 = vunpack.c.l.b16 %v102
    %v1544 = vunpack.c.l.b16 %v103
    %v1545 = vunpack.c.l.b16 %v104
    %v1546 = vunpack.c.l.b16 %v105
    %v1547 = vpack.c.b16 %v1544, %v1543
    %v1548 = vpack.c.b16 %v1546, %v1545
    %1551 = vmatprep.subr.bf16.mxu0 0
    %1552 = vmatpush1.bf16.msra.mxu0 %v1547
    %1553 = vmatprep.subr.bf16.mxu0 0
    %1554 = vmatpush1.bf16.msra.mxu0 %v1548
    %1555 = vmatprep.subr.bf16.mxu0 0
    %1556 = vmatpush1.bf16.msra.mxu0 0
    %1557 = vmatprep.subr.bf16.mxu0 0
    %1558 = vmatpush1.bf16.msra.mxu0 0
    %1559 = vmatprep.subr.bf16.mxu0 0
    %1560 = vmatpush1.bf16.msra.mxu0 0
    %1561 = vmatprep.subr.bf16.mxu0 0
    %1562 = vmatpush1.bf16.msra.mxu0 0
    %1563 = vmatprep.subr.bf16.mxu0 0
    %1564 = vmatpush1.bf16.msra.mxu0 0
    %1565 = vmatprep.subr.bf16.mxu0 0
    %1566 = vmatpush1.bf16.msra.mxu0 0
    %1567 = vmatprep.subr.bf16.mxu0 0
    %1568 = vmatpush1.bf16.msra.mxu0 0
    %1569 = vmatprep.subr.bf16.mxu0 0
    %1570 = vmatpush1.bf16.msra.mxu0 0
    %1571 = vmatprep.subr.bf16.mxu0 0
    %1572 = vmatpush1.bf16.msra.mxu0 0
    %1573 = vmatprep.subr.bf16.mxu0 0
    %1574 = vmatpush1.bf16.msra.mxu0 0
    %1575 = vmatprep.subr.bf16.mxu0 0
    %1576 = vmatpush1.bf16.msra.mxu0 0
    %1577 = vmatprep.subr.bf16.mxu0 0
    %1578 = vmatpush1.bf16.msra.mxu0 0
    %1579 = vmatprep.subr.bf16.mxu0 0
    %1580 = vmatpush1.bf16.msra.mxu0 0
    %1581 = vmatprep.subr.bf16.mxu0 0
    %1582 = vmatpush1.bf16.msra.mxu0 0
    %1583 = vmatprep.mubr.bf16.mxu0 0
    %1584 = vmatmul.mubr.bf16.gmra.mrb[0].mxu0 %v216
    %v1585 = vpop.f32.mrb[0].mxu0
    %v1586 = vadd.f32 0.0, %v1585
    %v1587 = vpop.f32.mrb[0].mxu0
    %v1588 = vpop.f32.mrb[0].mxu0
    %v1589 = vadd.f32 0.0, %v1588
    %v1590 = vpop.f32.mrb[0].mxu0
    %1591 = vmatprep.mubr.bf16.mxu0 0
    %1592 = vmatmul.mubr.bf16.gmra.mrb[0].mxu0 %v219
    %v1593 = vpop.f32.mrb[0].mxu0
    %v1594 = vadd.f32 0.0, %v1593
    %v1595 = vpop.f32.mrb[0].mxu0
    %v1596 = vpop.f32.mrb[0].mxu0
    %v1597 = vpop.f32.mrb[0].mxu0
    %1598 = vdwg.mxu0
    %v1599 = vpack.c.bf16 %v1469, %v1466
    %v1600 = vpack.c.bf16 %v1474, %v1474
    %v1601 = vpack.c.bf16 %v1529, %v1526
    %v1602 = vpack.c.bf16 %v1534, %v1534
    %v1604 = vsel %vm393, %v1599, 0
    %v1607 = vsel %vm393, %v1600, 0
    %v1610 = vsel %vm393, %v1601, 0
    %v1613 = vsel %vm393, %v1602, 0
    %1615 = vmatprep.subr.bf16.mxu0 0
    %1616 = vmatpush1.bf16.xpose.msra.mxu0 %v1610
    %1617 = vmatprep.subr.bf16.mxu0 0
    %1618 = vmatpush1.bf16.xpose.msra.mxu0 %v1613
    %1619 = vmatprep.subr.bf16.mxu0 0
    %1620 = vmatpush1.bf16.xpose.msra.mxu0 0
    %1621 = vmatprep.subr.bf16.mxu0 0
    %1622 = vmatpush1.bf16.xpose.msra.mxu0 0
    %1623 = vmatprep.subr.bf16.mxu0 0
    %1624 = vmatpush1.bf16.xpose.msra.mxu0 0
    %1625 = vmatprep.subr.bf16.mxu0 0
    %1626 = vmatpush1.bf16.xpose.msra.mxu0 0
    %1627 = vmatprep.subr.bf16.mxu0 0
    %1628 = vmatpush1.bf16.xpose.msra.mxu0 0
    %1629 = vmatprep.subr.bf16.mxu0 0
    %1630 = vmatpush1.bf16.xpose.msra.mxu0 0
    %1631 = vmatprep.subr.bf16.mxu0 0
    %1632 = vmatpush1.bf16.xpose.msra.mxu0 0
    %1633 = vmatprep.subr.bf16.mxu0 0
    %1634 = vmatpush1.bf16.xpose.msra.mxu0 0
    %1635 = vmatprep.subr.bf16.mxu0 0
    %1636 = vmatpush1.bf16.xpose.msra.mxu0 0
    %1637 = vmatprep.subr.bf16.mxu0 0
    %1638 = vmatpush1.bf16.xpose.msra.mxu0 0
    %1639 = vmatprep.subr.bf16.mxu0 0
    %1640 = vmatpush1.bf16.xpose.msra.mxu0 0
    %1641 = vmatprep.subr.bf16.mxu0 0
    %1642 = vmatpush1.bf16.xpose.msra.mxu0 0
    %1643 = vmatprep.subr.bf16.mxu0 0
    %1644 = vmatpush1.bf16.xpose.msra.mxu0 0
    %1645 = vmatprep.subr.bf16.mxu0 0
    %1646 = vmatpush1.bf16.xpose.msra.mxu0 0
    %1647 = vmatprep.mubr.bf16.mxu0 0
    %1648 = vmatmul.mubr.bf16.gmra.mrb[0].mxu0 %v1604
    %v1649 = vpop.f32.mrb[0].mxu0
    %v1650 = vadd.f32 0.0, %v1649
    %v1651 = vpop.f32.mrb[0].mxu0
    %v1652 = vpop.f32.mrb[0].mxu0
    %v1653 = vadd.f32 0.0, %v1652
    %v1654 = vpop.f32.mrb[0].mxu0
    %1655 = vmatprep.mubr.bf16.mxu0 0
    %1656 = vmatmul.mubr.bf16.gmra.mrb[0].mxu0 %v1607
    %v1657 = vpop.f32.mrb[0].mxu0
    %v1658 = vadd.f32 0.0, %v1657
    %v1659 = vpop.f32.mrb[0].mxu0
    %v1660 = vpop.f32.mrb[0].mxu0
    %v1661 = vpop.f32.mrb[0].mxu0
    %1662 = vdwg.mxu0
    %v1663 = vsel %vm454, %v1650, -inf
    %1664 = vmax.xlane.f32.xlu0 %v1663
    %v1665 = vpop.xlane.xlu0 %1664
    %v1666 = vsel %vm454, %v1653, -inf
    %1667 = vmax.xlane.f32.xlu0 %v1666
    %v1668 = vpop.xlane.xlu0 %1667
    %v1669 = vsel %vm461, %v1658, -inf
    %1670 = vmax.xlane.f32.xlu0 %v1669
    %v1671 = vpop.xlane.xlu0 %1670
    %v1672 = vsub.f32 %v1650, %v1665
    %v1673 = vsub.f32 %v1653, %v1668
    %v1674 = vsub.f32 %v1658, %v1671
    %v1675 = vmul.f32 %v1672, 1.442695
    %v1676 = vpow.pop %v1675
    %v1677 = vmul.f32 %v1673, 1.442695
    %v1678 = vpow.pop %v1677
    %v1679 = vmul.f32 %v1674, 1.442695
    %v1680 = vpow.pop %v1679
    %v1681 = vsel %vm454, %v1676, 0.0
    %1682 = vadd.xlane.f32.xlu0 %v1681
    %v1683 = vpop.xlane.xlu0 %1682
    %v1684 = vsel %vm454, %v1678, 0.0
    %1685 = vadd.xlane.f32.xlu0 %v1684
    %v1686 = vpop.xlane.xlu0 %1685
    %v1687 = vsel %vm461, %v1680, 0.0
    %1688 = vadd.xlane.f32.xlu0 %v1687
    %v1689 = vpop.xlane.xlu0 %1688
    %v1690 = vrcp.pop %v1683
    %v1691 = vmul.f32 %v1676, %v1690
    %v1692 = vrcp.pop %v1686
    %v1693 = vmul.f32 %v1678, %v1692
    %v1694 = vrcp.pop %v1689
    %v1695 = vmul.f32 %v1680, %v1694
    %v1696 = vadd.f32 %v1293, %v1691
    %v1697 = vadd.f32 %v1294, %v1693
    %v1698 = vadd.f32 %v1295, %v1695
    %v1699 = vpack.c.bf16 %v1693, %v1691
    %v1700 = vpack.c.bf16 %v1695, %v1695
    %v1701 = vpack.c.bf16 %v1589, %v1586
    %v1702 = vpack.c.bf16 %v1594, %v1594
    %v1704 = vsel %vm454, %v1699, 0
    %v1707 = vsel %vm454, %v1700, 0
    %v1710 = vand.u32 %v1702, %v504
    %1712 = vmatprep.subr.bf16.mxu0 0
    %1713 = vmatpush1.bf16.msra.mxu0 %v1701
    %1714 = vmatprep.subr.bf16.mxu0 0
    %1715 = vmatpush1.bf16.msra.mxu0 %v1710
    %1716 = vmatprep.subr.bf16.mxu0 0
    %1717 = vmatpush1.bf16.msra.mxu0 0
    %1718 = vmatprep.subr.bf16.mxu0 0
    %1719 = vmatpush1.bf16.msra.mxu0 0
    %1720 = vmatprep.subr.bf16.mxu0 0
    %1721 = vmatpush1.bf16.msra.mxu0 0
    %1722 = vmatprep.subr.bf16.mxu0 0
    %1723 = vmatpush1.bf16.msra.mxu0 0
    %1724 = vmatprep.subr.bf16.mxu0 0
    %1725 = vmatpush1.bf16.msra.mxu0 0
    %1726 = vmatprep.subr.bf16.mxu0 0
    %1727 = vmatpush1.bf16.msra.mxu0 0
    %1728 = vmatprep.subr.bf16.mxu0 0
    %1729 = vmatpush1.bf16.msra.mxu0 0
    %1730 = vmatprep.subr.bf16.mxu0 0
    %1731 = vmatpush1.bf16.msra.mxu0 0
    %1732 = vmatprep.subr.bf16.mxu0 0
    %1733 = vmatpush1.bf16.msra.mxu0 0
    %1734 = vmatprep.subr.bf16.mxu0 0
    %1735 = vmatpush1.bf16.msra.mxu0 0
    %1736 = vmatprep.subr.bf16.mxu0 0
    %1737 = vmatpush1.bf16.msra.mxu0 0
    %1738 = vmatprep.subr.bf16.mxu0 0
    %1739 = vmatpush1.bf16.msra.mxu0 0
    %1740 = vmatprep.subr.bf16.mxu0 0
    %1741 = vmatpush1.bf16.msra.mxu0 0
    %1742 = vmatprep.subr.bf16.mxu0 0
    %1743 = vmatpush1.bf16.msra.mxu0 0
    %1744 = vmatprep.mubr.bf16.mxu0 0
    %1745 = vmatmul.mubr.bf16.gmra.mrb[0].mxu0 %v1704
    %v1746 = vpop.f32.mrb[0].mxu0
    %v1747 = vadd.f32 0.0, %v1746
    %v1748 = vpop.f32.mrb[0].mxu0
    %v1749 = vpop.f32.mrb[0].mxu0
    %v1750 = vadd.f32 0.0, %v1749
    %v1751 = vpop.f32.mrb[0].mxu0
    %1752 = vmatprep.mubr.bf16.mxu0 0
    %1753 = vmatmul.mubr.bf16.gmra.mrb[0].mxu0 %v1707
    %v1754 = vpop.f32.mrb[0].mxu0
    %v1755 = vadd.f32 0.0, %v1754
    %v1756 = vpop.f32.mrb[0].mxu0
    %v1757 = vpop.f32.mrb[0].mxu0
    %v1758 = vpop.f32.mrb[0].mxu0
    %1759 = vdwg.mxu0
    %v1760 = vpack.c.bf16 %v1750, %v1747
    %v1761 = vpack.c.bf16 %v1755, %v1755
    %v1763 = vsel %vm393, %v1760, 0
    %v1766 = vsel %vm393, %v1761, 0
    %v1769 = vsel %vm907, %v112, 0
    %1771 = vmatprep.subr.bf16.mxu0 0
    %1772 = vmatpush1.bf16.msra.mxu0 %v1769
    %1773 = vmatprep.subr.bf16.mxu0 0
    %1774 = vmatpush1.bf16.msra.mxu0 0
    %1775 = vmatprep.subr.bf16.mxu0 0
    %1776 = vmatpush1.bf16.msra.mxu0 0
    %1777 = vmatprep.subr.bf16.mxu0 0
    %1778 = vmatpush1.bf16.msra.mxu0 0
    %1779 = vmatprep.subr.bf16.mxu0 0
    %1780 = vmatpush1.bf16.msra.mxu0 0
    %1781 = vmatprep.subr.bf16.mxu0 0
    %1782 = vmatpush1.bf16.msra.mxu0 0
    %1783 = vmatprep.subr.bf16.mxu0 0
    %1784 = vmatpush1.bf16.msra.mxu0 0
    %1785 = vmatprep.subr.bf16.mxu0 0
    %1786 = vmatpush1.bf16.msra.mxu0 0
    %1787 = vmatprep.subr.bf16.mxu0 0
    %1788 = vmatpush1.bf16.msra.mxu0 0
    %1789 = vmatprep.subr.bf16.mxu0 0
    %1790 = vmatpush1.bf16.msra.mxu0 0
    %1791 = vmatprep.subr.bf16.mxu0 0
    %1792 = vmatpush1.bf16.msra.mxu0 0
    %1793 = vmatprep.subr.bf16.mxu0 0
    %1794 = vmatpush1.bf16.msra.mxu0 0
    %1795 = vmatprep.subr.bf16.mxu0 0
    %1796 = vmatpush1.bf16.msra.mxu0 0
    %1797 = vmatprep.subr.bf16.mxu0 0
    %1798 = vmatpush1.bf16.msra.mxu0 0
    %1799 = vmatprep.subr.bf16.mxu0 0
    %1800 = vmatpush1.bf16.msra.mxu0 0
    %1801 = vmatprep.subr.bf16.mxu0 0
    %1802 = vmatpush1.bf16.msra.mxu0 0
    %1803 = vmatprep.mubr.bf16.mxu0 0
    %1804 = vmatmul.mubr.bf16.gmra.mrb[0].mxu0 %v1763
    %v1805 = vpop.f32.mrb[0].mxu0
    %v1806 = vadd.f32 0.0, %v1805
    %v1807 = vpop.f32.mrb[0].mxu0
    %v1808 = vpop.f32.mrb[0].mxu0
    %v1809 = vadd.f32 0.0, %v1808
    %v1810 = vpop.f32.mrb[0].mxu0
    %1811 = vmatprep.mubr.bf16.mxu0 0
    %1812 = vmatmul.mubr.bf16.gmra.mrb[0].mxu0 %v1766
    %v1813 = vpop.f32.mrb[0].mxu0
    %v1814 = vadd.f32 0.0, %v1813
    %v1815 = vpop.f32.mrb[0].mxu0
    %v1816 = vpop.f32.mrb[0].mxu0
    %v1817 = vpop.f32.mrb[0].mxu0
    %1818 = vdwg.mxu0
    %v1819 = vadd.f32 %v1416, %v1806
    %v1820 = vadd.f32 %v1417, %v1809
    %v1821 = vadd.f32 %v1418, %v1814
    %v1822 = vadd.f32 %v194, %v1819
    %v1823 = vadd.f32 %v197, %v1820
    %v1824 = vadd.f32 %v46, %v1821
    %v1825 = vmul.f32 %v1696, 0.25
    %v1826 = vmul.f32 %v1697, 0.25
    %v1827 = vmul.f32 %v1698, 0.25
    %v1828 = vpack.c.bf16 %v1823, %v1822
    %v1829 = vpack.c.bf16 %v1824, %v1824
    %v1831 = vsel %vm214, %v1828, 0
    %v1834 = vsel %vm214, %v1829, 0
    %v1837 = vsel %vm214, %v121, 0
    %v1840 = vsel %vm214, %v122, 0
    %v1843 = vsel %vm214, %v123, 0
    %v1846 = vsel %vm214, %v124, 0
    %1848 = vmatprep.subr.bf16.mxu0 0
    %1849 = vmatpush1.bf16.xpose.msra.mxu0 %v1837
    %1850 = vmatprep.subr.bf16.mxu0 0
    %1851 = vmatpush1.bf16.xpose.msra.mxu0 %v1840
    %1852 = vmatprep.subr.bf16.mxu0 0
    %1853 = vmatpush1.bf16.xpose.msra.mxu0 %v1843
    %1854 = vmatprep.subr.bf16.mxu0 0
    %1855 = vmatpush1.bf16.xpose.msra.mxu0 %v1846
    %1856 = vmatprep.subr.bf16.mxu0 0
    %1857 = vmatpush1.bf16.xpose.msra.mxu0 0
    %1858 = vmatprep.subr.bf16.mxu0 0
    %1859 = vmatpush1.bf16.xpose.msra.mxu0 0
    %1860 = vmatprep.subr.bf16.mxu0 0
    %1861 = vmatpush1.bf16.xpose.msra.mxu0 0
    %1862 = vmatprep.subr.bf16.mxu0 0
    %1863 = vmatpush1.bf16.xpose.msra.mxu0 0
    %1864 = vmatprep.subr.bf16.mxu0 0
    %1865 = vmatpush1.bf16.xpose.msra.mxu0 0
    %1866 = vmatprep.subr.bf16.mxu0 0
    %1867 = vmatpush1.bf16.xpose.msra.mxu0 0
    %1868 = vmatprep.subr.bf16.mxu0 0
    %1869 = vmatpush1.bf16.xpose.msra.mxu0 0
    %1870 = vmatprep.subr.bf16.mxu0 0
    %1871 = vmatpush1.bf16.xpose.msra.mxu0 0
    %1872 = vmatprep.subr.bf16.mxu0 0
    %1873 = vmatpush1.bf16.xpose.msra.mxu0 0
    %1874 = vmatprep.subr.bf16.mxu0 0
    %1875 = vmatpush1.bf16.xpose.msra.mxu0 0
    %1876 = vmatprep.subr.bf16.mxu0 0
    %1877 = vmatpush1.bf16.xpose.msra.mxu0 0
    %1878 = vmatprep.subr.bf16.mxu0 0
    %1879 = vmatpush1.bf16.xpose.msra.mxu0 0
    %1880 = vmatprep.mubr.bf16.mxu0 0
    %1881 = vmatmul.mubr.bf16.gmra.mrb[0].mxu0 %v1831
    %v1882 = vpop.f32.mrb[0].mxu0
    %v1883 = vadd.f32 0.0, %v1882
    %v1884 = vpop.f32.mrb[0].mxu0
    %v1885 = vpop.f32.mrb[0].mxu0
    %v1886 = vadd.f32 0.0, %v1885
    %v1887 = vpop.f32.mrb[0].mxu0
    %1888 = vmatprep.mubr.bf16.mxu0 0
    %1889 = vmatmul.mubr.bf16.gmra.mrb[0].mxu0 %v1834
    %v1890 = vpop.f32.mrb[0].mxu0
    %v1891 = vadd.f32 0.0, %v1890
    %v1892 = vpop.f32.mrb[0].mxu0
    %v1893 = vpop.f32.mrb[0].mxu0
    %v1894 = vpop.f32.mrb[0].mxu0
    %1895 = vdwg.mxu0
    %v1896 = vmul.f32 %v1883, 2.0
    %v1897 = vmul.f32 %v1886, 2.0
    %v1898 = vmul.f32 %v1891, 2.0
    %v1900 = vlaneseq
    %v1901 = vshrl.u32 %v1900, 7
    %v1902 = vsub.s32 0, %v1901
    %v1903 = vrot.slane %v125, %v1902
    %v1905 = vsub.f32 %v1903, %v1896
    %v1906 = vsub.f32 %v1903, %v1897
    %v1907 = vsub.f32 %v1903, %v1898
    %v1908 = vsel %vm155, %v1905, inf
    %1909 = vmin.xlane.f32.xlu0 %v1908
    %v1910 = vpop.xlane.xlu0 %1909
    %v1911 = vsel %vm155, %v1906, inf
    %1912 = vmin.xlane.f32.xlu0 %v1911
    %v1913 = vpop.xlane.xlu0 %1912
    %vm1914 = vcmask 516096
    %v1915 = vsel %vm1914, %v1907, inf
    %1916 = vmin.xlane.f32.xlu0 %v1915
    %v1917 = vpop.xlane.xlu0 %1916
    %vm1918 = vcmp.le.f32.partialorder %v1905, %v1910
    %vm1919 = vcmp.le.f32.partialorder %v1906, %v1913
    %vm1920 = vcmp.le.f32.partialorder %v1907, %v1917
    %v1921 = vsel %vm1918, %v127, 63
    %v1922 = vsel %vm1919, %v127, 63
    %v1923 = vsel %vm1920, %v127, 63
    %v1924 = vsel %vm155, %v1921, 2147483647
    %v1925 = vand.u32 %v1924, 65535
    %v1926 = vshra.s32 %v1924, 16
    %v1927 = vcvt.s32.f32 %v1925
    %v1928 = vcvt.s32.f32 %v1926
    %1929 = vmin.xlane.f32.xlu0 %v1928
    %v1930 = vpop.xlane.xlu0 %1929
    %vm1931 = vcmp.eq.f32.partialorder %v1928, %v1930
    %v1932 = vsel %vm1931, %v1927, inf
    %1933 = vmin.xlane.f32.xlu0 %v1932
    %v1934 = vpop.xlane.xlu0 %1933
    %v1935 = vcvt.f32.s32 %v1934
    %v1936 = vcvt.f32.s32 %v1930
    %v1937 = vshll.u32 %v1936, 16
    %v1938 = vadd.s32 %v1937, %v1935
    %v1939 = vsel %vm155, %v1922, 2147483647
    %v1940 = vand.u32 %v1939, 65535
    %v1941 = vshra.s32 %v1939, 16
    %v1942 = vcvt.s32.f32 %v1940
    %v1943 = vcvt.s32.f32 %v1941
    %1944 = vmin.xlane.f32.xlu0 %v1943
    %v1945 = vpop.xlane.xlu0 %1944
    %vm1946 = vcmp.eq.f32.partialorder %v1943, %v1945
    %v1947 = vsel %vm1946, %v1942, inf
    %1948 = vmin.xlane.f32.xlu0 %v1947
    %v1949 = vpop.xlane.xlu0 %1948
    %v1950 = vcvt.f32.s32 %v1949
    %v1951 = vcvt.f32.s32 %v1945
    %v1952 = vshll.u32 %v1951, 16
    %v1953 = vadd.s32 %v1952, %v1950
    %v1954 = vsel %vm1914, %v1923, 2147483647
    %v1955 = vand.u32 %v1954, 65535
    %v1956 = vshra.s32 %v1954, 16
    %v1957 = vcvt.s32.f32 %v1955
    %v1958 = vcvt.s32.f32 %v1956
    %1959 = vmin.xlane.f32.xlu0 %v1958
    %v1960 = vpop.xlane.xlu0 %1959
    %vm1961 = vcmp.eq.f32.partialorder %v1958, %v1960
    %v1962 = vsel %vm1961, %v1957, inf
    %1963 = vmin.xlane.f32.xlu0 %v1962
    %v1964 = vpop.xlane.xlu0 %1963
    %v1965 = vcvt.f32.s32 %v1964
    %v1966 = vcvt.f32.s32 %v1960
    %v1967 = vshll.u32 %v1966, 16
    %v1968 = vadd.s32 %v1967, %v1965
    %vm1969 = vcmp.eq.s32.totalorder %v127, %v1938
    %vm1970 = vcmp.eq.s32.totalorder %v127, %v1953
    %vm1971 = vcmp.eq.s32.totalorder %v127, %v1968
    %v1972 = vsel %vm1969, 1, 0
    %v1973 = vsel %vm1970, 1, 0
    %v1974 = vsel %vm1971, 1, 0
    %v1975 = vcvt.s32.f32 %v1972
    %v1976 = vcvt.s32.f32 %v1973
    %v1977 = vcvt.s32.f32 %v1974
    %v1979 = vsel %vm155, %v1975, 0
    %v1982 = vsel %vm155, %v1976, 0
    %v1985 = vsel %vm155, %v1977, 0
    %1987 = vmatprep.subr.mxu0 0.0
    %1988 = vmatpush1.msra.mxu0 %v113
    %1989 = vmatprep.subr.mxu0 0.0
    %1990 = vmatpush1.msra.mxu0 %v114
    %1991 = vmatprep.subr.mxu0 0.0
    %1992 = vmatpush1.msra.mxu0 %v115
    %1993 = vmatprep.subr.mxu0 0.0
    %1994 = vmatpush1.msra.mxu0 %v116
    %1995 = vmatprep.subr.mxu0 0.0
    %1996 = vmatpush1.msra.mxu0 %v117
    %1997 = vmatprep.subr.mxu0 0.0
    %1998 = vmatpush1.msra.mxu0 %v118
    %1999 = vmatprep.subr.mxu0 0.0
    %2000 = vmatpush1.msra.mxu0 %v119
    %2001 = vmatprep.subr.mxu0 0.0
    %2002 = vmatpush1.msra.mxu0 %v120
    %2003 = vmatprep.subr.mxu0 0.0
    %2004 = vmatpush1.msra.mxu0 0.0
    %2005 = vmatprep.subr.mxu0 0.0
    %2006 = vmatpush1.msra.mxu0 0.0
    %2007 = vmatprep.subr.mxu0 0.0
    %2008 = vmatpush1.msra.mxu0 0.0
    %2009 = vmatprep.subr.mxu0 0.0
    %2010 = vmatpush1.msra.mxu0 0.0
    %2011 = vmatprep.subr.mxu0 0.0
    %2012 = vmatpush1.msra.mxu0 0.0
    %2013 = vmatprep.subr.mxu0 0.0
    %2014 = vmatpush1.msra.mxu0 0.0
    %2015 = vmatprep.subr.mxu0 0.0
    %2016 = vmatpush1.msra.mxu0 0.0
    %2017 = vmatprep.subr.mxu0 0.0
    %2018 = vmatpush1.msra.mxu0 0.0
    %2019 = vmatprep.subr.mxu0 0.0
    %2020 = vmatpush1.msra.mxu0 0.0
    %2021 = vmatprep.subr.mxu0 0.0
    %2022 = vmatpush1.msra.mxu0 0.0
    %2023 = vmatprep.subr.mxu0 0.0
    %2024 = vmatpush1.msra.mxu0 0.0
    %2025 = vmatprep.subr.mxu0 0.0
    %2026 = vmatpush1.msra.mxu0 0.0
    %2027 = vmatprep.subr.mxu0 0.0
    %2028 = vmatpush1.msra.mxu0 0.0
    %2029 = vmatprep.subr.mxu0 0.0
    %2030 = vmatpush1.msra.mxu0 0.0
    %2031 = vmatprep.subr.mxu0 0.0
    %2032 = vmatpush1.msra.mxu0 0.0
    %2033 = vmatprep.subr.mxu0 0.0
    %2034 = vmatpush1.msra.mxu0 0.0
    %2035 = vmatprep.subr.mxu0 0.0
    %2036 = vmatpush1.msra.mxu0 0.0
    %2037 = vmatprep.subr.mxu0 0.0
    %2038 = vmatpush1.msra.mxu0 0.0
    %2039 = vmatprep.subr.mxu0 0.0
    %2040 = vmatpush1.msra.mxu0 0.0
    %2041 = vmatprep.subr.mxu0 0.0
    %2042 = vmatpush1.msra.mxu0 0.0
    %2043 = vmatprep.subr.mxu0 0.0
    %2044 = vmatpush1.msra.mxu0 0.0
    %2045 = vmatprep.subr.mxu0 0.0
    %2046 = vmatpush1.msra.mxu0 0.0
    %2047 = vmatprep.subr.mxu0 0.0
    %2048 = vmatpush1.msra.mxu0 0.0
    %2049 = vmatprep.subr.mxu0 0.0
    %2050 = vmatpush1.msra.mxu0 0.0
    %2051 = vmatprep.mubr.f32.mxu0 0.0
    %2052 = vmatmul.mubr.f32.gmra.mrb[0].mxu0 %v1979
    %v2053 = vpop.f32.mrb[0].mxu0
    %v2054 = vadd.f32 0.0, %v2053
    %v2055 = vpop.f32.mrb[0].mxu0
    %2056 = vmatprep.mubr.f32.mxu0 0.0
    %2057 = vmatmul.mubr.f32.gmra.mrb[0].mxu0 %v1982
    %v2058 = vpop.f32.mrb[0].mxu0
    %v2059 = vadd.f32 0.0, %v2058
    %v2060 = vpop.f32.mrb[0].mxu0
    %2061 = vmatprep.mubr.f32.mxu0 0.0
    %2062 = vmatmul.mubr.f32.gmra.mrb[0].mxu0 %v1985
    %v2063 = vpop.f32.mrb[0].mxu0
    %v2064 = vadd.f32 0.0, %v2063
    %v2065 = vpop.f32.mrb[0].mxu0
    %2066 = vdwg.mxu0
    %2067 = vst.msk [vmem:[#allocation6] sm:$0xff] %vm214, %v1822
    %2068 = vst.msk [vmem:[#allocation6 + $0x8] sm:$0xff] %vm214, %v1823
    %2069 = vst.msk [vmem:[#allocation4] sm:$0xff] %vm214, %v2054
    %2070 = vst.msk [vmem:[#allocation4 + $0x8] sm:$0xff] %vm214, %v2059
    %vm2071 = vcmask 253952
    %2072 = vst.msk [vmem:[#allocation2] sm:$0x1] %vm2071, %v2064
    %vm2073 = vcmask 7168
    %2074 = vst.msk [vmem:[%s10] sm:$0xff] %vm2073, %v1938
    %2075 = vst.msk [vmem:[%s10 + $0x8] sm:$0xff] %vm2073, %v1953
    %vm2076 = vcmask 130048
    %2077 = vst.msk [vmem:[#allocation7] sm:$0xff] %vm2076, %v1825
    %2078 = vst.msk [vmem:[#allocation7 + $0x8] sm:$0xff] %vm2076, %v1826
    %vm2079 = vcmask 122880
    %2080 = vst.msk [vmem:[#allocation9] sm:$0x1] %vm2079, %v1827
    %s2081 = scalar_lea.vmem %s0, 16
    %v2082 = vld [vmem:[%s2081] sm:$0xff]
    %v2083 = vld [vmem:[%s2081 + $0x8] sm:$0xff]
    %v2084 = vpack.c.bf16 %v2083, %v2082
    %v2086 = vsel %vm155, %v2084, 0
    %2088 = vmatprep.subr.bf16.mxu0 0
    %2089 = vmatpush1.bf16.msra.mxu0 %v147
    %2090 = vmatprep.subr.bf16.mxu0 0
    %2091 = vmatpush1.bf16.msra.mxu0 %v148
    %2092 = vmatprep.subr.bf16.mxu0 0
    %2093 = vmatpush1.bf16.msra.mxu0 %v149
    %2094 = vmatprep.subr.bf16.mxu0 0
    %2095 = vmatpush1.bf16.msra.mxu0 %v150
    %2096 = vmatprep.subr.bf16.mxu0 0
    %2097 = vmatpush1.bf16.msra.mxu0 0
    %2098 = vmatprep.subr.bf16.mxu0 0
    %2099 = vmatpush1.bf16.msra.mxu0 0
    %2100 = vmatprep.subr.bf16.mxu0 0
    %2101 = vmatpush1.bf16.msra.mxu0 0
    %2102 = vmatprep.subr.bf16.mxu0 0
    %2103 = vmatpush1.bf16.msra.mxu0 0
    %2104 = vmatprep.subr.bf16.mxu0 0
    %2105 = vmatpush1.bf16.msra.mxu0 0
    %2106 = vmatprep.subr.bf16.mxu0 0
    %2107 = vmatpush1.bf16.msra.mxu0 0
    %2108 = vmatprep.subr.bf16.mxu0 0
    %2109 = vmatpush1.bf16.msra.mxu0 0
    %2110 = vmatprep.subr.bf16.mxu0 0
    %2111 = vmatpush1.bf16.msra.mxu0 0
    %2112 = vmatprep.subr.bf16.mxu0 0
    %2113 = vmatpush1.bf16.msra.mxu0 0
    %2114 = vmatprep.subr.bf16.mxu0 0
    %2115 = vmatpush1.bf16.msra.mxu0 0
    %2116 = vmatprep.subr.bf16.mxu0 0
    %2117 = vmatpush1.bf16.msra.mxu0 0
    %2118 = vmatprep.subr.bf16.mxu0 0
    %2119 = vmatpush1.bf16.msra.mxu0 0
    %2120 = vmatprep.mubr.bf16.mxu0 0
    %2121 = vmatmul.mubr.bf16.gmra.mrb[0].mxu0 %v2086
    %v2122 = vpop.f32.mrb[0].mxu0
    %v2123 = vadd.f32 %v44, %v2122
    %v2124 = vpop.f32.mrb[0].mxu0
    %v2125 = vpop.f32.mrb[0].mxu0
    %v2126 = vadd.f32 %v45, %v2125
    %v2127 = vpop.f32.mrb[0].mxu0
    %2128 = vdwg.mxu0
    %v2129 = vpack.c.bf16 %v2126, %v2123
    %v2131 = vsel %vm214, %v2129, 0
    %2133 = vmatprep.subr.bf16.mxu0 0
    %2134 = vmatpush1.bf16.msra.mxu0 %v210
    %2135 = vmatprep.subr.bf16.mxu0 0
    %2136 = vmatpush1.bf16.msra.mxu0 %v211
    %2137 = vmatprep.subr.bf16.mxu0 0
    %2138 = vmatpush1.bf16.msra.mxu0 0
    %2139 = vmatprep.subr.bf16.mxu0 0
    %2140 = vmatpush1.bf16.msra.mxu0 0
    %2141 = vmatprep.subr.bf16.mxu0 0
    %2142 = vmatpush1.bf16.msra.mxu0 0
    %2143 = vmatprep.subr.bf16.mxu0 0
    %2144 = vmatpush1.bf16.msra.mxu0 0
    %2145 = vmatprep.subr.bf16.mxu0 0
    %2146 = vmatpush1.bf16.msra.mxu0 0
    %2147 = vmatprep.subr.bf16.mxu0 0
    %2148 = vmatpush1.bf16.msra.mxu0 0
    %2149 = vmatprep.subr.bf16.mxu0 0
    %2150 = vmatpush1.bf16.msra.mxu0 0
    %2151 = vmatprep.subr.bf16.mxu0 0
    %2152 = vmatpush1.bf16.msra.mxu0 0
    %2153 = vmatprep.subr.bf16.mxu0 0
    %2154 = vmatpush1.bf16.msra.mxu0 0
    %2155 = vmatprep.subr.bf16.mxu0 0
    %2156 = vmatpush1.bf16.msra.mxu0 0
    %2157 = vmatprep.subr.bf16.mxu0 0
    %2158 = vmatpush1.bf16.msra.mxu0 0
    %2159 = vmatprep.subr.bf16.mxu0 0
    %2160 = vmatpush1.bf16.msra.mxu0 0
    %2161 = vmatprep.subr.bf16.mxu0 0
    %2162 = vmatpush1.bf16.msra.mxu0 0
    %2163 = vmatprep.subr.bf16.mxu0 0
    %2164 = vmatpush1.bf16.msra.mxu0 0
    %2165 = vmatprep.mubr.bf16.mxu0 0
    %2166 = vmatmul.mubr.bf16.gmra.mrb[0].mxu0 %v2131
    %v2167 = vpop.f32.mrb[0].mxu0
    %v2168 = vadd.f32 0.0, %v2167
    %v2169 = vpop.f32.mrb[0].mxu0
    %v2170 = vpop.f32.mrb[0].mxu0
    %v2171 = vadd.f32 0.0, %v2170
    %v2172 = vpop.f32.mrb[0].mxu0
    %2173 = vmatprep.mubr.bf16.mxu0 0
    %2174 = vmatmul.mubr.bf16.gmra.mrb[0].mxu0 %v219
    %v2175 = vpop.f32.mrb[0].mxu0
    %v2176 = vadd.f32 0.0, %v2175
    %v2177 = vpop.f32.mrb[0].mxu0
    %v2178 = vpop.f32.mrb[0].mxu0
    %v2179 = vpop.f32.mrb[0].mxu0
    %2180 = vdwg.mxu0
    %2181 = vmatprep.subr.bf16.mxu0 0
    %2182 = vmatpush1.bf16.msra.mxu0 %v277
    %2183 = vmatprep.subr.bf16.mxu0 0
    %2184 = vmatpush1.bf16.msra.mxu0 %v278
    %2185 = vmatprep.subr.bf16.mxu0 0
    %2186 = vmatpush1.bf16.msra.mxu0 0
    %2187 = vmatprep.subr.bf16.mxu0 0
    %2188 = vmatpush1.bf16.msra.mxu0 0
    %2189 = vmatprep.subr.bf16.mxu0 0
    %2190 = vmatpush1.bf16.msra.mxu0 0
    %2191 = vmatprep.subr.bf16.mxu0 0
    %2192 = vmatpush1.bf16.msra.mxu0 0
    %2193 = vmatprep.subr.bf16.mxu0 0
    %2194 = vmatpush1.bf16.msra.mxu0 0
    %2195 = vmatprep.subr.bf16.mxu0 0
    %2196 = vmatpush1.bf16.msra.mxu0 0
    %2197 = vmatprep.subr.bf16.mxu0 0
    %2198 = vmatpush1.bf16.msra.mxu0 0
    %2199 = vmatprep.subr.bf16.mxu0 0
    %2200 = vmatpush1.bf16.msra.mxu0 0
    %2201 = vmatprep.subr.bf16.mxu0 0
    %2202 = vmatpush1.bf16.msra.mxu0 0
    %2203 = vmatprep.subr.bf16.mxu0 0
    %2204 = vmatpush1.bf16.msra.mxu0 0
    %2205 = vmatprep.subr.bf16.mxu0 0
    %2206 = vmatpush1.bf16.msra.mxu0 0
    %2207 = vmatprep.subr.bf16.mxu0 0
    %2208 = vmatpush1.bf16.msra.mxu0 0
    %2209 = vmatprep.subr.bf16.mxu0 0
    %2210 = vmatpush1.bf16.msra.mxu0 0
    %2211 = vmatprep.subr.bf16.mxu0 0
    %2212 = vmatpush1.bf16.msra.mxu0 0
    %2213 = vmatprep.mubr.bf16.mxu0 0
    %2214 = vmatmul.mubr.bf16.gmra.mrb[0].mxu0 %v2131
    %v2215 = vpop.f32.mrb[0].mxu0
    %v2216 = vadd.f32 0.0, %v2215
    %v2217 = vpop.f32.mrb[0].mxu0
    %v2218 = vpop.f32.mrb[0].mxu0
    %v2219 = vadd.f32 0.0, %v2218
    %v2220 = vpop.f32.mrb[0].mxu0
    %2221 = vmatprep.mubr.bf16.mxu0 0
    %2222 = vmatmul.mubr.bf16.gmra.mrb[0].mxu0 %v219
    %v2223 = vpop.f32.mrb[0].mxu0
    %v2224 = vadd.f32 0.0, %v2223
    %v2225 = vpop.f32.mrb[0].mxu0
    %v2226 = vpop.f32.mrb[0].mxu0
    %v2227 = vpop.f32.mrb[0].mxu0
    %2228 = vdwg.mxu0
    %2229 = vmatprep.subr.bf16.mxu0 0
    %2230 = vmatpush1.bf16.msra.mxu0 %v337
    %2231 = vmatprep.subr.bf16.mxu0 0
    %2232 = vmatpush1.bf16.msra.mxu0 %v338
    %2233 = vmatprep.subr.bf16.mxu0 0
    %2234 = vmatpush1.bf16.msra.mxu0 0
    %2235 = vmatprep.subr.bf16.mxu0 0
    %2236 = vmatpush1.bf16.msra.mxu0 0
    %2237 = vmatprep.subr.bf16.mxu0 0
    %2238 = vmatpush1.bf16.msra.mxu0 0
    %2239 = vmatprep.subr.bf16.mxu0 0
    %2240 = vmatpush1.bf16.msra.mxu0 0
    %2241 = vmatprep.subr.bf16.mxu0 0
    %2242 = vmatpush1.bf16.msra.mxu0 0
    %2243 = vmatprep.subr.bf16.mxu0 0
    %2244 = vmatpush1.bf16.msra.mxu0 0
    %2245 = vmatprep.subr.bf16.mxu0 0
    %2246 = vmatpush1.bf16.msra.mxu0 0
    %2247 = vmatprep.subr.bf16.mxu0 0
    %2248 = vmatpush1.bf16.msra.mxu0 0
    %2249 = vmatprep.subr.bf16.mxu0 0
    %2250 = vmatpush1.bf16.msra.mxu0 0
    %2251 = vmatprep.subr.bf16.mxu0 0
    %2252 = vmatpush1.bf16.msra.mxu0 0
    %2253 = vmatprep.subr.bf16.mxu0 0
    %2254 = vmatpush1.bf16.msra.mxu0 0
    %2255 = vmatprep.subr.bf16.mxu0 0
    %2256 = vmatpush1.bf16.msra.mxu0 0
    %2257 = vmatprep.subr.bf16.mxu0 0
    %2258 = vmatpush1.bf16.msra.mxu0 0
    %2259 = vmatprep.subr.bf16.mxu0 0
    %2260 = vmatpush1.bf16.msra.mxu0 0
    %2261 = vmatprep.mubr.bf16.mxu0 0
    %2262 = vmatmul.mubr.bf16.gmra.mrb[0].mxu0 %v2131
    %v2263 = vpop.f32.mrb[0].mxu0
    %v2264 = vadd.f32 0.0, %v2263
    %v2265 = vpop.f32.mrb[0].mxu0
    %v2266 = vpop.f32.mrb[0].mxu0
    %v2267 = vadd.f32 0.0, %v2266
    %v2268 = vpop.f32.mrb[0].mxu0
    %2269 = vmatprep.mubr.bf16.mxu0 0
    %2270 = vmatmul.mubr.bf16.gmra.mrb[0].mxu0 %v219
    %v2271 = vpop.f32.mrb[0].mxu0
    %v2272 = vadd.f32 0.0, %v2271
    %v2273 = vpop.f32.mrb[0].mxu0
    %v2274 = vpop.f32.mrb[0].mxu0
    %v2275 = vpop.f32.mrb[0].mxu0
    %2276 = vdwg.mxu0
    %v2277 = vpack.c.bf16 %v2171, %v2168
    %v2278 = vpack.c.bf16 %v2176, %v2176
    %v2279 = vpack.c.bf16 %v2219, %v2216
    %v2280 = vpack.c.bf16 %v2224, %v2224
    %v2282 = vsel %vm393, %v2277, 0
    %v2285 = vsel %vm393, %v2278, 0
    %v2288 = vsel %vm393, %v2279, 0
    %v2291 = vsel %vm393, %v2280, 0
    %2293 = vmatprep.subr.bf16.mxu0 0
    %2294 = vmatpush1.bf16.xpose.msra.mxu0 %v2288
    %2295 = vmatprep.subr.bf16.mxu0 0
    %2296 = vmatpush1.bf16.xpose.msra.mxu0 %v2291
    %2297 = vmatprep.subr.bf16.mxu0 0
    %2298 = vmatpush1.bf16.xpose.msra.mxu0 0
    %2299 = vmatprep.subr.bf16.mxu0 0
    %2300 = vmatpush1.bf16.xpose.msra.mxu0 0
    %2301 = vmatprep.subr.bf16.mxu0 0
    %2302 = vmatpush1.bf16.xpose.msra.mxu0 0
    %2303 = vmatprep.subr.bf16.mxu0 0
    %2304 = vmatpush1.bf16.xpose.msra.mxu0 0
    %2305 = vmatprep.subr.bf16.mxu0 0
    %2306 = vmatpush1.bf16.xpose.msra.mxu0 0
    %2307 = vmatprep.subr.bf16.mxu0 0
    %2308 = vmatpush1.bf16.xpose.msra.mxu0 0
    %2309 = vmatprep.subr.bf16.mxu0 0
    %2310 = vmatpush1.bf16.xpose.msra.mxu0 0
    %2311 = vmatprep.subr.bf16.mxu0 0
    %2312 = vmatpush1.bf16.xpose.msra.mxu0 0
    %2313 = vmatprep.subr.bf16.mxu0 0
    %2314 = vmatpush1.bf16.xpose.msra.mxu0 0
    %2315 = vmatprep.subr.bf16.mxu0 0
    %2316 = vmatpush1.bf16.xpose.msra.mxu0 0
    %2317 = vmatprep.subr.bf16.mxu0 0
    %2318 = vmatpush1.bf16.xpose.msra.mxu0 0
    %2319 = vmatprep.subr.bf16.mxu0 0
    %2320 = vmatpush1.bf16.xpose.msra.mxu0 0
    %2321 = vmatprep.subr.bf16.mxu0 0
    %2322 = vmatpush1.bf16.xpose.msra.mxu0 0
    %2323 = vmatprep.subr.bf16.mxu0 0
    %2324 = vmatpush1.bf16.xpose.msra.mxu0 0
    %2325 = vmatprep.mubr.bf16.mxu0 0
    %2326 = vmatmul.mubr.bf16.gmra.mrb[0].mxu0 %v2282
    %v2327 = vpop.f32.mrb[0].mxu0
    %v2328 = vadd.f32 0.0, %v2327
    %v2329 = vpop.f32.mrb[0].mxu0
    %v2330 = vpop.f32.mrb[0].mxu0
    %v2331 = vadd.f32 0.0, %v2330
    %v2332 = vpop.f32.mrb[0].mxu0
    %2333 = vmatprep.mubr.bf16.mxu0 0
    %2334 = vmatmul.mubr.bf16.gmra.mrb[0].mxu0 %v2285
    %v2335 = vpop.f32.mrb[0].mxu0
    %v2336 = vadd.f32 0.0, %v2335
    %v2337 = vpop.f32.mrb[0].mxu0
    %v2338 = vpop.f32.mrb[0].mxu0
    %v2339 = vpop.f32.mrb[0].mxu0
    %2340 = vdwg.mxu0
    %v2341 = vsel %vm454, %v2328, -inf
    %2342 = vmax.xlane.f32.xlu0 %v2341
    %v2343 = vpop.xlane.xlu0 %2342
    %v2344 = vsel %vm454, %v2331, -inf
    %2345 = vmax.xlane.f32.xlu0 %v2344
    %v2346 = vpop.xlane.xlu0 %2345
    %v2347 = vsel %vm461, %v2336, -inf
    %2348 = vmax.xlane.f32.xlu0 %v2347
    %v2349 = vpop.xlane.xlu0 %2348
    %v2350 = vsub.f32 %v2328, %v2343
    %v2351 = vsub.f32 %v2331, %v2346
    %v2352 = vsub.f32 %v2336, %v2349
    %v2353 = vmul.f32 %v2350, 1.442695
    %v2354 = vpow.pop %v2353
    %v2355 = vmul.f32 %v2351, 1.442695
    %v2356 = vpow.pop %v2355
    %v2357 = vmul.f32 %v2352, 1.442695
    %v2358 = vpow.pop %v2357
    %v2359 = vsel %vm454, %v2354, 0.0
    %2360 = vadd.xlane.f32.xlu0 %v2359
    %v2361 = vpop.xlane.xlu0 %2360
    %v2362 = vsel %vm454, %v2356, 0.0
    %2363 = vadd.xlane.f32.xlu0 %v2362
    %v2364 = vpop.xlane.xlu0 %2363
    %v2365 = vsel %vm461, %v2358, 0.0
    %2366 = vadd.xlane.f32.xlu0 %v2365
    %v2367 = vpop.xlane.xlu0 %2366
    %v2368 = vrcp.pop %v2361
    %v2369 = vmul.f32 %v2354, %v2368
    %v2370 = vrcp.pop %v2364
    %v2371 = vmul.f32 %v2356, %v2370
    %v2372 = vrcp.pop %v2367
    %v2373 = vmul.f32 %v2358, %v2372
    %v2374 = vadd.f32 %v2369, 0.0
    %v2375 = vadd.f32 %v2371, 0.0
    %v2376 = vadd.f32 %v2373, 0.0
    %v2377 = vpack.c.bf16 %v2371, %v2369
    %v2378 = vpack.c.bf16 %v2373, %v2373
    %v2379 = vpack.c.bf16 %v2267, %v2264
    %v2380 = vpack.c.bf16 %v2272, %v2272
    %v2382 = vsel %vm454, %v2377, 0
    %v2385 = vsel %vm454, %v2378, 0
    %v2388 = vand.u32 %v2380, %v504
    %2390 = vmatprep.subr.bf16.mxu0 0
    %2391 = vmatpush1.bf16.msra.mxu0 %v2379
    %2392 = vmatprep.subr.bf16.mxu0 0
    %2393 = vmatpush1.bf16.msra.mxu0 %v2388
    %2394 = vmatprep.subr.bf16.mxu0 0
    %2395 = vmatpush1.bf16.msra.mxu0 0
    %2396 = vmatprep.subr.bf16.mxu0 0
    %2397 = vmatpush1.bf16.msra.mxu0 0
    %2398 = vmatprep.subr.bf16.mxu0 0
    %2399 = vmatpush1.bf16.msra.mxu0 0
    %2400 = vmatprep.subr.bf16.mxu0 0
    %2401 = vmatpush1.bf16.msra.mxu0 0
    %2402 = vmatprep.subr.bf16.mxu0 0
    %2403 = vmatpush1.bf16.msra.mxu0 0
    %2404 = vmatprep.subr.bf16.mxu0 0
    %2405 = vmatpush1.bf16.msra.mxu0 0
    %2406 = vmatprep.subr.bf16.mxu0 0
    %2407 = vmatpush1.bf16.msra.mxu0 0
    %2408 = vmatprep.subr.bf16.mxu0 0
    %2409 = vmatpush1.bf16.msra.mxu0 0
    %2410 = vmatprep.subr.bf16.mxu0 0
    %2411 = vmatpush1.bf16.msra.mxu0 0
    %2412 = vmatprep.subr.bf16.mxu0 0
    %2413 = vmatpush1.bf16.msra.mxu0 0
    %2414 = vmatprep.subr.bf16.mxu0 0
    %2415 = vmatpush1.bf16.msra.mxu0 0
    %2416 = vmatprep.subr.bf16.mxu0 0
    %2417 = vmatpush1.bf16.msra.mxu0 0
    %2418 = vmatprep.subr.bf16.mxu0 0
    %2419 = vmatpush1.bf16.msra.mxu0 0
    %2420 = vmatprep.subr.bf16.mxu0 0
    %2421 = vmatpush1.bf16.msra.mxu0 0
    %2422 = vmatprep.mubr.bf16.mxu0 0
    %2423 = vmatmul.mubr.bf16.gmra.mrb[0].mxu0 %v2382
    %v2424 = vpop.f32.mrb[0].mxu0
    %v2425 = vadd.f32 0.0, %v2424
    %v2426 = vpop.f32.mrb[0].mxu0
    %v2427 = vpop.f32.mrb[0].mxu0
    %v2428 = vadd.f32 0.0, %v2427
    %v2429 = vpop.f32.mrb[0].mxu0
    %2430 = vmatprep.mubr.bf16.mxu0 0
    %2431 = vmatmul.mubr.bf16.gmra.mrb[0].mxu0 %v2385
    %v2432 = vpop.f32.mrb[0].mxu0
    %v2433 = vadd.f32 0.0, %v2432
    %v2434 = vpop.f32.mrb[0].mxu0
    %v2435 = vpop.f32.mrb[0].mxu0
    %v2436 = vpop.f32.mrb[0].mxu0
    %2437 = vdwg.mxu0
    %v2438 = vpack.c.bf16 %v2428, %v2425
    %v2439 = vpack.c.bf16 %v2433, %v2433
    %2440 = vmatprep.subr.bf16.mxu0 0
    %2441 = vmatpush1.bf16.msra.mxu0 %v566
    %2442 = vmatprep.subr.bf16.mxu0 0
    %2443 = vmatpush1.bf16.msra.mxu0 %v567
    %2444 = vmatprep.subr.bf16.mxu0 0
    %2445 = vmatpush1.bf16.msra.mxu0 0
    %2446 = vmatprep.subr.bf16.mxu0 0
    %2447 = vmatpush1.bf16.msra.mxu0 0
    %2448 = vmatprep.subr.bf16.mxu0 0
    %2449 = vmatpush1.bf16.msra.mxu0 0
    %2450 = vmatprep.subr.bf16.mxu0 0
    %2451 = vmatpush1.bf16.msra.mxu0 0
    %2452 = vmatprep.subr.bf16.mxu0 0
    %2453 = vmatpush1.bf16.msra.mxu0 0
    %2454 = vmatprep.subr.bf16.mxu0 0
    %2455 = vmatpush1.bf16.msra.mxu0 0
    %2456 = vmatprep.subr.bf16.mxu0 0
    %2457 = vmatpush1.bf16.msra.mxu0 0
    %2458 = vmatprep.subr.bf16.mxu0 0
    %2459 = vmatpush1.bf16.msra.mxu0 0
    %2460 = vmatprep.subr.bf16.mxu0 0
    %2461 = vmatpush1.bf16.msra.mxu0 0
    %2462 = vmatprep.subr.bf16.mxu0 0
    %2463 = vmatpush1.bf16.msra.mxu0 0
    %2464 = vmatprep.subr.bf16.mxu0 0
    %2465 = vmatpush1.bf16.msra.mxu0 0
    %2466 = vmatprep.subr.bf16.mxu0 0
    %2467 = vmatpush1.bf16.msra.mxu0 0
    %2468 = vmatprep.subr.bf16.mxu0 0
    %2469 = vmatpush1.bf16.msra.mxu0 0
    %2470 = vmatprep.subr.bf16.mxu0 0
    %2471 = vmatpush1.bf16.msra.mxu0 0
    %2472 = vmatprep.mubr.bf16.mxu0 0
    %2473 = vmatmul.mubr.bf16.gmra.mrb[0].mxu0 %v2131
    %v2474 = vpop.f32.mrb[0].mxu0
    %v2475 = vadd.f32 0.0, %v2474
    %v2476 = vpop.f32.mrb[0].mxu0
    %v2477 = vpop.f32.mrb[0].mxu0
    %v2478 = vadd.f32 0.0, %v2477
    %v2479 = vpop.f32.mrb[0].mxu0
    %2480 = vmatprep.mubr.bf16.mxu0 0
    %2481 = vmatmul.mubr.bf16.gmra.mrb[0].mxu0 %v219
    %v2482 = vpop.f32.mrb[0].mxu0
    %v2483 = vadd.f32 0.0, %v2482
    %v2484 = vpop.f32.mrb[0].mxu0
    %v2485 = vpop.f32.mrb[0].mxu0
    %v2486 = vpop.f32.mrb[0].mxu0
    %2487 = vdwg.mxu0
    %2488 = vmatprep.subr.bf16.mxu0 0
    %2489 = vmatpush1.bf16.msra.mxu0 %v626
    %2490 = vmatprep.subr.bf16.mxu0 0
    %2491 = vmatpush1.bf16.msra.mxu0 %v627
    %2492 = vmatprep.subr.bf16.mxu0 0
    %2493 = vmatpush1.bf16.msra.mxu0 0
    %2494 = vmatprep.subr.bf16.mxu0 0
    %2495 = vmatpush1.bf16.msra.mxu0 0
    %2496 = vmatprep.subr.bf16.mxu0 0
    %2497 = vmatpush1.bf16.msra.mxu0 0
    %2498 = vmatprep.subr.bf16.mxu0 0
    %2499 = vmatpush1.bf16.msra.mxu0 0
    %2500 = vmatprep.subr.bf16.mxu0 0
    %2501 = vmatpush1.bf16.msra.mxu0 0
    %2502 = vmatprep.subr.bf16.mxu0 0
    %2503 = vmatpush1.bf16.msra.mxu0 0
    %2504 = vmatprep.subr.bf16.mxu0 0
    %2505 = vmatpush1.bf16.msra.mxu0 0
    %2506 = vmatprep.subr.bf16.mxu0 0
    %2507 = vmatpush1.bf16.msra.mxu0 0
    %2508 = vmatprep.subr.bf16.mxu0 0
    %2509 = vmatpush1.bf16.msra.mxu0 0
    %2510 = vmatprep.subr.bf16.mxu0 0
    %2511 = vmatpush1.bf16.msra.mxu0 0
    %2512 = vmatprep.subr.bf16.mxu0 0
    %2513 = vmatpush1.bf16.msra.mxu0 0
    %2514 = vmatprep.subr.bf16.mxu0 0
    %2515 = vmatpush1.bf16.msra.mxu0 0
    %2516 = vmatprep.subr.bf16.mxu0 0
    %2517 = vmatpush1.bf16.msra.mxu0 0
    %2518 = vmatprep.subr.bf16.mxu0 0
    %2519 = vmatpush1.bf16.msra.mxu0 0
    %2520 = vmatprep.mubr.bf16.mxu0 0
    %2521 = vmatmul.mubr.bf16.gmra.mrb[0].mxu0 %v2131
    %v2522 = vpop.f32.mrb[0].mxu0
    %v2523 = vadd.f32 0.0, %v2522
    %v2524 = vpop.f32.mrb[0].mxu0
    %v2525 = vpop.f32.mrb[0].mxu0
    %v2526 = vadd.f32 0.0, %v2525
    %v2527 = vpop.f32.mrb[0].mxu0
    %2528 = vmatprep.mubr.bf16.mxu0 0
    %2529 = vmatmul.mubr.bf16.gmra.mrb[0].mxu0 %v219
    %v2530 = vpop.f32.mrb[0].mxu0
    %v2531 = vadd.f32 0.0, %v2530
    %v2532 = vpop.f32.mrb[0].mxu0
    %v2533 = vpop.f32.mrb[0].mxu0
    %v2534 = vpop.f32.mrb[0].mxu0
    %2535 = vdwg.mxu0
    %2536 = vmatprep.subr.bf16.mxu0 0
    %2537 = vmatpush1.bf16.msra.mxu0 %v686
    %2538 = vmatprep.subr.bf16.mxu0 0
    %2539 = vmatpush1.bf16.msra.mxu0 %v687
    %2540 = vmatprep.subr.bf16.mxu0 0
    %2541 = vmatpush1.bf16.msra.mxu0 0
    %2542 = vmatprep.subr.bf16.mxu0 0
    %2543 = vmatpush1.bf16.msra.mxu0 0
    %2544 = vmatprep.subr.bf16.mxu0 0
    %2545 = vmatpush1.bf16.msra.mxu0 0
    %2546 = vmatprep.subr.bf16.mxu0 0
    %2547 = vmatpush1.bf16.msra.mxu0 0
    %2548 = vmatprep.subr.bf16.mxu0 0
    %2549 = vmatpush1.bf16.msra.mxu0 0
    %2550 = vmatprep.subr.bf16.mxu0 0
    %2551 = vmatpush1.bf16.msra.mxu0 0
    %2552 = vmatprep.subr.bf16.mxu0 0
    %2553 = vmatpush1.bf16.msra.mxu0 0
    %2554 = vmatprep.subr.bf16.mxu0 0
    %2555 = vmatpush1.bf16.msra.mxu0 0
    %2556 = vmatprep.subr.bf16.mxu0 0
    %2557 = vmatpush1.bf16.msra.mxu0 0
    %2558 = vmatprep.subr.bf16.mxu0 0
    %2559 = vmatpush1.bf16.msra.mxu0 0
    %2560 = vmatprep.subr.bf16.mxu0 0
    %2561 = vmatpush1.bf16.msra.mxu0 0
    %2562 = vmatprep.subr.bf16.mxu0 0
    %2563 = vmatpush1.bf16.msra.mxu0 0
    %2564 = vmatprep.subr.bf16.mxu0 0
    %2565 = vmatpush1.bf16.msra.mxu0 0
    %2566 = vmatprep.subr.bf16.mxu0 0
    %2567 = vmatpush1.bf16.msra.mxu0 0
    %2568 = vmatprep.mubr.bf16.mxu0 0
    %2569 = vmatmul.mubr.bf16.gmra.mrb[0].mxu0 %v2131
    %v2570 = vpop.f32.mrb[0].mxu0
    %v2571 = vadd.f32 0.0, %v2570
    %v2572 = vpop.f32.mrb[0].mxu0
    %v2573 = vpop.f32.mrb[0].mxu0
    %v2574 = vadd.f32 0.0, %v2573
    %v2575 = vpop.f32.mrb[0].mxu0
    %2576 = vmatprep.mubr.bf16.mxu0 0
    %2577 = vmatmul.mubr.bf16.gmra.mrb[0].mxu0 %v219
    %v2578 = vpop.f32.mrb[0].mxu0
    %v2579 = vadd.f32 0.0, %v2578
    %v2580 = vpop.f32.mrb[0].mxu0
    %v2581 = vpop.f32.mrb[0].mxu0
    %v2582 = vpop.f32.mrb[0].mxu0
    %2583 = vdwg.mxu0
    %v2584 = vpack.c.bf16 %v2478, %v2475
    %v2585 = vpack.c.bf16 %v2483, %v2483
    %v2586 = vpack.c.bf16 %v2526, %v2523
    %v2587 = vpack.c.bf16 %v2531, %v2531
    %v2589 = vsel %vm393, %v2584, 0
    %v2592 = vsel %vm393, %v2585, 0
    %v2595 = vsel %vm393, %v2586, 0
    %v2598 = vsel %vm393, %v2587, 0
    %2600 = vmatprep.subr.bf16.mxu0 0
    %2601 = vmatpush1.bf16.xpose.msra.mxu0 %v2595
    %2602 = vmatprep.subr.bf16.mxu0 0
    %2603 = vmatpush1.bf16.xpose.msra.mxu0 %v2598
    %2604 = vmatprep.subr.bf16.mxu0 0
    %2605 = vmatpush1.bf16.xpose.msra.mxu0 0
    %2606 = vmatprep.subr.bf16.mxu0 0
    %2607 = vmatpush1.bf16.xpose.msra.mxu0 0
    %2608 = vmatprep.subr.bf16.mxu0 0
    %2609 = vmatpush1.bf16.xpose.msra.mxu0 0
    %2610 = vmatprep.subr.bf16.mxu0 0
    %2611 = vmatpush1.bf16.xpose.msra.mxu0 0
    %2612 = vmatprep.subr.bf16.mxu0 0
    %2613 = vmatpush1.bf16.xpose.msra.mxu0 0
    %2614 = vmatprep.subr.bf16.mxu0 0
    %2615 = vmatpush1.bf16.xpose.msra.mxu0 0
    %2616 = vmatprep.subr.bf16.mxu0 0
    %2617 = vmatpush1.bf16.xpose.msra.mxu0 0
    %2618 = vmatprep.subr.bf16.mxu0 0
    %2619 = vmatpush1.bf16.xpose.msra.mxu0 0
    %2620 = vmatprep.subr.bf16.mxu0 0
    %2621 = vmatpush1.bf16.xpose.msra.mxu0 0
    %2622 = vmatprep.subr.bf16.mxu0 0
    %2623 = vmatpush1.bf16.xpose.msra.mxu0 0
    %2624 = vmatprep.subr.bf16.mxu0 0
    %2625 = vmatpush1.bf16.xpose.msra.mxu0 0
    %2626 = vmatprep.subr.bf16.mxu0 0
    %2627 = vmatpush1.bf16.xpose.msra.mxu0 0
    %2628 = vmatprep.subr.bf16.mxu0 0
    %2629 = vmatpush1.bf16.xpose.msra.mxu0 0
    %2630 = vmatprep.subr.bf16.mxu0 0
    %2631 = vmatpush1.bf16.xpose.msra.mxu0 0
    %2632 = vmatprep.mubr.bf16.mxu0 0
    %2633 = vmatmul.mubr.bf16.gmra.mrb[0].mxu0 %v2589
    %v2634 = vpop.f32.mrb[0].mxu0
    %v2635 = vadd.f32 0.0, %v2634
    %v2636 = vpop.f32.mrb[0].mxu0
    %v2637 = vpop.f32.mrb[0].mxu0
    %v2638 = vadd.f32 0.0, %v2637
    %v2639 = vpop.f32.mrb[0].mxu0
    %2640 = vmatprep.mubr.bf16.mxu0 0
    %2641 = vmatmul.mubr.bf16.gmra.mrb[0].mxu0 %v2592
    %v2642 = vpop.f32.mrb[0].mxu0
    %v2643 = vadd.f32 0.0, %v2642
    %v2644 = vpop.f32.mrb[0].mxu0
    %v2645 = vpop.f32.mrb[0].mxu0
    %v2646 = vpop.f32.mrb[0].mxu0
    %2647 = vdwg.mxu0
    %v2648 = vsel %vm454, %v2635, -inf
    %2649 = vmax.xlane.f32.xlu0 %v2648
    %v2650 = vpop.xlane.xlu0 %2649
    %v2651 = vsel %vm454, %v2638, -inf
    %2652 = vmax.xlane.f32.xlu0 %v2651
    %v2653 = vpop.xlane.xlu0 %2652
    %v2654 = vsel %vm461, %v2643, -inf
    %2655 = vmax.xlane.f32.xlu0 %v2654
    %v2656 = vpop.xlane.xlu0 %2655
    %v2657 = vsub.f32 %v2635, %v2650
    %v2658 = vsub.f32 %v2638, %v2653
    %v2659 = vsub.f32 %v2643, %v2656
    %v2660 = vmul.f32 %v2657, 1.442695
    %v2661 = vpow.pop %v2660
    %v2662 = vmul.f32 %v2658, 1.442695
    %v2663 = vpow.pop %v2662
    %v2664 = vmul.f32 %v2659, 1.442695
    %v2665 = vpow.pop %v2664
    %v2666 = vsel %vm454, %v2661, 0.0
    %2667 = vadd.xlane.f32.xlu0 %v2666
    %v2668 = vpop.xlane.xlu0 %2667
    %v2669 = vsel %vm454, %v2663, 0.0
    %2670 = vadd.xlane.f32.xlu0 %v2669
    %v2671 = vpop.xlane.xlu0 %2670
    %v2672 = vsel %vm461, %v2665, 0.0
    %2673 = vadd.xlane.f32.xlu0 %v2672
    %v2674 = vpop.xlane.xlu0 %2673
    %v2675 = vrcp.pop %v2668
    %v2676 = vmul.f32 %v2661, %v2675
    %v2677 = vrcp.pop %v2671
    %v2678 = vmul.f32 %v2663, %v2677
    %v2679 = vrcp.pop %v2674
    %v2680 = vmul.f32 %v2665, %v2679
    %v2681 = vadd.f32 %v2374, %v2676
    %v2682 = vadd.f32 %v2375, %v2678
    %v2683 = vadd.f32 %v2376, %v2680
    %v2684 = vpack.c.bf16 %v2678, %v2676
    %v2685 = vpack.c.bf16 %v2680, %v2680
    %v2686 = vpack.c.bf16 %v2574, %v2571
    %v2687 = vpack.c.bf16 %v2579, %v2579
    %v2689 = vsel %vm454, %v2684, 0
    %v2692 = vsel %vm454, %v2685, 0
    %v2695 = vand.u32 %v2687, %v504
    %2697 = vmatprep.subr.bf16.mxu0 0
    %2698 = vmatpush1.bf16.msra.mxu0 %v2686
    %2699 = vmatprep.subr.bf16.mxu0 0
    %2700 = vmatpush1.bf16.msra.mxu0 %v2695
    %2701 = vmatprep.subr.bf16.mxu0 0
    %2702 = vmatpush1.bf16.msra.mxu0 0
    %2703 = vmatprep.subr.bf16.mxu0 0
    %2704 = vmatpush1.bf16.msra.mxu0 0
    %2705 = vmatprep.subr.bf16.mxu0 0
    %2706 = vmatpush1.bf16.msra.mxu0 0
    %2707 = vmatprep.subr.bf16.mxu0 0
    %2708 = vmatpush1.bf16.msra.mxu0 0
    %2709 = vmatprep.subr.bf16.mxu0 0
    %2710 = vmatpush1.bf16.msra.mxu0 0
    %2711 = vmatprep.subr.bf16.mxu0 0
    %2712 = vmatpush1.bf16.msra.mxu0 0
    %2713 = vmatprep.subr.bf16.mxu0 0
    %2714 = vmatpush1.bf16.msra.mxu0 0
    %2715 = vmatprep.subr.bf16.mxu0 0
    %2716 = vmatpush1.bf16.msra.mxu0 0
    %2717 = vmatprep.subr.bf16.mxu0 0
    %2718 = vmatpush1.bf16.msra.mxu0 0
    %2719 = vmatprep.subr.bf16.mxu0 0
    %2720 = vmatpush1.bf16.msra.mxu0 0
    %2721 = vmatprep.subr.bf16.mxu0 0
    %2722 = vmatpush1.bf16.msra.mxu0 0
    %2723 = vmatprep.subr.bf16.mxu0 0
    %2724 = vmatpush1.bf16.msra.mxu0 0
    %2725 = vmatprep.subr.bf16.mxu0 0
    %2726 = vmatpush1.bf16.msra.mxu0 0
    %2727 = vmatprep.subr.bf16.mxu0 0
    %2728 = vmatpush1.bf16.msra.mxu0 0
    %2729 = vmatprep.mubr.bf16.mxu0 0
    %2730 = vmatmul.mubr.bf16.gmra.mrb[0].mxu0 %v2689
    %v2731 = vpop.f32.mrb[0].mxu0
    %v2732 = vadd.f32 0.0, %v2731
    %v2733 = vpop.f32.mrb[0].mxu0
    %v2734 = vpop.f32.mrb[0].mxu0
    %v2735 = vadd.f32 0.0, %v2734
    %v2736 = vpop.f32.mrb[0].mxu0
    %2737 = vmatprep.mubr.bf16.mxu0 0
    %2738 = vmatmul.mubr.bf16.gmra.mrb[0].mxu0 %v2692
    %v2739 = vpop.f32.mrb[0].mxu0
    %v2740 = vadd.f32 0.0, %v2739
    %v2741 = vpop.f32.mrb[0].mxu0
    %v2742 = vpop.f32.mrb[0].mxu0
    %v2743 = vpop.f32.mrb[0].mxu0
    %2744 = vdwg.mxu0
    %v2745 = vpack.c.bf16 %v2735, %v2732
    %v2746 = vpack.c.bf16 %v2740, %v2740
    %v2748 = vsel %vm393, %v2745, 0
    %v2751 = vsel %vm393, %v2746, 0
    %2753 = vmatprep.subr.bf16.mxu0 0
    %2754 = vmatpush1.bf16.msra.mxu0 %v909
    %2755 = vmatprep.subr.bf16.mxu0 0
    %2756 = vmatpush1.bf16.msra.mxu0 0
    %2757 = vmatprep.subr.bf16.mxu0 0
    %2758 = vmatpush1.bf16.msra.mxu0 0
    %2759 = vmatprep.subr.bf16.mxu0 0
    %2760 = vmatpush1.bf16.msra.mxu0 0
    %2761 = vmatprep.subr.bf16.mxu0 0
    %2762 = vmatpush1.bf16.msra.mxu0 0
    %2763 = vmatprep.subr.bf16.mxu0 0
    %2764 = vmatpush1.bf16.msra.mxu0 0
    %2765 = vmatprep.subr.bf16.mxu0 0
    %2766 = vmatpush1.bf16.msra.mxu0 0
    %2767 = vmatprep.subr.bf16.mxu0 0
    %2768 = vmatpush1.bf16.msra.mxu0 0
    %2769 = vmatprep.subr.bf16.mxu0 0
    %2770 = vmatpush1.bf16.msra.mxu0 0
    %2771 = vmatprep.subr.bf16.mxu0 0
    %2772 = vmatpush1.bf16.msra.mxu0 0
    %2773 = vmatprep.subr.bf16.mxu0 0
    %2774 = vmatpush1.bf16.msra.mxu0 0
    %2775 = vmatprep.subr.bf16.mxu0 0
    %2776 = vmatpush1.bf16.msra.mxu0 0
    %2777 = vmatprep.subr.bf16.mxu0 0
    %2778 = vmatpush1.bf16.msra.mxu0 0
    %2779 = vmatprep.subr.bf16.mxu0 0
    %2780 = vmatpush1.bf16.msra.mxu0 0
    %2781 = vmatprep.subr.bf16.mxu0 0
    %2782 = vmatpush1.bf16.msra.mxu0 0
    %2783 = vmatprep.subr.bf16.mxu0 0
    %2784 = vmatpush1.bf16.msra.mxu0 0
    %2785 = vmatprep.mubr.bf16.mxu0 0
    %2786 = vmatmul.mubr.bf16.gmra.mrb[0].mxu0 %v2748
    %v2787 = vpop.f32.mrb[0].mxu0
    %v2788 = vadd.f32 0.0, %v2787
    %v2789 = vpop.f32.mrb[0].mxu0
    %v2790 = vpop.f32.mrb[0].mxu0
    %v2791 = vadd.f32 0.0, %v2790
    %v2792 = vpop.f32.mrb[0].mxu0
    %2793 = vmatprep.mubr.bf16.mxu0 0
    %2794 = vmatmul.mubr.bf16.gmra.mrb[0].mxu0 %v2751
    %v2795 = vpop.f32.mrb[0].mxu0
    %v2796 = vadd.f32 0.0, %v2795
    %v2797 = vpop.f32.mrb[0].mxu0
    %v2798 = vpop.f32.mrb[0].mxu0
    %v2799 = vpop.f32.mrb[0].mxu0
    %2800 = vdwg.mxu0
    %v2802 = vsel %vm393, %v2438, 0
    %v2805 = vsel %vm393, %v2439, 0
    %2807 = vmatprep.subr.bf16.mxu0 0
    %2808 = vmatpush1.bf16.msra.mxu0 %v966
    %2809 = vmatprep.subr.bf16.mxu0 0
    %2810 = vmatpush1.bf16.msra.mxu0 0
    %2811 = vmatprep.subr.bf16.mxu0 0
    %2812 = vmatpush1.bf16.msra.mxu0 0
    %2813 = vmatprep.subr.bf16.mxu0 0
    %2814 = vmatpush1.bf16.msra.mxu0 0
    %2815 = vmatprep.subr.bf16.mxu0 0
    %2816 = vmatpush1.bf16.msra.mxu0 0
    %2817 = vmatprep.subr.bf16.mxu0 0
    %2818 = vmatpush1.bf16.msra.mxu0 0
    %2819 = vmatprep.subr.bf16.mxu0 0
    %2820 = vmatpush1.bf16.msra.mxu0 0
    %2821 = vmatprep.subr.bf16.mxu0 0
    %2822 = vmatpush1.bf16.msra.mxu0 0
    %2823 = vmatprep.subr.bf16.mxu0 0
    %2824 = vmatpush1.bf16.msra.mxu0 0
    %2825 = vmatprep.subr.bf16.mxu0 0
    %2826 = vmatpush1.bf16.msra.mxu0 0
    %2827 = vmatprep.subr.bf16.mxu0 0
    %2828 = vmatpush1.bf16.msra.mxu0 0
    %2829 = vmatprep.subr.bf16.mxu0 0
    %2830 = vmatpush1.bf16.msra.mxu0 0
    %2831 = vmatprep.subr.bf16.mxu0 0
    %2832 = vmatpush1.bf16.msra.mxu0 0
    %2833 = vmatprep.subr.bf16.mxu0 0
    %2834 = vmatpush1.bf16.msra.mxu0 0
    %2835 = vmatprep.subr.bf16.mxu0 0
    %2836 = vmatpush1.bf16.msra.mxu0 0
    %2837 = vmatprep.subr.bf16.mxu0 0
    %2838 = vmatpush1.bf16.msra.mxu0 0
    %2839 = vmatprep.mubr.bf16.mxu0 0
    %2840 = vmatmul.mubr.bf16.gmra.mrb[0].mxu0 %v2802
    %v2841 = vpop.f32.mrb[0].mxu0
    %v2842 = vadd.f32 %v2788, %v2841
    %v2843 = vpop.f32.mrb[0].mxu0
    %v2844 = vpop.f32.mrb[0].mxu0
    %v2845 = vadd.f32 %v2791, %v2844
    %v2846 = vpop.f32.mrb[0].mxu0
    %2847 = vmatprep.mubr.bf16.mxu0 0
    %2848 = vmatmul.mubr.bf16.gmra.mrb[0].mxu0 %v2805
    %v2849 = vpop.f32.mrb[0].mxu0
    %v2850 = vadd.f32 %v2796, %v2849
    %v2851 = vpop.f32.mrb[0].mxu0
    %v2852 = vpop.f32.mrb[0].mxu0
    %v2853 = vpop.f32.mrb[0].mxu0
    %2854 = vdwg.mxu0
    %2855 = vmatprep.subr.bf16.mxu0 0
    %2856 = vmatpush1.bf16.msra.mxu0 %v1024
    %2857 = vmatprep.subr.bf16.mxu0 0
    %2858 = vmatpush1.bf16.msra.mxu0 %v1025
    %2859 = vmatprep.subr.bf16.mxu0 0
    %2860 = vmatpush1.bf16.msra.mxu0 0
    %2861 = vmatprep.subr.bf16.mxu0 0
    %2862 = vmatpush1.bf16.msra.mxu0 0
    %2863 = vmatprep.subr.bf16.mxu0 0
    %2864 = vmatpush1.bf16.msra.mxu0 0
    %2865 = vmatprep.subr.bf16.mxu0 0
    %2866 = vmatpush1.bf16.msra.mxu0 0
    %2867 = vmatprep.subr.bf16.mxu0 0
    %2868 = vmatpush1.bf16.msra.mxu0 0
    %2869 = vmatprep.subr.bf16.mxu0 0
    %2870 = vmatpush1.bf16.msra.mxu0 0
    %2871 = vmatprep.subr.bf16.mxu0 0
    %2872 = vmatpush1.bf16.msra.mxu0 0
    %2873 = vmatprep.subr.bf16.mxu0 0
    %2874 = vmatpush1.bf16.msra.mxu0 0
    %2875 = vmatprep.subr.bf16.mxu0 0
    %2876 = vmatpush1.bf16.msra.mxu0 0
    %2877 = vmatprep.subr.bf16.mxu0 0
    %2878 = vmatpush1.bf16.msra.mxu0 0
    %2879 = vmatprep.subr.bf16.mxu0 0
    %2880 = vmatpush1.bf16.msra.mxu0 0
    %2881 = vmatprep.subr.bf16.mxu0 0
    %2882 = vmatpush1.bf16.msra.mxu0 0
    %2883 = vmatprep.subr.bf16.mxu0 0
    %2884 = vmatpush1.bf16.msra.mxu0 0
    %2885 = vmatprep.subr.bf16.mxu0 0
    %2886 = vmatpush1.bf16.msra.mxu0 0
    %2887 = vmatprep.mubr.bf16.mxu0 0
    %2888 = vmatmul.mubr.bf16.gmra.mrb[0].mxu0 %v2131
    %v2889 = vpop.f32.mrb[0].mxu0
    %v2890 = vadd.f32 0.0, %v2889
    %v2891 = vpop.f32.mrb[0].mxu0
    %v2892 = vpop.f32.mrb[0].mxu0
    %v2893 = vadd.f32 0.0, %v2892
    %v2894 = vpop.f32.mrb[0].mxu0
    %2895 = vmatprep.mubr.bf16.mxu0 0
    %2896 = vmatmul.mubr.bf16.gmra.mrb[0].mxu0 %v219
    %v2897 = vpop.f32.mrb[0].mxu0
    %v2898 = vadd.f32 0.0, %v2897
    %v2899 = vpop.f32.mrb[0].mxu0
    %v2900 = vpop.f32.mrb[0].mxu0
    %v2901 = vpop.f32.mrb[0].mxu0
    %2902 = vdwg.mxu0
    %2903 = vmatprep.subr.bf16.mxu0 0
    %2904 = vmatpush1.bf16.msra.mxu0 %v1084
    %2905 = vmatprep.subr.bf16.mxu0 0
    %2906 = vmatpush1.bf16.msra.mxu0 %v1085
    %2907 = vmatprep.subr.bf16.mxu0 0
    %2908 = vmatpush1.bf16.msra.mxu0 0
    %2909 = vmatprep.subr.bf16.mxu0 0
    %2910 = vmatpush1.bf16.msra.mxu0 0
    %2911 = vmatprep.subr.bf16.mxu0 0
    %2912 = vmatpush1.bf16.msra.mxu0 0
    %2913 = vmatprep.subr.bf16.mxu0 0
    %2914 = vmatpush1.bf16.msra.mxu0 0
    %2915 = vmatprep.subr.bf16.mxu0 0
    %2916 = vmatpush1.bf16.msra.mxu0 0
    %2917 = vmatprep.subr.bf16.mxu0 0
    %2918 = vmatpush1.bf16.msra.mxu0 0
    %2919 = vmatprep.subr.bf16.mxu0 0
    %2920 = vmatpush1.bf16.msra.mxu0 0
    %2921 = vmatprep.subr.bf16.mxu0 0
    %2922 = vmatpush1.bf16.msra.mxu0 0
    %2923 = vmatprep.subr.bf16.mxu0 0
    %2924 = vmatpush1.bf16.msra.mxu0 0
    %2925 = vmatprep.subr.bf16.mxu0 0
    %2926 = vmatpush1.bf16.msra.mxu0 0
    %2927 = vmatprep.subr.bf16.mxu0 0
    %2928 = vmatpush1.bf16.msra.mxu0 0
    %2929 = vmatprep.subr.bf16.mxu0 0
    %2930 = vmatpush1.bf16.msra.mxu0 0
    %2931 = vmatprep.subr.bf16.mxu0 0
    %2932 = vmatpush1.bf16.msra.mxu0 0
    %2933 = vmatprep.subr.bf16.mxu0 0
    %2934 = vmatpush1.bf16.msra.mxu0 0
    %2935 = vmatprep.mubr.bf16.mxu0 0
    %2936 = vmatmul.mubr.bf16.gmra.mrb[0].mxu0 %v2131
    %v2937 = vpop.f32.mrb[0].mxu0
    %v2938 = vadd.f32 0.0, %v2937
    %v2939 = vpop.f32.mrb[0].mxu0
    %v2940 = vpop.f32.mrb[0].mxu0
    %v2941 = vadd.f32 0.0, %v2940
    %v2942 = vpop.f32.mrb[0].mxu0
    %2943 = vmatprep.mubr.bf16.mxu0 0
    %2944 = vmatmul.mubr.bf16.gmra.mrb[0].mxu0 %v219
    %v2945 = vpop.f32.mrb[0].mxu0
    %v2946 = vadd.f32 0.0, %v2945
    %v2947 = vpop.f32.mrb[0].mxu0
    %v2948 = vpop.f32.mrb[0].mxu0
    %v2949 = vpop.f32.mrb[0].mxu0
    %2950 = vdwg.mxu0
    %2951 = vmatprep.subr.bf16.mxu0 0
    %2952 = vmatpush1.bf16.msra.mxu0 %v1144
    %2953 = vmatprep.subr.bf16.mxu0 0
    %2954 = vmatpush1.bf16.msra.mxu0 %v1145
    %2955 = vmatprep.subr.bf16.mxu0 0
    %2956 = vmatpush1.bf16.msra.mxu0 0
    %2957 = vmatprep.subr.bf16.mxu0 0
    %2958 = vmatpush1.bf16.msra.mxu0 0
    %2959 = vmatprep.subr.bf16.mxu0 0
    %2960 = vmatpush1.bf16.msra.mxu0 0
    %2961 = vmatprep.subr.bf16.mxu0 0
    %2962 = vmatpush1.bf16.msra.mxu0 0
    %2963 = vmatprep.subr.bf16.mxu0 0
    %2964 = vmatpush1.bf16.msra.mxu0 0
    %2965 = vmatprep.subr.bf16.mxu0 0
    %2966 = vmatpush1.bf16.msra.mxu0 0
    %2967 = vmatprep.subr.bf16.mxu0 0
    %2968 = vmatpush1.bf16.msra.mxu0 0
    %2969 = vmatprep.subr.bf16.mxu0 0
    %2970 = vmatpush1.bf16.msra.mxu0 0
    %2971 = vmatprep.subr.bf16.mxu0 0
    %2972 = vmatpush1.bf16.msra.mxu0 0
    %2973 = vmatprep.subr.bf16.mxu0 0
    %2974 = vmatpush1.bf16.msra.mxu0 0
    %2975 = vmatprep.subr.bf16.mxu0 0
    %2976 = vmatpush1.bf16.msra.mxu0 0
    %2977 = vmatprep.subr.bf16.mxu0 0
    %2978 = vmatpush1.bf16.msra.mxu0 0
    %2979 = vmatprep.subr.bf16.mxu0 0
    %2980 = vmatpush1.bf16.msra.mxu0 0
    %2981 = vmatprep.subr.bf16.mxu0 0
    %2982 = vmatpush1.bf16.msra.mxu0 0
    %2983 = vmatprep.mubr.bf16.mxu0 0
    %2984 = vmatmul.mubr.bf16.gmra.mrb[0].mxu0 %v2131
    %v2985 = vpop.f32.mrb[0].mxu0
    %v2986 = vadd.f32 0.0, %v2985
    %v2987 = vpop.f32.mrb[0].mxu0
    %v2988 = vpop.f32.mrb[0].mxu0
    %v2989 = vadd.f32 0.0, %v2988
    %v2990 = vpop.f32.mrb[0].mxu0
    %2991 = vmatprep.mubr.bf16.mxu0 0
    %2992 = vmatmul.mubr.bf16.gmra.mrb[0].mxu0 %v219
    %v2993 = vpop.f32.mrb[0].mxu0
    %v2994 = vadd.f32 0.0, %v2993
    %v2995 = vpop.f32.mrb[0].mxu0
    %v2996 = vpop.f32.mrb[0].mxu0
    %v2997 = vpop.f32.mrb[0].mxu0
    %2998 = vdwg.mxu0
    %v2999 = vpack.c.bf16 %v2893, %v2890
    %v3000 = vpack.c.bf16 %v2898, %v2898
    %v3001 = vpack.c.bf16 %v2941, %v2938
    %v3002 = vpack.c.bf16 %v2946, %v2946
    %v3004 = vsel %vm393, %v2999, 0
    %v3007 = vsel %vm393, %v3000, 0
    %v3010 = vsel %vm393, %v3001, 0
    %v3013 = vsel %vm393, %v3002, 0
    %3015 = vmatprep.subr.bf16.mxu0 0
    %3016 = vmatpush1.bf16.xpose.msra.mxu0 %v3010
    %3017 = vmatprep.subr.bf16.mxu0 0
    %3018 = vmatpush1.bf16.xpose.msra.mxu0 %v3013
    %3019 = vmatprep.subr.bf16.mxu0 0
    %3020 = vmatpush1.bf16.xpose.msra.mxu0 0
    %3021 = vmatprep.subr.bf16.mxu0 0
    %3022 = vmatpush1.bf16.xpose.msra.mxu0 0
    %3023 = vmatprep.subr.bf16.mxu0 0
    %3024 = vmatpush1.bf16.xpose.msra.mxu0 0
    %3025 = vmatprep.subr.bf16.mxu0 0
    %3026 = vmatpush1.bf16.xpose.msra.mxu0 0
    %3027 = vmatprep.subr.bf16.mxu0 0
    %3028 = vmatpush1.bf16.xpose.msra.mxu0 0
    %3029 = vmatprep.subr.bf16.mxu0 0
    %3030 = vmatpush1.bf16.xpose.msra.mxu0 0
    %3031 = vmatprep.subr.bf16.mxu0 0
    %3032 = vmatpush1.bf16.xpose.msra.mxu0 0
    %3033 = vmatprep.subr.bf16.mxu0 0
    %3034 = vmatpush1.bf16.xpose.msra.mxu0 0
    %3035 = vmatprep.subr.bf16.mxu0 0
    %3036 = vmatpush1.bf16.xpose.msra.mxu0 0
    %3037 = vmatprep.subr.bf16.mxu0 0
    %3038 = vmatpush1.bf16.xpose.msra.mxu0 0
    %3039 = vmatprep.subr.bf16.mxu0 0
    %3040 = vmatpush1.bf16.xpose.msra.mxu0 0
    %3041 = vmatprep.subr.bf16.mxu0 0
    %3042 = vmatpush1.bf16.xpose.msra.mxu0 0
    %3043 = vmatprep.subr.bf16.mxu0 0
    %3044 = vmatpush1.bf16.xpose.msra.mxu0 0
    %3045 = vmatprep.subr.bf16.mxu0 0
    %3046 = vmatpush1.bf16.xpose.msra.mxu0 0
    %3047 = vmatprep.mubr.bf16.mxu0 0
    %3048 = vmatmul.mubr.bf16.gmra.mrb[0].mxu0 %v3004
    %v3049 = vpop.f32.mrb[0].mxu0
    %v3050 = vadd.f32 0.0, %v3049
    %v3051 = vpop.f32.mrb[0].mxu0
    %v3052 = vpop.f32.mrb[0].mxu0
    %v3053 = vadd.f32 0.0, %v3052
    %v3054 = vpop.f32.mrb[0].mxu0
    %3055 = vmatprep.mubr.bf16.mxu0 0
    %3056 = vmatmul.mubr.bf16.gmra.mrb[0].mxu0 %v3007
    %v3057 = vpop.f32.mrb[0].mxu0
    %v3058 = vadd.f32 0.0, %v3057
    %v3059 = vpop.f32.mrb[0].mxu0
    %v3060 = vpop.f32.mrb[0].mxu0
    %v3061 = vpop.f32.mrb[0].mxu0
    %3062 = vdwg.mxu0
    %v3063 = vsel %vm454, %v3050, -inf
    %3064 = vmax.xlane.f32.xlu0 %v3063
    %v3065 = vpop.xlane.xlu0 %3064
    %v3066 = vsel %vm454, %v3053, -inf
    %3067 = vmax.xlane.f32.xlu0 %v3066
    %v3068 = vpop.xlane.xlu0 %3067
    %v3069 = vsel %vm461, %v3058, -inf
    %3070 = vmax.xlane.f32.xlu0 %v3069
    %v3071 = vpop.xlane.xlu0 %3070
    %v3072 = vsub.f32 %v3050, %v3065
    %v3073 = vsub.f32 %v3053, %v3068
    %v3074 = vsub.f32 %v3058, %v3071
    %v3075 = vmul.f32 %v3072, 1.442695
    %v3076 = vpow.pop %v3075
    %v3077 = vmul.f32 %v3073, 1.442695
    %v3078 = vpow.pop %v3077
    %v3079 = vmul.f32 %v3074, 1.442695
    %v3080 = vpow.pop %v3079
    %v3081 = vsel %vm454, %v3076, 0.0
    %3082 = vadd.xlane.f32.xlu0 %v3081
    %v3083 = vpop.xlane.xlu0 %3082
    %v3084 = vsel %vm454, %v3078, 0.0
    %3085 = vadd.xlane.f32.xlu0 %v3084
    %v3086 = vpop.xlane.xlu0 %3085
    %v3087 = vsel %vm461, %v3080, 0.0
    %3088 = vadd.xlane.f32.xlu0 %v3087
    %v3089 = vpop.xlane.xlu0 %3088
    %v3090 = vrcp.pop %v3083
    %v3091 = vmul.f32 %v3076, %v3090
    %v3092 = vrcp.pop %v3086
    %v3093 = vmul.f32 %v3078, %v3092
    %v3094 = vrcp.pop %v3089
    %v3095 = vmul.f32 %v3080, %v3094
    %v3096 = vadd.f32 %v2681, %v3091
    %v3097 = vadd.f32 %v2682, %v3093
    %v3098 = vadd.f32 %v2683, %v3095
    %v3099 = vpack.c.bf16 %v3093, %v3091
    %v3100 = vpack.c.bf16 %v3095, %v3095
    %v3101 = vpack.c.bf16 %v2989, %v2986
    %v3102 = vpack.c.bf16 %v2994, %v2994
    %v3104 = vsel %vm454, %v3099, 0
    %v3107 = vsel %vm454, %v3100, 0
    %v3110 = vand.u32 %v3102, %v504
    %3112 = vmatprep.subr.bf16.mxu0 0
    %3113 = vmatpush1.bf16.msra.mxu0 %v3101
    %3114 = vmatprep.subr.bf16.mxu0 0
    %3115 = vmatpush1.bf16.msra.mxu0 %v3110
    %3116 = vmatprep.subr.bf16.mxu0 0
    %3117 = vmatpush1.bf16.msra.mxu0 0
    %3118 = vmatprep.subr.bf16.mxu0 0
    %3119 = vmatpush1.bf16.msra.mxu0 0
    %3120 = vmatprep.subr.bf16.mxu0 0
    %3121 = vmatpush1.bf16.msra.mxu0 0
    %3122 = vmatprep.subr.bf16.mxu0 0
    %3123 = vmatpush1.bf16.msra.mxu0 0
    %3124 = vmatprep.subr.bf16.mxu0 0
    %3125 = vmatpush1.bf16.msra.mxu0 0
    %3126 = vmatprep.subr.bf16.mxu0 0
    %3127 = vmatpush1.bf16.msra.mxu0 0
    %3128 = vmatprep.subr.bf16.mxu0 0
    %3129 = vmatpush1.bf16.msra.mxu0 0
    %3130 = vmatprep.subr.bf16.mxu0 0
    %3131 = vmatpush1.bf16.msra.mxu0 0
    %3132 = vmatprep.subr.bf16.mxu0 0
    %3133 = vmatpush1.bf16.msra.mxu0 0
    %3134 = vmatprep.subr.bf16.mxu0 0
    %3135 = vmatpush1.bf16.msra.mxu0 0
    %3136 = vmatprep.subr.bf16.mxu0 0
    %3137 = vmatpush1.bf16.msra.mxu0 0
    %3138 = vmatprep.subr.bf16.mxu0 0
    %3139 = vmatpush1.bf16.msra.mxu0 0
    %3140 = vmatprep.subr.bf16.mxu0 0
    %3141 = vmatpush1.bf16.msra.mxu0 0
    %3142 = vmatprep.subr.bf16.mxu0 0
    %3143 = vmatpush1.bf16.msra.mxu0 0
    %3144 = vmatprep.mubr.bf16.mxu0 0
    %3145 = vmatmul.mubr.bf16.gmra.mrb[0].mxu0 %v3104
    %v3146 = vpop.f32.mrb[0].mxu0
    %v3147 = vadd.f32 0.0, %v3146
    %v3148 = vpop.f32.mrb[0].mxu0
    %v3149 = vpop.f32.mrb[0].mxu0
    %v3150 = vadd.f32 0.0, %v3149
    %v3151 = vpop.f32.mrb[0].mxu0
    %3152 = vmatprep.mubr.bf16.mxu0 0
    %3153 = vmatmul.mubr.bf16.gmra.mrb[0].mxu0 %v3107
    %v3154 = vpop.f32.mrb[0].mxu0
    %v3155 = vadd.f32 0.0, %v3154
    %v3156 = vpop.f32.mrb[0].mxu0
    %v3157 = vpop.f32.mrb[0].mxu0
    %v3158 = vpop.f32.mrb[0].mxu0
    %3159 = vdwg.mxu0
    %v3160 = vpack.c.bf16 %v3150, %v3147
    %v3161 = vpack.c.bf16 %v3155, %v3155
    %v3163 = vsel %vm393, %v3160, 0
    %v3166 = vsel %vm393, %v3161, 0
    %3168 = vmatprep.subr.bf16.mxu0 0
    %3169 = vmatpush1.bf16.msra.mxu0 %v1366
    %3170 = vmatprep.subr.bf16.mxu0 0
    %3171 = vmatpush1.bf16.msra.mxu0 0
    %3172 = vmatprep.subr.bf16.mxu0 0
    %3173 = vmatpush1.bf16.msra.mxu0 0
    %3174 = vmatprep.subr.bf16.mxu0 0
    %3175 = vmatpush1.bf16.msra.mxu0 0
    %3176 = vmatprep.subr.bf16.mxu0 0
    %3177 = vmatpush1.bf16.msra.mxu0 0
    %3178 = vmatprep.subr.bf16.mxu0 0
    %3179 = vmatpush1.bf16.msra.mxu0 0
    %3180 = vmatprep.subr.bf16.mxu0 0
    %3181 = vmatpush1.bf16.msra.mxu0 0
    %3182 = vmatprep.subr.bf16.mxu0 0
    %3183 = vmatpush1.bf16.msra.mxu0 0
    %3184 = vmatprep.subr.bf16.mxu0 0
    %3185 = vmatpush1.bf16.msra.mxu0 0
    %3186 = vmatprep.subr.bf16.mxu0 0
    %3187 = vmatpush1.bf16.msra.mxu0 0
    %3188 = vmatprep.subr.bf16.mxu0 0
    %3189 = vmatpush1.bf16.msra.mxu0 0
    %3190 = vmatprep.subr.bf16.mxu0 0
    %3191 = vmatpush1.bf16.msra.mxu0 0
    %3192 = vmatprep.subr.bf16.mxu0 0
    %3193 = vmatpush1.bf16.msra.mxu0 0
    %3194 = vmatprep.subr.bf16.mxu0 0
    %3195 = vmatpush1.bf16.msra.mxu0 0
    %3196 = vmatprep.subr.bf16.mxu0 0
    %3197 = vmatpush1.bf16.msra.mxu0 0
    %3198 = vmatprep.subr.bf16.mxu0 0
    %3199 = vmatpush1.bf16.msra.mxu0 0
    %3200 = vmatprep.mubr.bf16.mxu0 0
    %3201 = vmatmul.mubr.bf16.gmra.mrb[0].mxu0 %v3163
    %v3202 = vpop.f32.mrb[0].mxu0
    %v3203 = vadd.f32 0.0, %v3202
    %v3204 = vpop.f32.mrb[0].mxu0
    %v3205 = vpop.f32.mrb[0].mxu0
    %v3206 = vadd.f32 0.0, %v3205
    %v3207 = vpop.f32.mrb[0].mxu0
    %3208 = vmatprep.mubr.bf16.mxu0 0
    %3209 = vmatmul.mubr.bf16.gmra.mrb[0].mxu0 %v3166
    %v3210 = vpop.f32.mrb[0].mxu0
    %v3211 = vadd.f32 0.0, %v3210
    %v3212 = vpop.f32.mrb[0].mxu0
    %v3213 = vpop.f32.mrb[0].mxu0
    %v3214 = vpop.f32.mrb[0].mxu0
    %3215 = vdwg.mxu0
    %v3216 = vadd.f32 %v2842, %v3203
    %v3217 = vadd.f32 %v2845, %v3206
    %v3218 = vadd.f32 %v2850, %v3211
    %3219 = vmatprep.subr.bf16.mxu0 0
    %3220 = vmatpush1.bf16.msra.mxu0 %v1427
    %3221 = vmatprep.subr.bf16.mxu0 0
    %3222 = vmatpush1.bf16.msra.mxu0 %v1428
    %3223 = vmatprep.subr.bf16.mxu0 0
    %3224 = vmatpush1.bf16.msra.mxu0 0
    %3225 = vmatprep.subr.bf16.mxu0 0
    %3226 = vmatpush1.bf16.msra.mxu0 0
    %3227 = vmatprep.subr.bf16.mxu0 0
    %3228 = vmatpush1.bf16.msra.mxu0 0
    %3229 = vmatprep.subr.bf16.mxu0 0
    %3230 = vmatpush1.bf16.msra.mxu0 0
    %3231 = vmatprep.subr.bf16.mxu0 0
    %3232 = vmatpush1.bf16.msra.mxu0 0
    %3233 = vmatprep.subr.bf16.mxu0 0
    %3234 = vmatpush1.bf16.msra.mxu0 0
    %3235 = vmatprep.subr.bf16.mxu0 0
    %3236 = vmatpush1.bf16.msra.mxu0 0
    %3237 = vmatprep.subr.bf16.mxu0 0
    %3238 = vmatpush1.bf16.msra.mxu0 0
    %3239 = vmatprep.subr.bf16.mxu0 0
    %3240 = vmatpush1.bf16.msra.mxu0 0
    %3241 = vmatprep.subr.bf16.mxu0 0
    %3242 = vmatpush1.bf16.msra.mxu0 0
    %3243 = vmatprep.subr.bf16.mxu0 0
    %3244 = vmatpush1.bf16.msra.mxu0 0
    %3245 = vmatprep.subr.bf16.mxu0 0
    %3246 = vmatpush1.bf16.msra.mxu0 0
    %3247 = vmatprep.subr.bf16.mxu0 0
    %3248 = vmatpush1.bf16.msra.mxu0 0
    %3249 = vmatprep.subr.bf16.mxu0 0
    %3250 = vmatpush1.bf16.msra.mxu0 0
    %3251 = vmatprep.mubr.bf16.mxu0 0
    %3252 = vmatmul.mubr.bf16.gmra.mrb[0].mxu0 %v2131
    %v3253 = vpop.f32.mrb[0].mxu0
    %v3254 = vadd.f32 0.0, %v3253
    %v3255 = vpop.f32.mrb[0].mxu0
    %v3256 = vpop.f32.mrb[0].mxu0
    %v3257 = vadd.f32 0.0, %v3256
    %v3258 = vpop.f32.mrb[0].mxu0
    %3259 = vmatprep.mubr.bf16.mxu0 0
    %3260 = vmatmul.mubr.bf16.gmra.mrb[0].mxu0 %v219
    %v3261 = vpop.f32.mrb[0].mxu0
    %v3262 = vadd.f32 0.0, %v3261
    %v3263 = vpop.f32.mrb[0].mxu0
    %v3264 = vpop.f32.mrb[0].mxu0
    %v3265 = vpop.f32.mrb[0].mxu0
    %3266 = vdwg.mxu0
    %3267 = vmatprep.subr.bf16.mxu0 0
    %3268 = vmatpush1.bf16.msra.mxu0 %v1487
    %3269 = vmatprep.subr.bf16.mxu0 0
    %3270 = vmatpush1.bf16.msra.mxu0 %v1488
    %3271 = vmatprep.subr.bf16.mxu0 0
    %3272 = vmatpush1.bf16.msra.mxu0 0
    %3273 = vmatprep.subr.bf16.mxu0 0
    %3274 = vmatpush1.bf16.msra.mxu0 0
    %3275 = vmatprep.subr.bf16.mxu0 0
    %3276 = vmatpush1.bf16.msra.mxu0 0
    %3277 = vmatprep.subr.bf16.mxu0 0
    %3278 = vmatpush1.bf16.msra.mxu0 0
    %3279 = vmatprep.subr.bf16.mxu0 0
    %3280 = vmatpush1.bf16.msra.mxu0 0
    %3281 = vmatprep.subr.bf16.mxu0 0
    %3282 = vmatpush1.bf16.msra.mxu0 0
    %3283 = vmatprep.subr.bf16.mxu0 0
    %3284 = vmatpush1.bf16.msra.mxu0 0
    %3285 = vmatprep.subr.bf16.mxu0 0
    %3286 = vmatpush1.bf16.msra.mxu0 0
    %3287 = vmatprep.subr.bf16.mxu0 0
    %3288 = vmatpush1.bf16.msra.mxu0 0
    %3289 = vmatprep.subr.bf16.mxu0 0
    %3290 = vmatpush1.bf16.msra.mxu0 0
    %3291 = vmatprep.subr.bf16.mxu0 0
    %3292 = vmatpush1.bf16.msra.mxu0 0
    %3293 = vmatprep.subr.bf16.mxu0 0
    %3294 = vmatpush1.bf16.msra.mxu0 0
    %3295 = vmatprep.subr.bf16.mxu0 0
    %3296 = vmatpush1.bf16.msra.mxu0 0
    %3297 = vmatprep.subr.bf16.mxu0 0
    %3298 = vmatpush1.bf16.msra.mxu0 0
    %3299 = vmatprep.mubr.bf16.mxu0 0
    %3300 = vmatmul.mubr.bf16.gmra.mrb[0].mxu0 %v2131
    %v3301 = vpop.f32.mrb[0].mxu0
    %v3302 = vadd.f32 0.0, %v3301
    %v3303 = vpop.f32.mrb[0].mxu0
    %v3304 = vpop.f32.mrb[0].mxu0
    %v3305 = vadd.f32 0.0, %v3304
    %v3306 = vpop.f32.mrb[0].mxu0
    %3307 = vmatprep.mubr.bf16.mxu0 0
    %3308 = vmatmul.mubr.bf16.gmra.mrb[0].mxu0 %v219
    %v3309 = vpop.f32.mrb[0].mxu0
    %v3310 = vadd.f32 0.0, %v3309
    %v3311 = vpop.f32.mrb[0].mxu0
    %v3312 = vpop.f32.mrb[0].mxu0
    %v3313 = vpop.f32.mrb[0].mxu0
    %3314 = vdwg.mxu0
    %3315 = vmatprep.subr.bf16.mxu0 0
    %3316 = vmatpush1.bf16.msra.mxu0 %v1547
    %3317 = vmatprep.subr.bf16.mxu0 0
    %3318 = vmatpush1.bf16.msra.mxu0 %v1548
    %3319 = vmatprep.subr.bf16.mxu0 0
    %3320 = vmatpush1.bf16.msra.mxu0 0
    %3321 = vmatprep.subr.bf16.mxu0 0
    %3322 = vmatpush1.bf16.msra.mxu0 0
    %3323 = vmatprep.subr.bf16.mxu0 0
    %3324 = vmatpush1.bf16.msra.mxu0 0
    %3325 = vmatprep.subr.bf16.mxu0 0
    %3326 = vmatpush1.bf16.msra.mxu0 0
    %3327 = vmatprep.subr.bf16.mxu0 0
    %3328 = vmatpush1.bf16.msra.mxu0 0
    %3329 = vmatprep.subr.bf16.mxu0 0
    %3330 = vmatpush1.bf16.msra.mxu0 0
    %3331 = vmatprep.subr.bf16.mxu0 0
    %3332 = vmatpush1.bf16.msra.mxu0 0
    %3333 = vmatprep.subr.bf16.mxu0 0
    %3334 = vmatpush1.bf16.msra.mxu0 0
    %3335 = vmatprep.subr.bf16.mxu0 0
    %3336 = vmatpush1.bf16.msra.mxu0 0
    %3337 = vmatprep.subr.bf16.mxu0 0
    %3338 = vmatpush1.bf16.msra.mxu0 0
    %3339 = vmatprep.subr.bf16.mxu0 0
    %3340 = vmatpush1.bf16.msra.mxu0 0
    %3341 = vmatprep.subr.bf16.mxu0 0
    %3342 = vmatpush1.bf16.msra.mxu0 0
    %3343 = vmatprep.subr.bf16.mxu0 0
    %3344 = vmatpush1.bf16.msra.mxu0 0
    %3345 = vmatprep.subr.bf16.mxu0 0
    %3346 = vmatpush1.bf16.msra.mxu0 0
    %3347 = vmatprep.mubr.bf16.mxu0 0
    %3348 = vmatmul.mubr.bf16.gmra.mrb[0].mxu0 %v2131
    %v3349 = vpop.f32.mrb[0].mxu0
    %v3350 = vadd.f32 0.0, %v3349
    %v3351 = vpop.f32.mrb[0].mxu0
    %v3352 = vpop.f32.mrb[0].mxu0
    %v3353 = vadd.f32 0.0, %v3352
    %v3354 = vpop.f32.mrb[0].mxu0
    %3355 = vmatprep.mubr.bf16.mxu0 0
    %3356 = vmatmul.mubr.bf16.gmra.mrb[0].mxu0 %v219
    %v3357 = vpop.f32.mrb[0].mxu0
    %v3358 = vadd.f32 0.0, %v3357
    %v3359 = vpop.f32.mrb[0].mxu0
    %v3360 = vpop.f32.mrb[0].mxu0
    %v3361 = vpop.f32.mrb[0].mxu0
    %3362 = vdwg.mxu0
    %v3363 = vpack.c.bf16 %v3257, %v3254
    %v3364 = vpack.c.bf16 %v3262, %v3262
    %v3365 = vpack.c.bf16 %v3305, %v3302
    %v3366 = vpack.c.bf16 %v3310, %v3310
    %v3368 = vsel %vm393, %v3363, 0
    %v3371 = vsel %vm393, %v3364, 0
    %v3374 = vsel %vm393, %v3365, 0
    %v3377 = vsel %vm393, %v3366, 0
    %3379 = vmatprep.subr.bf16.mxu0 0
    %3380 = vmatpush1.bf16.xpose.msra.mxu0 %v3374
    %3381 = vmatprep.subr.bf16.mxu0 0
    %3382 = vmatpush1.bf16.xpose.msra.mxu0 %v3377
    %3383 = vmatprep.subr.bf16.mxu0 0
    %3384 = vmatpush1.bf16.xpose.msra.mxu0 0
    %3385 = vmatprep.subr.bf16.mxu0 0
    %3386 = vmatpush1.bf16.xpose.msra.mxu0 0
    %3387 = vmatprep.subr.bf16.mxu0 0
    %3388 = vmatpush1.bf16.xpose.msra.mxu0 0
    %3389 = vmatprep.subr.bf16.mxu0 0
    %3390 = vmatpush1.bf16.xpose.msra.mxu0 0
    %3391 = vmatprep.subr.bf16.mxu0 0
    %3392 = vmatpush1.bf16.xpose.msra.mxu0 0
    %3393 = vmatprep.subr.bf16.mxu0 0
    %3394 = vmatpush1.bf16.xpose.msra.mxu0 0
    %3395 = vmatprep.subr.bf16.mxu0 0
    %3396 = vmatpush1.bf16.xpose.msra.mxu0 0
    %3397 = vmatprep.subr.bf16.mxu0 0
    %3398 = vmatpush1.bf16.xpose.msra.mxu0 0
    %3399 = vmatprep.subr.bf16.mxu0 0
    %3400 = vmatpush1.bf16.xpose.msra.mxu0 0
    %3401 = vmatprep.subr.bf16.mxu0 0
    %3402 = vmatpush1.bf16.xpose.msra.mxu0 0
    %3403 = vmatprep.subr.bf16.mxu0 0
    %3404 = vmatpush1.bf16.xpose.msra.mxu0 0
    %3405 = vmatprep.subr.bf16.mxu0 0
    %3406 = vmatpush1.bf16.xpose.msra.mxu0 0
    %3407 = vmatprep.subr.bf16.mxu0 0
    %3408 = vmatpush1.bf16.xpose.msra.mxu0 0
    %3409 = vmatprep.subr.bf16.mxu0 0
    %3410 = vmatpush1.bf16.xpose.msra.mxu0 0
    %3411 = vmatprep.mubr.bf16.mxu0 0
    %3412 = vmatmul.mubr.bf16.gmra.mrb[0].mxu0 %v3368
    %v3413 = vpop.f32.mrb[0].mxu0
    %v3414 = vadd.f32 0.0, %v3413
    %v3415 = vpop.f32.mrb[0].mxu0
    %v3416 = vpop.f32.mrb[0].mxu0
    %v3417 = vadd.f32 0.0, %v3416
    %v3418 = vpop.f32.mrb[0].mxu0
    %3419 = vmatprep.mubr.bf16.mxu0 0
    %3420 = vmatmul.mubr.bf16.gmra.mrb[0].mxu0 %v3371
    %v3421 = vpop.f32.mrb[0].mxu0
    %v3422 = vadd.f32 0.0, %v3421
    %v3423 = vpop.f32.mrb[0].mxu0
    %v3424 = vpop.f32.mrb[0].mxu0
    %v3425 = vpop.f32.mrb[0].mxu0
    %3426 = vdwg.mxu0
    %v3427 = vsel %vm454, %v3414, -inf
    %3428 = vmax.xlane.f32.xlu0 %v3427
    %v3429 = vpop.xlane.xlu0 %3428
    %v3430 = vsel %vm454, %v3417, -inf
    %3431 = vmax.xlane.f32.xlu0 %v3430
    %v3432 = vpop.xlane.xlu0 %3431
    %v3433 = vsel %vm461, %v3422, -inf
    %3434 = vmax.xlane.f32.xlu0 %v3433
    %v3435 = vpop.xlane.xlu0 %3434
    %v3436 = vsub.f32 %v3414, %v3429
    %v3437 = vsub.f32 %v3417, %v3432
    %v3438 = vsub.f32 %v3422, %v3435
    %v3439 = vmul.f32 %v3436, 1.442695
    %v3440 = vpow.pop %v3439
    %v3441 = vmul.f32 %v3437, 1.442695
    %v3442 = vpow.pop %v3441
    %v3443 = vmul.f32 %v3438, 1.442695
    %v3444 = vpow.pop %v3443
    %v3445 = vsel %vm454, %v3440, 0.0
    %3446 = vadd.xlane.f32.xlu0 %v3445
    %v3447 = vpop.xlane.xlu0 %3446
    %v3448 = vsel %vm454, %v3442, 0.0
    %3449 = vadd.xlane.f32.xlu0 %v3448
    %v3450 = vpop.xlane.xlu0 %3449
    %v3451 = vsel %vm461, %v3444, 0.0
    %3452 = vadd.xlane.f32.xlu0 %v3451
    %v3453 = vpop.xlane.xlu0 %3452
    %v3454 = vrcp.pop %v3447
    %v3455 = vmul.f32 %v3440, %v3454
    %v3456 = vrcp.pop %v3450
    %v3457 = vmul.f32 %v3442, %v3456
    %v3458 = vrcp.pop %v3453
    %v3459 = vmul.f32 %v3444, %v3458
    %v3460 = vadd.f32 %v3096, %v3455
    %v3461 = vadd.f32 %v3097, %v3457
    %v3462 = vadd.f32 %v3098, %v3459
    %v3463 = vpack.c.bf16 %v3457, %v3455
    %v3464 = vpack.c.bf16 %v3459, %v3459
    %v3465 = vpack.c.bf16 %v3353, %v3350
    %v3466 = vpack.c.bf16 %v3358, %v3358
    %v3468 = vsel %vm454, %v3463, 0
    %v3471 = vsel %vm454, %v3464, 0
    %v3474 = vand.u32 %v3466, %v504
    %3476 = vmatprep.subr.bf16.mxu0 0
    %3477 = vmatpush1.bf16.msra.mxu0 %v3465
    %3478 = vmatprep.subr.bf16.mxu0 0
    %3479 = vmatpush1.bf16.msra.mxu0 %v3474
    %3480 = vmatprep.subr.bf16.mxu0 0
    %3481 = vmatpush1.bf16.msra.mxu0 0
    %3482 = vmatprep.subr.bf16.mxu0 0
    %3483 = vmatpush1.bf16.msra.mxu0 0
    %3484 = vmatprep.subr.bf16.mxu0 0
    %3485 = vmatpush1.bf16.msra.mxu0 0
    %3486 = vmatprep.subr.bf16.mxu0 0
    %3487 = vmatpush1.bf16.msra.mxu0 0
    %3488 = vmatprep.subr.bf16.mxu0 0
    %3489 = vmatpush1.bf16.msra.mxu0 0
    %3490 = vmatprep.subr.bf16.mxu0 0
    %3491 = vmatpush1.bf16.msra.mxu0 0
    %3492 = vmatprep.subr.bf16.mxu0 0
    %3493 = vmatpush1.bf16.msra.mxu0 0
    %3494 = vmatprep.subr.bf16.mxu0 0
    %3495 = vmatpush1.bf16.msra.mxu0 0
    %3496 = vmatprep.subr.bf16.mxu0 0
    %3497 = vmatpush1.bf16.msra.mxu0 0
    %3498 = vmatprep.subr.bf16.mxu0 0
    %3499 = vmatpush1.bf16.msra.mxu0 0
    %3500 = vmatprep.subr.bf16.mxu0 0
    %3501 = vmatpush1.bf16.msra.mxu0 0
    %3502 = vmatprep.subr.bf16.mxu0 0
    %3503 = vmatpush1.bf16.msra.mxu0 0
    %3504 = vmatprep.subr.bf16.mxu0 0
    %3505 = vmatpush1.bf16.msra.mxu0 0
    %3506 = vmatprep.subr.bf16.mxu0 0
    %3507 = vmatpush1.bf16.msra.mxu0 0
    %3508 = vmatprep.mubr.bf16.mxu0 0
    %3509 = vmatmul.mubr.bf16.gmra.mrb[0].mxu0 %v3468
    %v3510 = vpop.f32.mrb[0].mxu0
    %v3511 = vadd.f32 0.0, %v3510
    %v3512 = vpop.f32.mrb[0].mxu0
    %v3513 = vpop.f32.mrb[0].mxu0
    %v3514 = vadd.f32 0.0, %v3513
    %v3515 = vpop.f32.mrb[0].mxu0
    %3516 = vmatprep.mubr.bf16.mxu0 0
    %3517 = vmatmul.mubr.bf16.gmra.mrb[0].mxu0 %v3471
    %v3518 = vpop.f32.mrb[0].mxu0
    %v3519 = vadd.f32 0.0, %v3518
    %v3520 = vpop.f32.mrb[0].mxu0
    %v3521 = vpop.f32.mrb[0].mxu0
    %v3522 = vpop.f32.mrb[0].mxu0
    %3523 = vdwg.mxu0
    %v3524 = vpack.c.bf16 %v3514, %v3511
    %v3525 = vpack.c.bf16 %v3519, %v3519
    %v3527 = vsel %vm393, %v3524, 0
    %v3530 = vsel %vm393, %v3525, 0
    %3532 = vmatprep.subr.bf16.mxu0 0
    %3533 = vmatpush1.bf16.msra.mxu0 %v1769
    %3534 = vmatprep.subr.bf16.mxu0 0
    %3535 = vmatpush1.bf16.msra.mxu0 0
    %3536 = vmatprep.subr.bf16.mxu0 0
    %3537 = vmatpush1.bf16.msra.mxu0 0
    %3538 = vmatprep.subr.bf16.mxu0 0
    %3539 = vmatpush1.bf16.msra.mxu0 0
    %3540 = vmatprep.subr.bf16.mxu0 0
    %3541 = vmatpush1.bf16.msra.mxu0 0
    %3542 = vmatprep.subr.bf16.mxu0 0
    %3543 = vmatpush1.bf16.msra.mxu0 0
    %3544 = vmatprep.subr.bf16.mxu0 0
    %3545 = vmatpush1.bf16.msra.mxu0 0
    %3546 = vmatprep.subr.bf16.mxu0 0
    %3547 = vmatpush1.bf16.msra.mxu0 0
    %3548 = vmatprep.subr.bf16.mxu0 0
    %3549 = vmatpush1.bf16.msra.mxu0 0
    %3550 = vmatprep.subr.bf16.mxu0 0
    %3551 = vmatpush1.bf16.msra.mxu0 0
    %3552 = vmatprep.subr.bf16.mxu0 0
    %3553 = vmatpush1.bf16.msra.mxu0 0
    %3554 = vmatprep.subr.bf16.mxu0 0
    %3555 = vmatpush1.bf16.msra.mxu0 0
    %3556 = vmatprep.subr.bf16.mxu0 0
    %3557 = vmatpush1.bf16.msra.mxu0 0
    %3558 = vmatprep.subr.bf16.mxu0 0
    %3559 = vmatpush1.bf16.msra.mxu0 0
    %3560 = vmatprep.subr.bf16.mxu0 0
    %3561 = vmatpush1.bf16.msra.mxu0 0
    %3562 = vmatprep.subr.bf16.mxu0 0
    %3563 = vmatpush1.bf16.msra.mxu0 0
    %3564 = vmatprep.mubr.bf16.mxu0 0
    %3565 = vmatmul.mubr.bf16.gmra.mrb[0].mxu0 %v3527
    %v3566 = vpop.f32.mrb[0].mxu0
    %v3567 = vadd.f32 0.0, %v3566
    %v3568 = vpop.f32.mrb[0].mxu0
    %v3569 = vpop.f32.mrb[0].mxu0
    %v3570 = vadd.f32 0.0, %v3569
    %v3571 = vpop.f32.mrb[0].mxu0
    %3572 = vmatprep.mubr.bf16.mxu0 0
    %3573 = vmatmul.mubr.bf16.gmra.mrb[0].mxu0 %v3530
    %v3574 = vpop.f32.mrb[0].mxu0
    %v3575 = vadd.f32 0.0, %v3574
    %v3576 = vpop.f32.mrb[0].mxu0
    %v3577 = vpop.f32.mrb[0].mxu0
    %v3578 = vpop.f32.mrb[0].mxu0
    %3579 = vdwg.mxu0
    %v3580 = vadd.f32 %v3216, %v3567
    %v3581 = vadd.f32 %v3217, %v3570
    %v3582 = vadd.f32 %v3218, %v3575
    %v3583 = vadd.f32 %v2123, %v3580
    %v3584 = vadd.f32 %v2126, %v3581
    %v3585 = vadd.f32 %v46, %v3582
    %v3586 = vmul.f32 %v3460, 0.25
    %v3587 = vmul.f32 %v3461, 0.25
    %v3588 = vmul.f32 %v3462, 0.25
    %v3589 = vpack.c.bf16 %v3584, %v3583
    %v3590 = vpack.c.bf16 %v3585, %v3585
    %v3592 = vsel %vm214, %v3589, 0
    %v3595 = vsel %vm214, %v3590, 0
    %3597 = vmatprep.subr.bf16.mxu0 0
    %3598 = vmatpush1.bf16.xpose.msra.mxu0 %v1837
    %3599 = vmatprep.subr.bf16.mxu0 0
    %3600 = vmatpush1.bf16.xpose.msra.mxu0 %v1840
    %3601 = vmatprep.subr.bf16.mxu0 0
    %3602 = vmatpush1.bf16.xpose.msra.mxu0 %v1843
    %3603 = vmatprep.subr.bf16.mxu0 0
    %3604 = vmatpush1.bf16.xpose.msra.mxu0 %v1846
    %3605 = vmatprep.subr.bf16.mxu0 0
    %3606 = vmatpush1.bf16.xpose.msra.mxu0 0
    %3607 = vmatprep.subr.bf16.mxu0 0
    %3608 = vmatpush1.bf16.xpose.msra.mxu0 0
    %3609 = vmatprep.subr.bf16.mxu0 0
    %3610 = vmatpush1.bf16.xpose.msra.mxu0 0
    %3611 = vmatprep.subr.bf16.mxu0 0
    %3612 = vmatpush1.bf16.xpose.msra.mxu0 0
    %3613 = vmatprep.subr.bf16.mxu0 0
    %3614 = vmatpush1.bf16.xpose.msra.mxu0 0
    %3615 = vmatprep.subr.bf16.mxu0 0
    %3616 = vmatpush1.bf16.xpose.msra.mxu0 0
    %3617 = vmatprep.subr.bf16.mxu0 0
    %3618 = vmatpush1.bf16.xpose.msra.mxu0 0
    %3619 = vmatprep.subr.bf16.mxu0 0
    %3620 = vmatpush1.bf16.xpose.msra.mxu0 0
    %3621 = vmatprep.subr.bf16.mxu0 0
    %3622 = vmatpush1.bf16.xpose.msra.mxu0 0
    %3623 = vmatprep.subr.bf16.mxu0 0
    %3624 = vmatpush1.bf16.xpose.msra.mxu0 0
    %3625 = vmatprep.subr.bf16.mxu0 0
    %3626 = vmatpush1.bf16.xpose.msra.mxu0 0
    %3627 = vmatprep.subr.bf16.mxu0 0
    %3628 = vmatpush1.bf16.xpose.msra.mxu0 0
    %3629 = vmatprep.mubr.bf16.mxu0 0
    %3630 = vmatmul.mubr.bf16.gmra.mrb[0].mxu0 %v3592
    %v3631 = vpop.f32.mrb[0].mxu0
    %v3632 = vadd.f32 0.0, %v3631
    %v3633 = vpop.f32.mrb[0].mxu0
    %v3634 = vpop.f32.mrb[0].mxu0
    %v3635 = vadd.f32 0.0, %v3634
    %v3636 = vpop.f32.mrb[0].mxu0
    %3637 = vmatprep.mubr.bf16.mxu0 0
    %3638 = vmatmul.mubr.bf16.gmra.mrb[0].mxu0 %v3595
    %v3639 = vpop.f32.mrb[0].mxu0
    %v3640 = vadd.f32 0.0, %v3639
    %v3641 = vpop.f32.mrb[0].mxu0
    %v3642 = vpop.f32.mrb[0].mxu0
    %v3643 = vpop.f32.mrb[0].mxu0
    %3644 = vdwg.mxu0
    %v3645 = vmul.f32 %v3632, 2.0
    %v3646 = vmul.f32 %v3635, 2.0
    %v3647 = vmul.f32 %v3640, 2.0
    %v3648 = vsub.f32 %v1903, %v3645
    %v3649 = vsub.f32 %v1903, %v3646
    %v3650 = vsub.f32 %v1903, %v3647
    %v3651 = vsel %vm155, %v3648, inf
    %3652 = vmin.xlane.f32.xlu0 %v3651
    %v3653 = vpop.xlane.xlu0 %3652
    %v3654 = vsel %vm155, %v3649, inf
    %3655 = vmin.xlane.f32.xlu0 %v3654
    %v3656 = vpop.xlane.xlu0 %3655
    %v3657 = vsel %vm1914, %v3650, inf
    %3658 = vmin.xlane.f32.xlu0 %v3657
    %v3659 = vpop.xlane.xlu0 %3658
    %vm3660 = vcmp.le.f32.partialorder %v3648, %v3653
    %vm3661 = vcmp.le.f32.partialorder %v3649, %v3656
    %vm3662 = vcmp.le.f32.partialorder %v3650, %v3659
    %v3663 = vsel %vm3660, %v127, 63
    %v3664 = vsel %vm3661, %v127, 63
    %v3665 = vsel %vm3662, %v127, 63
    %v3666 = vsel %vm155, %v3663, 2147483647
    %v3667 = vand.u32 %v3666, 65535
    %v3668 = vshra.s32 %v3666, 16
    %v3669 = vcvt.s32.f32 %v3667
    %v3670 = vcvt.s32.f32 %v3668
    %3671 = vmin.xlane.f32.xlu0 %v3670
    %v3672 = vpop.xlane.xlu0 %3671
    %vm3673 = vcmp.eq.f32.partialorder %v3670, %v3672
    %v3674 = vsel %vm3673, %v3669, inf
    %3675 = vmin.xlane.f32.xlu0 %v3674
    %v3676 = vpop.xlane.xlu0 %3675
    %v3677 = vcvt.f32.s32 %v3676
    %v3678 = vcvt.f32.s32 %v3672
    %v3679 = vshll.u32 %v3678, 16
    %v3680 = vadd.s32 %v3679, %v3677
    %v3681 = vsel %vm155, %v3664, 2147483647
    %v3682 = vand.u32 %v3681, 65535
    %v3683 = vshra.s32 %v3681, 16
    %v3684 = vcvt.s32.f32 %v3682
    %v3685 = vcvt.s32.f32 %v3683
    %3686 = vmin.xlane.f32.xlu0 %v3685
    %v3687 = vpop.xlane.xlu0 %3686
    %vm3688 = vcmp.eq.f32.partialorder %v3685, %v3687
    %v3689 = vsel %vm3688, %v3684, inf
    %3690 = vmin.xlane.f32.xlu0 %v3689
    %v3691 = vpop.xlane.xlu0 %3690
    %v3692 = vcvt.f32.s32 %v3691
    %v3693 = vcvt.f32.s32 %v3687
    %v3694 = vshll.u32 %v3693, 16
    %v3695 = vadd.s32 %v3694, %v3692
    %v3696 = vsel %vm1914, %v3665, 2147483647
    %v3697 = vand.u32 %v3696, 65535
    %v3698 = vshra.s32 %v3696, 16
    %v3699 = vcvt.s32.f32 %v3697
    %v3700 = vcvt.s32.f32 %v3698
    %3701 = vmin.xlane.f32.xlu0 %v3700
    %v3702 = vpop.xlane.xlu0 %3701
    %vm3703 = vcmp.eq.f32.partialorder %v3700, %v3702
    %v3704 = vsel %vm3703, %v3699, inf
    %3705 = vmin.xlane.f32.xlu0 %v3704
    %v3706 = vpop.xlane.xlu0 %3705
    %v3707 = vcvt.f32.s32 %v3706
    %v3708 = vcvt.f32.s32 %v3702
    %v3709 = vshll.u32 %v3708, 16
    %v3710 = vadd.s32 %v3709, %v3707
    %vm3711 = vcmp.eq.s32.totalorder %v127, %v3680
    %vm3712 = vcmp.eq.s32.totalorder %v127, %v3695
    %vm3713 = vcmp.eq.s32.totalorder %v127, %v3710
    %v3714 = vsel %vm3711, 1, 0
    %v3715 = vsel %vm3712, 1, 0
    %v3716 = vsel %vm3713, 1, 0
    %v3717 = vcvt.s32.f32 %v3714
    %v3718 = vcvt.s32.f32 %v3715
    %v3719 = vcvt.s32.f32 %v3716
    %v3721 = vsel %vm155, %v3717, 0
    %v3724 = vsel %vm155, %v3718, 0
    %v3727 = vsel %vm155, %v3719, 0
    %3729 = vmatprep.subr.mxu0 0.0
    %3730 = vmatpush1.msra.mxu0 %v113
    %3731 = vmatprep.subr.mxu0 0.0
    %3732 = vmatpush1.msra.mxu0 %v114
    %3733 = vmatprep.subr.mxu0 0.0
    %3734 = vmatpush1.msra.mxu0 %v115
    %3735 = vmatprep.subr.mxu0 0.0
    %3736 = vmatpush1.msra.mxu0 %v116
    %3737 = vmatprep.subr.mxu0 0.0
    %3738 = vmatpush1.msra.mxu0 %v117
    %3739 = vmatprep.subr.mxu0 0.0
    %3740 = vmatpush1.msra.mxu0 %v118
    %3741 = vmatprep.subr.mxu0 0.0
    %3742 = vmatpush1.msra.mxu0 %v119
    %3743 = vmatprep.subr.mxu0 0.0
    %3744 = vmatpush1.msra.mxu0 %v120
    %3745 = vmatprep.subr.mxu0 0.0
    %3746 = vmatpush1.msra.mxu0 0.0
    %3747 = vmatprep.subr.mxu0 0.0
    %3748 = vmatpush1.msra.mxu0 0.0
    %3749 = vmatprep.subr.mxu0 0.0
    %3750 = vmatpush1.msra.mxu0 0.0
    %3751 = vmatprep.subr.mxu0 0.0
    %3752 = vmatpush1.msra.mxu0 0.0
    %3753 = vmatprep.subr.mxu0 0.0
    %3754 = vmatpush1.msra.mxu0 0.0
    %3755 = vmatprep.subr.mxu0 0.0
    %3756 = vmatpush1.msra.mxu0 0.0
    %3757 = vmatprep.subr.mxu0 0.0
    %3758 = vmatpush1.msra.mxu0 0.0
    %3759 = vmatprep.subr.mxu0 0.0
    %3760 = vmatpush1.msra.mxu0 0.0
    %3761 = vmatprep.subr.mxu0 0.0
    %3762 = vmatpush1.msra.mxu0 0.0
    %3763 = vmatprep.subr.mxu0 0.0
    %3764 = vmatpush1.msra.mxu0 0.0
    %3765 = vmatprep.subr.mxu0 0.0
    %3766 = vmatpush1.msra.mxu0 0.0
    %3767 = vmatprep.subr.mxu0 0.0
    %3768 = vmatpush1.msra.mxu0 0.0
    %3769 = vmatprep.subr.mxu0 0.0
    %3770 = vmatpush1.msra.mxu0 0.0
    %3771 = vmatprep.subr.mxu0 0.0
    %3772 = vmatpush1.msra.mxu0 0.0
    %3773 = vmatprep.subr.mxu0 0.0
    %3774 = vmatpush1.msra.mxu0 0.0
    %3775 = vmatprep.subr.mxu0 0.0
    %3776 = vmatpush1.msra.mxu0 0.0
    %3777 = vmatprep.subr.mxu0 0.0
    %3778 = vmatpush1.msra.mxu0 0.0
    %3779 = vmatprep.subr.mxu0 0.0
    %3780 = vmatpush1.msra.mxu0 0.0
    %3781 = vmatprep.subr.mxu0 0.0
    %3782 = vmatpush1.msra.mxu0 0.0
    %3783 = vmatprep.subr.mxu0 0.0
    %3784 = vmatpush1.msra.mxu0 0.0
    %3785 = vmatprep.subr.mxu0 0.0
    %3786 = vmatpush1.msra.mxu0 0.0
    %3787 = vmatprep.subr.mxu0 0.0
    %3788 = vmatpush1.msra.mxu0 0.0
    %3789 = vmatprep.subr.mxu0 0.0
    %3790 = vmatpush1.msra.mxu0 0.0
    %3791 = vmatprep.subr.mxu0 0.0
    %3792 = vmatpush1.msra.mxu0 0.0
    %3793 = vmatprep.mubr.f32.mxu0 0.0
    %3794 = vmatmul.mubr.f32.gmra.mrb[0].mxu0 %v3721
    %v3795 = vpop.f32.mrb[0].mxu0
    %v3796 = vadd.f32 0.0, %v3795
    %v3797 = vpop.f32.mrb[0].mxu0
    %3798 = vmatprep.mubr.f32.mxu0 0.0
    %3799 = vmatmul.mubr.f32.gmra.mrb[0].mxu0 %v3724
    %v3800 = vpop.f32.mrb[0].mxu0
    %v3801 = vadd.f32 0.0, %v3800
    %v3802 = vpop.f32.mrb[0].mxu0
    %3803 = vmatprep.mubr.f32.mxu0 0.0
    %3804 = vmatmul.mubr.f32.gmra.mrb[0].mxu0 %v3727
    %v3805 = vpop.f32.mrb[0].mxu0
    %v3806 = vadd.f32 0.0, %v3805
    %v3807 = vpop.f32.mrb[0].mxu0
    %3808 = vdwg.mxu0
    %s3809 = scalar_lea.vmem [#allocation6], 16
    %3810 = vst.msk [vmem:[%s3809] sm:$0xff] %vm214, %v3583
    %3811 = vst.msk [vmem:[%s3809 + $0x8] sm:$0xff] %vm214, %v3584
    %s3812 = scalar_lea.vmem [#allocation4], 16
    %3813 = vst.msk [vmem:[%s3812] sm:$0xff] %vm214, %v3796
    %3814 = vst.msk [vmem:[%s3812 + $0x8] sm:$0xff] %vm214, %v3801
    %s3815 = scalar_lea.vmem [#allocation2], 1
    %3816 = vst.msk [vmem:[%s3815] sm:$0x1] %vm2071, %v3806
    %s3817 = scalar_lea.vmem %s10, 16
    %3818 = vst.msk [vmem:[%s3817] sm:$0xff] %vm2073, %v3680
    %3819 = vst.msk [vmem:[%s3817 + $0x8] sm:$0xff] %vm2073, %v3695
    %s3820 = scalar_lea.vmem [#allocation7], 16
    %3821 = vst.msk [vmem:[%s3820] sm:$0xff] %vm2076, %v3586
    %3822 = vst.msk [vmem:[%s3820 + $0x8] sm:$0xff] %vm2076, %v3587
    %s3823 = scalar_lea.vmem [#allocation9], 1
    %3824 = vst.msk [vmem:[%s3823] sm:$0x1] %vm2079, %v3588
    // Predicated region
    $region30: #{_lambda_.1} parent=1 // pred_check
      _
    $region31: #{_lambda_.1} parent=1 // pred_check_branch
      %3826 = sbr.rel (0) target = $region33
    $region32: #{_lambda_.1} parent=1 // pred_region
      %s3828 = ssub.s32 32, 32
      %3829 = vsyncadd [#allocation3], %s3828
      %s3830 = sshll.u32 [#allocation2], 4
      %s3831 = int_to_ptr.vmem [resolvable:$true] %s3830
      %3836 = dma.vmem_to_hbm [thread:$0]  %s3831, 32, %s7, [#allocation3], 16, 16, 1
    $region33: #{_lambda_.1} parent=1 // pred_fallthru
      _
    // Predicated region
    $region34: #{_lambda_.1} parent=1 // pred_check
      _
    $region35: #{_lambda_.1} parent=1 // pred_check_branch
      %3838 = sbr.rel (0) target = $region37
    $region36: #{_lambda_.1} parent=1 // pred_region
      %s3840 = ssub.s32 512, 512
      %3841 = vsyncadd [#allocation5], %s3840
      %s3842 = sshll.u32 [#allocation4], 4
      %s3843 = int_to_ptr.vmem [resolvable:$true] %s3842
      %3848 = dma.vmem_to_hbm [thread:$0]  %s3843, 512, %s8, [#allocation5], 128, 128, 8
    $region37: #{_lambda_.1} parent=1 // pred_fallthru
      _
    // Predicated region
    $region38: #{_lambda_.1} parent=1 // pred_check
      _
    $region39: #{_lambda_.1} parent=1 // pred_check_branch
      %3850 = sbr.rel (0) target = $region41
    $region40: #{_lambda_.1} parent=1 // pred_region
      %s3852 = ssub.s32 512, 512
      %3853 = vsyncadd [#allocation5], %s3852
      %s3854 = sshll.u32 [#allocation6], 4
      %s3855 = int_to_ptr.vmem [resolvable:$true] %s3854
      %3860 = dma.vmem_to_hbm [thread:$0]  %s3855, 512, %s9, [#allocation5], 128, 128, 8
    $region41: #{_lambda_.1} parent=1 // pred_fallthru
      _
    // Predicated region
    $region42: #{_lambda_.1} parent=1 // pred_check
      _
    $region43: #{_lambda_.1} parent=1 // pred_check_branch
      %3862 = sbr.rel (0) target = $region45
    $region44: #{_lambda_.1} parent=1 // pred_region
      _
    $region45: #{_lambda_.1} parent=1 // pred_fallthru
      _
    // Predicated region
    $region46: #{_lambda_.1} parent=1 // pred_check
      _
    $region47: #{_lambda_.1} parent=1 // pred_check_branch
      %3864 = sbr.rel (0) target = $region49
    $region48: #{_lambda_.1} parent=1 // pred_region
      %s3866 = ssub.s32 512, 512
      %3867 = vsyncadd [#allocation8], %s3866
      %s3868 = sshll.u32 [#allocation7], 4
      %s3869 = int_to_ptr.vmem [resolvable:$true] %s3868
      %3874 = dma.vmem_to_hbm [thread:$0]  %s3869, 512, %s11, [#allocation8], 128, 128, 8
    $region49: #{_lambda_.1} parent=1 // pred_fallthru
      _
    // Predicated region
    $region50: #{_lambda_.1} parent=1 // pred_check
      _
    $region51: #{_lambda_.1} parent=1 // pred_check_branch
      %3876 = sbr.rel (0) target = $region53
    $region52: #{_lambda_.1} parent=1 // pred_region
      %s3878 = ssub.s32 32, 32
      %3879 = vsyncadd [#allocation8], %s3878
      %s3880 = sshll.u32 [#allocation9], 4
      %s3881 = int_to_ptr.vmem [resolvable:$true] %s3880
      %3886 = dma.vmem_to_hbm [thread:$0]  %s3881, 32, %s12, [#allocation8], 16, 16, 1
    $region53: #{_lambda_.1} parent=1 // pred_fallthru
      _
    // Predicated region
    $region54: #{_lambda_.1} parent=1 // pred_check
      _
    $region55: #{_lambda_.1} parent=1 // pred_check_branch
      %3888 = sbr.rel (0) target = $region57
    $region56: #{_lambda_.1} parent=1 // pred_region
      %3889 = dma.done [#allocation3], 32
    $region57: #{_lambda_.1} parent=1 // pred_fallthru
      _
    // Predicated region
    $region58: #{_lambda_.1} parent=1 // pred_check
      _
    $region59: #{_lambda_.1} parent=1 // pred_check_branch
      %3891 = sbr.rel (0) target = $region61
    $region60: #{_lambda_.1} parent=1 // pred_region
      %3892 = dma.done [#allocation5], 512
    $region61: #{_lambda_.1} parent=1 // pred_fallthru
      _
    // Predicated region
    $region62: #{_lambda_.1} parent=1 // pred_check
      _
    $region63: #{_lambda_.1} parent=1 // pred_check_branch
      %3894 = sbr.rel (0) target = $region65
    $region64: #{_lambda_.1} parent=1 // pred_region
      %3895 = dma.done [#allocation5], 512
    $region65: #{_lambda_.1} parent=1 // pred_fallthru
      _
    // Predicated region
    $region66: #{_lambda_.1} parent=1 // pred_check
      _
    $region67: #{_lambda_.1} parent=1 // pred_check_branch
      %3897 = sbr.rel (0) target = $region69
    $region68: #{_lambda_.1} parent=1 // pred_region
      _
    $region69: #{_lambda_.1} parent=1 // pred_fallthru
      _
    // Predicated region
    $region70: #{_lambda_.1} parent=1 // pred_check
      _
    $region71: #{_lambda_.1} parent=1 // pred_check_branch
      %3899 = sbr.rel (0) target = $region73
    $region72: #{_lambda_.1} parent=1 // pred_region
      %3900 = dma.done [#allocation8], 512
    $region73: #{_lambda_.1} parent=1 // pred_fallthru
      _
    // Predicated region
    $region74: #{_lambda_.1} parent=1 // pred_check
      _
    $region75: #{_lambda_.1} parent=1 // pred_check_branch
      %3902 = sbr.rel (0) target = $region77
    $region76: #{_lambda_.1} parent=1 // pred_region
      %3903 = dma.done [#allocation8], 32
    $region77: #{_lambda_.1} parent=1 // pred_fallthru
      _
    %3904 = vsyncpa [#allocation3], 1
    %3905 = vsyncpa [#allocation5], 1
    %3906 = vsyncpa [#allocation8], 1

</llo_original>
